<compile_context>
chip_gen: v6e
topology: v6e:2x2x1
jax: 0.10.0
libtpu: 0.0.40
codegen_flags: <defaults>
</compile_context>

<pallas_src>
import functools
import numpy as np
import jax
import jax.numpy as jnp
from jax import lax
from jax.experimental import pallas as pl
from jax.experimental.pallas import tpu as pltpu

CLASSES = ('Abyssinian', 'American Bobtail', 'American Curl', 'American Shorthair',
           'American Wirehair', 'Applehead Siamese', 'Balinese', 'Bengal', 'Birman',
           'Bombay', 'British Shorthair', 'Burmese', 'Burmilla', 'Calico',
           'Canadian Hairless', 'Chartreux', 'Chausie', 'Chinchilla', 'Cornish Rex',
           'Cymric', 'Devon Rex', 'Dilute Calico', 'Dilute Tortoiseshell',
           'Domestic Long Hair', 'Domestic Medium Hair', 'Domestic Short Hair',
           'Egyptian Mau', 'Exotic Shorthair', 'Extra-Toes Cat - Hemingway Polydactyl',
           'Havana', 'Himalayan', 'Japanese Bobtail', 'Javanese', 'Korat', 'LaPerm',
           'Maine Coon', 'Manx', 'Munchkin', 'Nebelung', 'Norwegian Forest Cat',
           'Ocicat', 'Oriental Long Hair', 'Oriental Short Hair', 'Oriental Tabby',
           'Persian', 'Pixiebob', 'Ragamuffin', 'Ragdoll', 'Russian Blue',
           'Scottish Fold', 'Selkirk Rex', 'Siamese', 'Siberian', 'Silver',
           'Singapura', 'Snowshoe', 'Somali', 'Sphynx - Hairless Cat', 'Tabby',
           'Tiger', 'Tonkinese', 'Torbie', 'Tortoiseshell', 'Turkish Angora',
           'Turkish Van', 'Tuxedo', 'York Chocolate')
NUM_CLASSES = len(CLASSES)   # 67
LANE = 128
TM_MAX = 256                 # M tile; << VMEM budget on every generation (incl. v7x 64 MiB)
VMEM_LIMIT = 32 * 1024 * 1024


def _vmem_spec():
    return pl.BlockSpec(memory_space=pltpu.MemorySpace.VMEM)


def _round_up(x, m):
    return (x + m - 1) // m * m


# ---------------------------------------------------------------------------
# Pallas kernels
# ---------------------------------------------------------------------------
def conv_pool_relu_kernel(p_ref, w_ref, b_ref, o_ref):
    """Fused valid-conv + 2x2/2 max-pool + bias + relu for one M tile.

    p_ref: (4, TM, Kd)  bf16 im2col patches, leading axis = pool-window quadrant.
    w_ref: (Kd, Cout)   bf16 flattened (kh, kw, cin) conv weight (zero padded).
    b_ref: (1, Cout)    f32 bias (zero padded).
    o_ref: (TM, Cout)   bf16.
    """
    w = w_ref[...]
    # Per-quadrant matmuls with a running max: the live f32 intermediate is only
    # (TM, Cout) instead of (4*TM, Cout).
    m = jnp.dot(p_ref[0], w, preferred_element_type=jnp.float32)
    for q in range(1, 4):
        m = jnp.maximum(m, jnp.dot(p_ref[q], w, preferred_element_type=jnp.float32))
    # Bias is constant within a pool window -> max(x) + b == max(x + b); relu after pool.
    o_ref[...] = jnp.maximum(m + b_ref[...], 0.0).astype(o_ref.dtype)


def head_kernel(p_ref, w_ref, b_ref, fcw_ref, fcb_ref, o_ref, *, n_batch, s_spatial):
    """Third conv stage fused with AdaptiveAvgPool2d(1) + Linear (head math in f32).

    p_ref:   (4, N*S, Kd)  bf16 patches (rows batch-major: row = n*S + s).
    w_ref:   (Kd, Cout)    bf16.
    b_ref:   (1, Cout)     f32.
    fcw_ref: (Cout, NCpad) f32 fc weight (zero padded to 128 lanes).
    fcb_ref: (1, NCpad)    f32 fc bias.
    o_ref:   (N, NCpad)    f32 logits (padding sliced off in the wrapper).
    """
    w = w_ref[...]
    m = jnp.dot(p_ref[0], w, preferred_element_type=jnp.float32)
    for q in range(1, 4):
        m = jnp.maximum(m, jnp.dot(p_ref[q], w, preferred_element_type=jnp.float32))
    a = jnp.maximum(m + b_ref[...], 0.0)                          # (N*S, Cout) f32
    # AdaptiveAvgPool2d(1): per-batch mean over the S pooled positions (sublane slices).
    # TODO(synk): for very large batch, grid the head over N instead of unrolling.
    parts = [jnp.mean(a[n * s_spatial:(n + 1) * s_spatial], axis=0, keepdims=True)
             for n in range(n_batch)]
    pooled = jnp.concatenate(parts, axis=0)                       # (N, Cout) f32
    o_ref[...] = (jnp.dot(pooled, fcw_ref[...], preferred_element_type=jnp.float32)
                  + fcb_ref[...])


# ---------------------------------------------------------------------------
# JAX-side glue (layout plumbing only)
# ---------------------------------------------------------------------------
def _pool_quadrant_patches(x, K, kd_pad, cin=None):
    """x: (N,H,W,C) bf16 -> patches (4, M, kd_pad) bf16 for the pool-quadrant conv.

    Quadrant q = (dh, dw) is the leading axis; rows are (n, ph, pw) batch-major.
    Patch channel order is (kh, kw, cin), matching the flattened HWIO weight.
    If `cin` is given, only the first `cin` channels are used (drops lane padding
    from the previous stage so it never enters the contraction).
    """
    N, H, W, C = x.shape
    if cin is not None and cin < C:
        x = x[..., :cin]
        C = cin
    OH, OW = H - K + 1, W - K + 1
    PH, PW = OH // 2, OW // 2            # MaxPool2d(2) floors
    quads = []
    for dh in range(2):
        for dw in range(2):
            parts = [x[:, dh + kh: dh + kh + 2 * PH: 2,
                          dw + kw: dw + kw + 2 * PW: 2, :]
                     for kh in range(K) for kw in range(K)]
            q = jnp.concatenate(parts, axis=-1)              # (N, PH, PW, K*K*C)
            quads.append(q.reshape(N * PH * PW, K * K * C))
    p = jnp.stack(quads, axis=0)                             # (4, M, K*K*C)
    if kd_pad > K * K * C:
        p = jnp.pad(p, ((0, 0), (0, 0), (0, kd_pad - K * K * C)))
    return p, (N, PH, PW)


def _prep_conv_weight(w, b, cin_pad=None, cout_pad=None):
    """HWIO weight -> ((Kd_pad, Cout_pad) bf16, (1, Cout_pad) f32)."""
    K, _, Cin, Cout = w.shape
    cin_pad = cin_pad or Cin
    cout_pad = cout_pad or Cout
    wp = jnp.zeros((K, K, cin_pad, cout_pad), jnp.float32).at[:, :, :Cin, :Cout].set(w)
    kd = K * K * cin_pad
    kd_pad = _round_up(kd, LANE)
    wflat = wp.reshape(kd, cout_pad)
    if kd_pad > kd:
        wflat = jnp.pad(wflat, ((0, kd_pad - kd), (0, 0)))
    bp = jnp.zeros((1, cout_pad), jnp.float32).at[0, :Cout].set(b)
    return wflat.astype(jnp.bfloat16), bp


def prepare_params(params):
    """One-time parameter prep (hoisted out of the jitted forward)."""
    w1, b1 = _prep_conv_weight(params['w1'], params['b1'], cout_pad=LANE)  # Kd 75->128, Cout 64->128
    w2, b2 = _prep_conv_weight(params['w2'], params['b2'], cin_pad=64)     # Kd 576->640 (was 1152)
    w3, b3 = _prep_conv_weight(params['w3'], params['b3'])                 # Kd 512
    nc_pad = _round_up(NUM_CLASSES, LANE)
    fcw = jnp.zeros((params['fc_w'].shape[0], nc_pad),
                    jnp.float32).at[:, :NUM_CLASSES].set(params['fc_w'])
    fcb = jnp.zeros((1, nc_pad), jnp.float32).at[0, :NUM_CLASSES].set(params['fc_b'])
    return dict(w1=w1, b1=b1, w2=w2, b2=b2, w3=w3, b3=b3, fcw=fcw, fcb=fcb)


def conv_pool_relu(x, w_flat, b_pad, K, cin=None):
    """x: (N,H,W,Cin') bf16 -> (N,PH,PW,Cout_pad) bf16, gridded over M."""
    kd_pad, cout = w_flat.shape
    patches, (N, PH, PW) = _pool_quadrant_patches(x, K, kd_pad, cin)
    M = N * PH * PW
    tm = min(TM_MAX, _round_up(M, 8))
    m_pad = _round_up(M, tm)
    if m_pad > M:
        patches = jnp.pad(patches, ((0, 0), (0, m_pad - M), (0, 0)))
    out = pl.pallas_call(
        conv_pool_relu_kernel,
        out_shape=jax.ShapeDtypeStruct((m_pad, cout), jnp.bfloat16),
        grid=(m_pad // tm,),
        in_specs=[pl.BlockSpec((4, tm, kd_pad), lambda i: (0, i, 0)),
                  pl.BlockSpec((kd_pad, cout), lambda i: (0, 0)),   # weight stays resident
                  pl.BlockSpec((1, cout), lambda i: (0, 0))],
        out_specs=pl.BlockSpec((tm, cout), lambda i: (i, 0)),
        compiler_params=pltpu.CompilerParams(
            dimension_semantics=("parallel",),
            vmem_limit_bytes=VMEM_LIMIT),
    )(patches, w_flat, b_pad)
    return out[:M].reshape(N, PH, PW, cout)


def conv_pool_relu_head(x, w_flat, b_pad, fcw_pad, fcb_pad, K):
    """Last conv stage fused with adaptive avg pool + fc. Returns (N, NUM_CLASSES) f32."""
    kd_pad = w_flat.shape[0]
    patches, (N, PH, PW) = _pool_quadrant_patches(x, K, kd_pad)
    S = PH * PW
    nc_pad = fcw_pad.shape[1]
    out = pl.pallas_call(
        functools.partial(head_kernel, n_batch=N, s_spatial=S),
        out_shape=jax.ShapeDtypeStruct((N, nc_pad), jnp.float32),
        in_specs=[_vmem_spec()] * 5,
        out_specs=_vmem_spec(),
    )(patches, w_flat, b_pad, fcw_pad, fcb_pad)
    # TODO(synk): torch.squeeze would also drop the batch dim when N == 1; we keep (N, C).
    return out[:, :NUM_CLASSES]


@jax.jit
def net_forward(x_nchw, prepped):
    x = jnp.transpose(x_nchw, (0, 2, 3, 1)).astype(jnp.bfloat16)   # NCHW -> NHWC, bf16 feed
    x = conv_pool_relu(x, prepped['w1'], prepped['b1'], K=5)           # (N,14,14,128); ch 64.. are 0
    x = conv_pool_relu(x, prepped['w2'], prepped['b2'], K=3, cin=64)   # (N, 6, 6,128)
    return conv_pool_relu_head(x, prepped['w3'], prepped['b3'],
                               prepped['fcw'], prepped['fcb'], K=2)


# ---------------------------------------------------------------------------
# Deterministic parameter init (same shapes as the PyTorch module, HWIO layout)
# ---------------------------------------------------------------------------
def init_params(key):
    ks = jax.random.split(key, 8)

    def u(k, shape, fan_in):
        bnd = 1.0 / np.sqrt(fan_in)
        return jax.random.uniform(k, shape, jnp.float32, -bnd, bnd)

    return dict(
        w1=u(ks[0], (5, 5, 3, 64), 5 * 5 * 3),      b1=u(ks[1], (64,), 5 * 5 * 3),
        w2=u(ks[2], (3, 3, 64, 128), 3 * 3 * 64),   b2=u(ks[3], (128,), 3 * 3 * 64),
        w3=u(ks[4], (2, 2, 128, 256), 2 * 2 * 128), b3=u(ks[5], (256,), 2 * 2 * 128),
        fc_w=u(ks[6], (256, NUM_CLASSES), 256),     fc_b=u(ks[7], (NUM_CLASSES,), 256),
    )


# Pure-JAX references for validation.
def _ref_common(x_nhwc, p, conv_dtype):
    def conv(x, w, b):
        y = lax.conv_general_dilated(
            x.astype(conv_dtype), w.astype(conv_dtype), (1, 1), 'VALID',
            dimension_numbers=('NHWC', 'HWIO', 'NHWC'),
            preferred_element_type=jnp.float32)
        return y + b.reshape(1, 1, 1, -1)

    def pool(x):
        return lax.reduce_window(x, -jnp.inf, lax.max,
                                 (1, 2, 2, 1), (1, 2, 2, 1), 'VALID')

    a1 = jax.nn.relu(pool(conv(x_nhwc, p['w1'], p['b1']))).astype(conv_dtype)
    a2 = jax.nn.relu(pool(conv(a1, p['w2'], p['b2']))).astype(conv_dtype)
    a3 = jax.nn.relu(pool(conv(a2, p['w3'], p['b3']))).astype(jnp.float32)
    pooled = jnp.mean(a3, axis=(1, 2))
    return jnp.dot(pooled, p['fc_w'], precision=lax.Precision.HIGHEST) + p['fc_b']


def ref_forward_f32(x_nchw, p):
    return _ref_common(jnp.transpose(x_nchw, (0, 2, 3, 1)), p, jnp.float32)


def ref_forward_bf16(x_nchw, p):
    # Matches the kernel's quantization points: bf16 matmul operands, f32 accumulate,
    # bf16 inter-stage activations, f32 head.
    return _ref_common(jnp.transpose(x_nchw, (0, 2, 3, 1)).astype(jnp.bfloat16),
                       p, jnp.bfloat16)


if __name__ == "__main__":
    key = jax.random.PRNGKey(0)
    kp, kx = jax.random.split(key)
    params = init_params(kp)
    prepped = prepare_params(params)     # one-time weight prep (not per-forward)
    # Smallest spatial size that survives the 3 conv+pool stages is 20; use 32.
    x = jax.random.normal(kx, (2, 3, 32, 32), jnp.float32)   # NCHW, like PyTorch

    out = jax.block_until_ready(net_forward(x, prepped))
    assert out.shape == (2, NUM_CLASSES), out.shape

    # Tight check against a reference with matching bf16 quantization points.
    ref_bf = ref_forward_bf16(x, params)
    np.testing.assert_allclose(np.asarray(out), np.asarray(ref_bf), rtol=1e-2, atol=1e-2)
    # Loose check against the full-f32 reference (bf16-feed fidelity).
    ref32 = ref_forward_f32(x, params)
    np.testing.assert_allclose(np.asarray(out), np.asarray(ref32), rtol=1e-1, atol=1e-1)

    print("KERNEL_OK")
</pallas_src>

<mosaic_0001>
module attributes {stable_mosaic.version = 11 : i64} {
  func.func @conv_pool_relu_kernel(%arg0: i32, %arg1: memref<4x256x128xbf16, #tpu.memory_space<vmem>>, %arg2: memref<128x128xbf16, #tpu.memory_space<vmem>>, %arg3: memref<1x128xf32, #tpu.memory_space<vmem>>, %arg4: memref<256x128xbf16, #tpu.memory_space<vmem>>) attributes {dimension_semantics = [#tpu.dimension_semantics<parallel>], iteration_bounds = array<i64: 2>, scalar_prefetch = 0 : i64, scratch_operands = 0 : i64, tpu.core_type = #tpu.core_type<tc>, window_params = [{transform_indices = @transform_0, window_bounds = array<i64: 4, 256, 128>}, {pipeline_mode = #tpu.pipeline_mode<synchronous>, transform_indices = @transform_1, window_bounds = array<i64: 128, 128>}, {pipeline_mode = #tpu.pipeline_mode<synchronous>, transform_indices = @transform_2, window_bounds = array<i64: 1, 128>}, {transform_indices = @transform_3, window_bounds = array<i64: 256, 128>}]} {
    %c0 = arith.constant 0 : index
    %c0_0 = arith.constant 0 : index
    %0 = vector.load %arg2[%c0, %c0_0] : memref<128x128xbf16, #tpu.memory_space<vmem>>, vector<128x128xbf16>
    %c0_1 = arith.constant 0 : index
    %c0_2 = arith.constant 0 : index
    %c0_3 = arith.constant 0 : index
    %1 = vector.load %arg1[%c0_1, %c0_2, %c0_3] : memref<4x256x128xbf16, #tpu.memory_space<vmem>>, vector<1x256x128xbf16>
    %2 = vector.shape_cast %1 : vector<1x256x128xbf16> to vector<256x128xbf16>
    %cst = arith.constant dense<0.000000e+00> : vector<256x128xf32>
    %3 = tpu.matmul %2, %0, %cst {dimension_numbers = #tpu.dot_dimension_numbers<[1], [0], [0], [1], [0, 0, 1, 1], [], []>} : vector<256x128xbf16>, vector<128x128xbf16>, vector<256x128xf32> -> vector<256x128xf32>
    %c1 = arith.constant 1 : index
    %c0_4 = arith.constant 0 : index
    %c0_5 = arith.constant 0 : index
    %4 = vector.load %arg1[%c1, %c0_4, %c0_5] : memref<4x256x128xbf16, #tpu.memory_space<vmem>>, vector<1x256x128xbf16>
    %5 = vector.shape_cast %4 : vector<1x256x128xbf16> to vector<256x128xbf16>
    %cst_6 = arith.constant dense<0.000000e+00> : vector<256x128xf32>
    %6 = tpu.matmul %5, %0, %cst_6 {dimension_numbers = #tpu.dot_dimension_numbers<[1], [0], [0], [1], [0, 0, 1, 1], [], []>} : vector<256x128xbf16>, vector<128x128xbf16>, vector<256x128xf32> -> vector<256x128xf32>
    %7 = arith.maximumf %3, %6 : vector<256x128xf32>
    %c2 = arith.constant 2 : index
    %c0_7 = arith.constant 0 : index
    %c0_8 = arith.constant 0 : index
    %8 = vector.load %arg1[%c2, %c0_7, %c0_8] : memref<4x256x128xbf16, #tpu.memory_space<vmem>>, vector<1x256x128xbf16>
    %9 = vector.shape_cast %8 : vector<1x256x128xbf16> to vector<256x128xbf16>
    %cst_9 = arith.constant dense<0.000000e+00> : vector<256x128xf32>
    %10 = tpu.matmul %9, %0, %cst_9 {dimension_numbers = #tpu.dot_dimension_numbers<[1], [0], [0], [1], [0, 0, 1, 1], [], []>} : vector<256x128xbf16>, vector<128x128xbf16>, vector<256x128xf32> -> vector<256x128xf32>
    %11 = arith.maximumf %7, %10 : vector<256x128xf32>
    %c3 = arith.constant 3 : index
    %c0_10 = arith.constant 0 : index
    %c0_11 = arith.constant 0 : index
    %12 = vector.load %arg1[%c3, %c0_10, %c0_11] : memref<4x256x128xbf16, #tpu.memory_space<vmem>>, vector<1x256x128xbf16>
    %13 = vector.shape_cast %12 : vector<1x256x128xbf16> to vector<256x128xbf16>
    %cst_12 = arith.constant dense<0.000000e+00> : vector<256x128xf32>
    %14 = tpu.matmul %13, %0, %cst_12 {dimension_numbers = #tpu.dot_dimension_numbers<[1], [0], [0], [1], [0, 0, 1, 1], [], []>} : vector<256x128xbf16>, vector<128x128xbf16>, vector<256x128xf32> -> vector<256x128xf32>
    %15 = arith.maximumf %11, %14 : vector<256x128xf32>
    %c0_13 = arith.constant 0 : index
    %c0_14 = arith.constant 0 : index
    %16 = vector.load %arg3[%c0_13, %c0_14] : memref<1x128xf32, #tpu.memory_space<vmem>>, vector<1x128xf32>
    %17 = vector.broadcast %16 : vector<1x128xf32> to vector<256x128xf32>
    %18 = arith.addf %15, %17 : vector<256x128xf32>
    %cst_15 = arith.constant 0.000000e+00 : f32
    %19 = vector.broadcast %cst_15 : f32 to vector<256x128xf32>
    %20 = arith.maximumf %18, %19 : vector<256x128xf32>
    %21 = arith.truncf %20 : vector<256x128xf32> to vector<256x128xbf16>
    %c0_16 = arith.constant 0 : index
    %c0_17 = arith.constant 0 : index
    %22 = vector.load %arg4[%c0_16, %c0_17] : memref<256x128xbf16, #tpu.memory_space<vmem>>, vector<256x128xbf16>
    tpu.vector_store %arg4[%c0_16, %c0_17], %21 {strides = array<i32>} : memref<256x128xbf16, #tpu.memory_space<vmem>>, vector<256x128xbf16>,
    return
  }
  func.func @transform_0(%arg0: i32) -> (i32, i32, i32) {
    %c0_i32 = arith.constant 0 : i32
    %c0_i32_0 = arith.constant 0 : i32
    %c0_i32_1 = arith.constant 0 : i32
    return %c0_i32, %arg0, %c0_i32_0 : i32, i32, i32
  }
  func.func @transform_1(%arg0: i32) -> (i32, i32) {
    %c0_i32 = arith.constant 0 : i32
    %c0_i32_0 = arith.constant 0 : i32
    %c0_i32_1 = arith.constant 0 : i32
    return %c0_i32, %c0_i32_0 : i32, i32
  }
  func.func @transform_2(%arg0: i32) -> (i32, i32) {
    %c0_i32 = arith.constant 0 : i32
    %c0_i32_0 = arith.constant 0 : i32
    %c0_i32_1 = arith.constant 0 : i32
    return %c0_i32, %c0_i32_0 : i32, i32
  }
  func.func @transform_3(%arg0: i32) -> (i32, i32) {
    %c0_i32 = arith.constant 0 : i32
    %c0_i32_0 = arith.constant 0 : i32
    return %arg0, %c0_i32 : i32, i32
  }
}

module attributes {stable_mosaic.version = 11 : i64} {
  func.func @conv_pool_relu_kernel(%arg0: i32, %arg1: memref<4x72x640xbf16, #tpu.memory_space<vmem>>, %arg2: memref<640x128xbf16, #tpu.memory_space<vmem>>, %arg3: memref<1x128xf32, #tpu.memory_space<vmem>>, %arg4: memref<72x128xbf16, #tpu.memory_space<vmem>>) attributes {dimension_semantics = [#tpu.dimension_semantics<parallel>], iteration_bounds = array<i64: 1>, scalar_prefetch = 0 : i64, scratch_operands = 0 : i64, tpu.core_type = #tpu.core_type<tc>, window_params = [{transform_indices = @transform_0, window_bounds = array<i64: 4, 72, 640>}, {pipeline_mode = #tpu.pipeline_mode<synchronous>, transform_indices = @transform_1, window_bounds = array<i64: 640, 128>}, {pipeline_mode = #tpu.pipeline_mode<synchronous>, transform_indices = @transform_2, window_bounds = array<i64: 1, 128>}, {transform_indices = @transform_3, window_bounds = array<i64: 72, 128>}]} {
    %c0 = arith.constant 0 : index
    %c0_0 = arith.constant 0 : index
    %0 = vector.load %arg2[%c0, %c0_0] : memref<640x128xbf16, #tpu.memory_space<vmem>>, vector<640x128xbf16>
    %c0_1 = arith.constant 0 : index
    %c0_2 = arith.constant 0 : index
    %c0_3 = arith.constant 0 : index
    %1 = vector.load %arg1[%c0_1, %c0_2, %c0_3] : memref<4x72x640xbf16, #tpu.memory_space<vmem>>, vector<1x72x640xbf16>
    %2 = vector.shape_cast %1 : vector<1x72x640xbf16> to vector<72x640xbf16>
    %cst = arith.constant dense<0.000000e+00> : vector<72x128xf32>
    %3 = tpu.matmul %2, %0, %cst {dimension_numbers = #tpu.dot_dimension_numbers<[1], [0], [0], [1], [0, 0, 1, 1], [], []>} : vector<72x640xbf16>, vector<640x128xbf16>, vector<72x128xf32> -> vector<72x128xf32>
    %c1 = arith.constant 1 : index
    %c0_4 = arith.constant 0 : index
    %c0_5 = arith.constant 0 : index
    %4 = vector.load %arg1[%c1, %c0_4, %c0_5] : memref<4x72x640xbf16, #tpu.memory_space<vmem>>, vector<1x72x640xbf16>
    %5 = vector.shape_cast %4 : vector<1x72x640xbf16> to vector<72x640xbf16>
    %cst_6 = arith.constant dense<0.000000e+00> : vector<72x128xf32>
    %6 = tpu.matmul %5, %0, %cst_6 {dimension_numbers = #tpu.dot_dimension_numbers<[1], [0], [0], [1], [0, 0, 1, 1], [], []>} : vector<72x640xbf16>, vector<640x128xbf16>, vector<72x128xf32> -> vector<72x128xf32>
    %7 = arith.maximumf %3, %6 : vector<72x128xf32>
    %c2 = arith.constant 2 : index
    %c0_7 = arith.constant 0 : index
    %c0_8 = arith.constant 0 : index
    %8 = vector.load %arg1[%c2, %c0_7, %c0_8] : memref<4x72x640xbf16, #tpu.memory_space<vmem>>, vector<1x72x640xbf16>
    %9 = vector.shape_cast %8 : vector<1x72x640xbf16> to vector<72x640xbf16>
    %cst_9 = arith.constant dense<0.000000e+00> : vector<72x128xf32>
    %10 = tpu.matmul %9, %0, %cst_9 {dimension_numbers = #tpu.dot_dimension_numbers<[1], [0], [0], [1], [0, 0, 1, 1], [], []>} : vector<72x640xbf16>, vector<640x128xbf16>, vector<72x128xf32> -> vector<72x128xf32>
    %11 = arith.maximumf %7, %10 : vector<72x128xf32>
    %c3 = arith.constant 3 : index
    %c0_10 = arith.constant 0 : index
    %c0_11 = arith.constant 0 : index
    %12 = vector.load %arg1[%c3, %c0_10, %c0_11] : memref<4x72x640xbf16, #tpu.memory_space<vmem>>, vector<1x72x640xbf16>
    %13 = vector.shape_cast %12 : vector<1x72x640xbf16> to vector<72x640xbf16>
    %cst_12 = arith.constant dense<0.000000e+00> : vector<72x128xf32>
    %14 = tpu.matmul %13, %0, %cst_12 {dimension_numbers = #tpu.dot_dimension_numbers<[1], [0], [0], [1], [0, 0, 1, 1], [], []>} : vector<72x640xbf16>, vector<640x128xbf16>, vector<72x128xf32> -> vector<72x128xf32>
    %15 = arith.maximumf %11, %14 : vector<72x128xf32>
    %c0_13 = arith.constant 0 : index
    %c0_14 = arith.constant 0 : index
    %16 = vector.load %arg3[%c0_13, %c0_14] : memref<1x128xf32, #tpu.memory_space<vmem>>, vector<1x128xf32>
    %17 = vector.broadcast %16 : vector<1x128xf32> to vector<72x128xf32>
    %18 = arith.addf %15, %17 : vector<72x128xf32>
    %cst_15 = arith.constant 0.000000e+00 : f32
    %19 = vector.broadcast %cst_15 : f32 to vector<72x128xf32>
    %20 = arith.maximumf %18, %19 : vector<72x128xf32>
    %21 = arith.truncf %20 : vector<72x128xf32> to vector<72x128xbf16>
    %c0_16 = arith.constant 0 : index
    %c0_17 = arith.constant 0 : index
    %22 = vector.load %arg4[%c0_16, %c0_17] : memref<72x128xbf16, #tpu.memory_space<vmem>>, vector<72x128xbf16>
    tpu.vector_store %arg4[%c0_16, %c0_17], %21 {strides = array<i32>} : memref<72x128xbf16, #tpu.memory_space<vmem>>, vector<72x128xbf16>,
    return
  }
  func.func @transform_0(%arg0: i32) -> (i32, i32, i32) {
    %c0_i32 = arith.constant 0 : i32
    %c0_i32_0 = arith.constant 0 : i32
    %c0_i32_1 = arith.constant 0 : i32
    return %c0_i32, %arg0, %c0_i32_0 : i32, i32, i32
  }
  func.func @transform_1(%arg0: i32) -> (i32, i32) {
    %c0_i32 = arith.constant 0 : i32
    %c0_i32_0 = arith.constant 0 : i32
    %c0_i32_1 = arith.constant 0 : i32
    return %c0_i32, %c0_i32_0 : i32, i32
  }
  func.func @transform_2(%arg0: i32) -> (i32, i32) {
    %c0_i32 = arith.constant 0 : i32
    %c0_i32_0 = arith.constant 0 : i32
    %c0_i32_1 = arith.constant 0 : i32
    return %c0_i32, %c0_i32_0 : i32, i32
  }
  func.func @transform_3(%arg0: i32) -> (i32, i32) {
    %c0_i32 = arith.constant 0 : i32
    %c0_i32_0 = arith.constant 0 : i32
    return %arg0, %c0_i32 : i32, i32
  }
}

module attributes {stable_mosaic.version = 11 : i64} {
  func.func @head_kernel(%arg0: memref<4x8x512xbf16, #tpu.memory_space<vmem>>, %arg1: memref<512x256xbf16, #tpu.memory_space<vmem>>, %arg2: memref<1x256xf32, #tpu.memory_space<vmem>>, %arg3: memref<256x128xf32, #tpu.memory_space<vmem>>, %arg4: memref<1x128xf32, #tpu.memory_space<vmem>>, %arg5: memref<2x128xf32, #tpu.memory_space<vmem>>) attributes {dimension_semantics = [], scalar_prefetch = 0 : i64, scratch_operands = 0 : i64, tpu.core_type = #tpu.core_type<tc>} {
    %c0 = arith.constant 0 : index
    %c0_0 = arith.constant 0 : index
    %0 = vector.load %arg1[%c0, %c0_0] : memref<512x256xbf16, #tpu.memory_space<vmem>>, vector<512x256xbf16>
    %c0_1 = arith.constant 0 : index
    %c0_2 = arith.constant 0 : index
    %c0_3 = arith.constant 0 : index
    %1 = vector.load %arg0[%c0_1, %c0_2, %c0_3] : memref<4x8x512xbf16, #tpu.memory_space<vmem>>, vector<1x8x512xbf16>
    %2 = vector.shape_cast %1 : vector<1x8x512xbf16> to vector<8x512xbf16>
    %cst = arith.constant dense<0.000000e+00> : vector<8x256xf32>
    %3 = tpu.matmul %2, %0, %cst {dimension_numbers = #tpu.dot_dimension_numbers<[1], [0], [0], [1], [0, 0, 1, 1], [], []>} : vector<8x512xbf16>, vector<512x256xbf16>, vector<8x256xf32> -> vector<8x256xf32>
    %c1 = arith.constant 1 : index
    %c0_4 = arith.constant 0 : index
    %c0_5 = arith.constant 0 : index
    %4 = vector.load %arg0[%c1, %c0_4, %c0_5] : memref<4x8x512xbf16, #tpu.memory_space<vmem>>, vector<1x8x512xbf16>
    %5 = vector.shape_cast %4 : vector<1x8x512xbf16> to vector<8x512xbf16>
    %cst_6 = arith.constant dense<0.000000e+00> : vector<8x256xf32>
    %6 = tpu.matmul %5, %0, %cst_6 {dimension_numbers = #tpu.dot_dimension_numbers<[1], [0], [0], [1], [0, 0, 1, 1], [], []>} : vector<8x512xbf16>, vector<512x256xbf16>, vector<8x256xf32> -> vector<8x256xf32>
    %7 = arith.maximumf %3, %6 : vector<8x256xf32>
    %c2 = arith.constant 2 : index
    %c0_7 = arith.constant 0 : index
    %c0_8 = arith.constant 0 : index
    %8 = vector.load %arg0[%c2, %c0_7, %c0_8] : memref<4x8x512xbf16, #tpu.memory_space<vmem>>, vector<1x8x512xbf16>
    %9 = vector.shape_cast %8 : vector<1x8x512xbf16> to vector<8x512xbf16>
    %cst_9 = arith.constant dense<0.000000e+00> : vector<8x256xf32>
    %10 = tpu.matmul %9, %0, %cst_9 {dimension_numbers = #tpu.dot_dimension_numbers<[1], [0], [0], [1], [0, 0, 1, 1], [], []>} : vector<8x512xbf16>, vector<512x256xbf16>, vector<8x256xf32> -> vector<8x256xf32>
    %11 = arith.maximumf %7, %10 : vector<8x256xf32>
    %c3 = arith.constant 3 : index
    %c0_10 = arith.constant 0 : index
    %c0_11 = arith.constant 0 : index
    %12 = vector.load %arg0[%c3, %c0_10, %c0_11] : memref<4x8x512xbf16, #tpu.memory_space<vmem>>, vector<1x8x512xbf16>
    %13 = vector.shape_cast %12 : vector<1x8x512xbf16> to vector<8x512xbf16>
    %cst_12 = arith.constant dense<0.000000e+00> : vector<8x256xf32>
    %14 = tpu.matmul %13, %0, %cst_12 {dimension_numbers = #tpu.dot_dimension_numbers<[1], [0], [0], [1], [0, 0, 1, 1], [], []>} : vector<8x512xbf16>, vector<512x256xbf16>, vector<8x256xf32> -> vector<8x256xf32>
    %15 = arith.maximumf %11, %14 : vector<8x256xf32>
    %c0_13 = arith.constant 0 : index
    %c0_14 = arith.constant 0 : index
    %16 = vector.load %arg2[%c0_13, %c0_14] : memref<1x256xf32, #tpu.memory_space<vmem>>, vector<1x256xf32>
    %17 = vector.broadcast %16 : vector<1x256xf32> to vector<8x256xf32>
    %18 = arith.addf %15, %17 : vector<8x256xf32>
    %cst_15 = arith.constant 0.000000e+00 : f32
    %19 = vector.broadcast %cst_15 : f32 to vector<8x256xf32>
    %20 = arith.maximumf %18, %19 : vector<8x256xf32>
    %21 = vector.extract_strided_slice %20 {offsets = [0, 0], sizes = [4, 256], strides = [1, 1]} : vector<8x256xf32> to vector<4x256xf32>
    %cst_16 = arith.constant dense<0.000000e+00> : vector<256xf32>
    %22 = vector.multi_reduction <add>, %21, %cst_16 [0] : vector<4x256xf32> to vector<256xf32>
    %23 = vector.shape_cast %22 : vector<256xf32> to vector<1x256xf32>
    %cst_17 = arith.constant 4.000000e+00 : f32
    %24 = vector.broadcast %cst_17 : f32 to vector<1x256xf32>
    %25 = arith.divf %23, %24 : vector<1x256xf32>
    %26 = vector.extract_strided_slice %20 {offsets = [4, 0], sizes = [4, 256], strides = [1, 1]} : vector<8x256xf32> to vector<4x256xf32>
    %cst_18 = arith.constant dense<0.000000e+00> : vector<256xf32>
    %27 = vector.multi_reduction <add>, %26, %cst_18 [0] : vector<4x256xf32> to vector<256xf32>
    %28 = vector.shape_cast %27 : vector<256xf32> to vector<1x256xf32>
    %cst_19 = arith.constant 4.000000e+00 : f32
    %29 = vector.broadcast %cst_19 : f32 to vector<1x256xf32>
    %30 = arith.divf %28, %29 : vector<1x256xf32>
    %31 = tpu.concatenate %25, %30 in 0 : vector<1x256xf32>, vector<1x256xf32> -> vector<2x256xf32>
    %c0_20 = arith.constant 0 : index
    %c0_21 = arith.constant 0 : index
    %32 = vector.load %arg3[%c0_20, %c0_21] : memref<256x128xf32, #tpu.memory_space<vmem>>, vector<256x128xf32>
    %cst_22 = arith.constant dense<0.000000e+00> : vector<2x128xf32>
    %33 = tpu.matmul %31, %32, %cst_22 {dimension_numbers = #tpu.dot_dimension_numbers<[1], [0], [0], [1], [0, 0, 1, 1], [], []>} : vector<2x256xf32>, vector<256x128xf32>, vector<2x128xf32> -> vector<2x128xf32>
    %c0_23 = arith.constant 0 : index
    %c0_24 = arith.constant 0 : index
    %34 = vector.load %arg4[%c0_23, %c0_24] : memref<1x128xf32, #tpu.memory_space<vmem>>, vector<1x128xf32>
    %35 = vector.broadcast %34 : vector<1x128xf32> to vector<2x128xf32>
    %36 = arith.addf %33, %35 : vector<2x128xf32>
    %c0_25 = arith.constant 0 : index
    %c0_26 = arith.constant 0 : index
    %37 = vector.load %arg5[%c0_25, %c0_26] : memref<2x128xf32, #tpu.memory_space<vmem>>, vector<2x128xf32>
    tpu.vector_store %arg5[%c0_25, %c0_26], %36 {strides = array<i32>} : memref<2x128xf32, #tpu.memory_space<vmem>>, vector<2x128xf32>,
    return
  }
}

</mosaic_0001>

<llo_original>
// kernel: net_forward.3
$region0: #{net_forward.3}
  #allocation0 [shape = 'u32[]', space=smem, size = 0x4, offset = 0x4, fixed_abs, tag = 'smem constant byte address 0x4 - core index']
  #allocation1 [shape = 'u32[144,128]{1,0:T(1,128)}', space=vmem, size = 0x12000, scoped, tag = 'internal scratch']
  %s0 = inlined_call_operand.vmem [shape: bf16[4,512,128], index: 0, kind: input, shape index: {}]
  %s1 = inlined_call_operand.vmem [shape: bf16[128,128], index: 1, kind: input, shape index: {}]
  %s2 = inlined_call_operand.vmem [shape: f32[1,128], index: 2, kind: input, shape index: {}]
  %s3 = inlined_call_operand.vmem [shape: bf16[512,128], index: 3, kind: output, shape index: {}]
  %s4 = sld [smem:[#allocation0]]
  $region86: #{net_forward.3} parent=0
    _
  %s6 = ssub.s32 1, %s4
  %s7 = scalar_select 0, %s6, %s4
  $region1: #{net_forward.3} parent=0
    #allocation2 [shape = 'u8[524288]{0}', space=vmem, size = 0x80000, scoped, tag = 'input window, operand 0']
    loop: start=0, step=1, limit=4
    $region2: #{net_forward.3} parent=1 // loop_pre_header
      _
    $region3: #{net_forward.3} parent=1 // loop_header
      %s9 = sphi 0, %s13
      %p10 = scmp.ge.s32.totalorder %s9, 4
      %s19 = sphi 0, %s21
      %s22 = sphi 0, %s19
      %s23 = sphi 0, %s22
      %s39 = sphi 0, %s23
      %s43 = sphi 0, %s43
      %s45 = sphi 0, %s43
      %s46 = sphi 0, %s45
      %s60 = sphi 0, %s46
      %s64 = sphi 0, %s64
      %s66 = sphi 0, %s64
      %s67 = sphi 0, %s66
      %s81 = sphi 0, %s67
      %s87 = sphi 0, %s89
      %s90 = sphi 0, %s87
      %s91 = sphi 0, %s90
      %s107 = sphi 0, %s91
    $region4: #{net_forward.3} parent=1 // loop_header_branch
      %12 = sbr.rel (%p10) target = $region8
    $region5: #{net_forward.3} parent=1 // loop_body
      %s14 = ssub.s32 %s9, 1
      %s15 = ssub.s32 %s9, 2
      %s16 = sadd.s32 %s9, 1
      %s17 = ssub.s32 %s9, %s16
      %p18 = scmp.eq.s32.totalorder %s17, 0
      %s20 = sadd.s32 %s19, 1
      %s21 = scalar_select %p18, %s19, %s20
      %p24 = pneg %p18
      %p25 = scmp.eq.s32.totalorder %s9, 1
      %p26 = por %p24, %p25
      %p27 = scmp.ne.s32.totalorder %s19, %s22
      %p28 = scmp.eq.s32.totalorder %s9, 0
      %p29 = por %p27, %p28
      %p30 = scmp.ne.s32.totalorder %s19, %s22
      %p31 = scmp.eq.s32.totalorder %s14, 1
      %p32 = por %p30, %p31
      %p33 = scmp.ne.s32.totalorder %s22, %s23
      %p34 = scmp.eq.s32.totalorder %s14, 0
      %p35 = por %p33, %p34
      %p36 = scmp.ne.s32.totalorder %s22, %s23
      %p37 = scmp.eq.s32.totalorder %s15, 1
      %p38 = por %p36, %p37
      %p40 = scmp.ne.s32.totalorder %s23, %s39
      %p41 = scmp.eq.s32.totalorder %s15, 0
      %p42 = por %p40, %p41
      %s44 = sadd.s32 %s43, 1
      %p47 = scmp.eq.s32.totalorder %s9, 1
      %p48 = scmp.ne.s32.totalorder %s43, %s45
      %p49 = scmp.eq.s32.totalorder %s9, 0
      %p50 = por %p48, %p49
      %p51 = scmp.ne.s32.totalorder %s43, %s45
      %p52 = scmp.eq.s32.totalorder %s14, 1
      %p53 = por %p51, %p52
      %p54 = scmp.ne.s32.totalorder %s45, %s46
      %p55 = scmp.eq.s32.totalorder %s14, 0
      %p56 = por %p54, %p55
      %p57 = scmp.ne.s32.totalorder %s45, %s46
      %p58 = scmp.eq.s32.totalorder %s15, 1
      %p59 = por %p57, %p58
      %p61 = scmp.ne.s32.totalorder %s46, %s60
      %p62 = scmp.eq.s32.totalorder %s15, 0
      %p63 = por %p61, %p62
      %s65 = sadd.s32 %s64, 1
      %p68 = scmp.eq.s32.totalorder %s9, 1
      %p69 = scmp.ne.s32.totalorder %s64, %s66
      %p70 = scmp.eq.s32.totalorder %s9, 0
      %p71 = por %p69, %p70
      %p72 = scmp.ne.s32.totalorder %s64, %s66
      %p73 = scmp.eq.s32.totalorder %s14, 1
      %p74 = por %p72, %p73
      %p75 = scmp.ne.s32.totalorder %s66, %s67
      %p76 = scmp.eq.s32.totalorder %s14, 0
      %p77 = por %p75, %p76
      %p78 = scmp.ne.s32.totalorder %s66, %s67
      %p79 = scmp.eq.s32.totalorder %s15, 1
      %p80 = por %p78, %p79
      %p82 = scmp.ne.s32.totalorder %s67, %s81
      %p83 = scmp.eq.s32.totalorder %s15, 0
      %p84 = por %p82, %p83
      %s85 = ssub.s32 %s9, %s16
      %p86 = scmp.eq.s32.totalorder %s85, 0
      %s88 = sadd.s32 %s87, 1
      %s89 = scalar_select %p86, %s87, %s88
      %p92 = pneg %p86
      %p93 = scmp.eq.s32.totalorder %s9, 1
      %p94 = por %p92, %p93
      %p95 = scmp.ne.s32.totalorder %s87, %s90
      %p96 = scmp.eq.s32.totalorder %s9, 0
      %p97 = por %p95, %p96
      %p98 = scmp.ne.s32.totalorder %s87, %s90
      %p99 = scmp.eq.s32.totalorder %s14, 1
      %p100 = por %p98, %p99
      %p101 = scmp.ne.s32.totalorder %s90, %s91
      %p102 = scmp.eq.s32.totalorder %s14, 0
      %p103 = por %p101, %p102
      %p104 = scmp.ne.s32.totalorder %s90, %s91
      %p105 = scmp.eq.s32.totalorder %s15, 1
      %p106 = por %p104, %p105
      %p108 = scmp.ne.s32.totalorder %s91, %s107
      %p109 = scmp.eq.s32.totalorder %s15, 0
      %p110 = por %p108, %p109
      %p111 = scmp.le.s32.totalorder 1, %s9
      %p112 = scmp.lt.s32.totalorder %s9, 3
      %p113 = pnand %p111, %p112
      %p114 = pneg %p113
      // Predicated region
      $region9: #{net_forward.3} parent=5 // pred_check
        _
      $region10: #{net_forward.3} parent=5 // pred_check_branch
        %116 = sbr.rel (%p113) target = $region12
      $region11: #{net_forward.3} parent=5 // pred_region
        %s117 = ssub.s32 %s9, 1
        // Predicated region
        $region13: #{net_forward.3} parent=11 // pred_check
          %p118 = pneg %p56
        $region14: #{net_forward.3} parent=11 // pred_check_branch
          %120 = sbr.rel (%p118) target = $region16
        $region15: #{net_forward.3} parent=11 // pred_region
          _
        $region16: #{net_forward.3} parent=11 // pred_fallthru
          _
        // Predicated region
        $region17: #{net_forward.3} parent=11 // pred_check
          %p121 = pneg %p77
        $region18: #{net_forward.3} parent=11 // pred_check_branch
          %123 = sbr.rel (%p121) target = $region20
        $region19: #{net_forward.3} parent=11 // pred_region
          _
        $region20: #{net_forward.3} parent=11 // pred_fallthru
          _
      $region12: #{net_forward.3} parent=5 // pred_fallthru
        _
      %p124 = scmp.lt.s32.totalorder %s9, 2
      // Predicated region
      $region21: #{net_forward.3} parent=5 // pred_check
        %p125 = pneg %p124
      $region22: #{net_forward.3} parent=5 // pred_check_branch
        %127 = sbr.rel (%p125) target = $region24
      $region23: #{net_forward.3} parent=5 // pred_region
        // Predicated region
        $region25: #{net_forward.3} parent=23 // pred_check
          %p128 = pneg %p29
        $region26: #{net_forward.3} parent=23 // pred_check_branch
          %130 = sbr.rel (%p128) target = $region28
        $region27: #{net_forward.3} parent=23 // pred_region
          %s131 = sand.u32 %s19, 1
          %s132 = sand.u32 %s19, 1
          %s133 = smul.addr %s132, 512
          %s134 = scalar_lea.vmem [#allocation2], %s133
          %s135 = smul.u32 32, %s9
          %s136 = smul.addr %s135, 4
          %s137 = scalar_lea.vmem %s0, %s136
          // Predicated region
          $region29: #{net_forward.3} parent=27 // pred_check
            _
          $region30: #{net_forward.3} parent=27 // pred_check_branch
            %139 = sbr.rel (0) target = $region32
          $region31: #{net_forward.3} parent=27 // pred_region
            // Predicated region
            $region33: #{net_forward.3} parent=31 // pred_check
              _
            $region34: #{net_forward.3} parent=31 // pred_check_branch
              %141 = sbr.rel target = $region36
            $region35: #{net_forward.3} parent=31 // pred_region
              // Predicated region
              $region48: #{net_forward.3} parent=35 // pred_check
                _
              $region49: #{net_forward.3} parent=35 // pred_check_branch
                %411 = sbr.rel (0) target = $region51
              $region50: #{net_forward.3} parent=35 // pred_region
                loop: start=0, step=1, limit=1
                $region52: #{net_forward.3} parent=50 // loop_pre_header
                  _
                $region53: #{net_forward.3} parent=50 // loop_header
                  %s413 = sphi 0, %s417
                  %p414 = scmp.ge.s32.totalorder %s413, 1
                  %s418 = sphi %s137, %s137
                  %s419 = sphi %s134, %s134
                $region54: #{net_forward.3} parent=50 // loop_header_branch
                  %416 = sbr.rel (%p414) target = $region58
                $region55: #{net_forward.3} parent=50 // loop_body
                  _
                $region56: #{net_forward.3} parent=50 // loop_footer
                  %s417 = sadd.s32 1, %s413
                $region57: #{net_forward.3} parent=50 // loop_footer_branch
                  %412 = sbr.rel target = $region53
                $region58: #{net_forward.3} parent=50 // loop_exit
                  _
                %s421 = ssub.s32 16, 1
                loop: start=0, step=1, limit=1
                $region59: #{net_forward.3} parent=50 // loop_pre_header
                  _
                $region60: #{net_forward.3} parent=50 // loop_header
                  %s423 = sphi 0, %s427
                  %p424 = scmp.ge.s32.totalorder %s423, 1
                  %s428 = sphi %s137, %s137
                  %s429 = sphi %s134, %s134
                $region61: #{net_forward.3} parent=50 // loop_header_branch
                  %426 = sbr.rel (%p424) target = $region65
                $region62: #{net_forward.3} parent=50 // loop_body
                  %v430 = vld [vmem:[%s428] sm:%s421]
                  %431 = vst [vmem:[%s429] sm:%s421] %v430
                  %v432 = vld [vmem:[%s428 + $0x4] sm:%s421]
                  %433 = vst [vmem:[%s429 + $0x4] sm:%s421] %v432
                  %v434 = vld [vmem:[%s428 + $0x8] sm:%s421]
                  %435 = vst [vmem:[%s429 + $0x8] sm:%s421] %v434
                  %v436 = vld [vmem:[%s428 + $0xc] sm:%s421]
                  %437 = vst [vmem:[%s429 + $0xc] sm:%s421] %v436
                  %v438 = vld [vmem:[%s428 + $0x10] sm:%s421]
                  %439 = vst [vmem:[%s429 + $0x10] sm:%s421] %v438
                  %v440 = vld [vmem:[%s428 + $0x14] sm:%s421]
                  %441 = vst [vmem:[%s429 + $0x14] sm:%s421] %v440
                  %v442 = vld [vmem:[%s428 + $0x18] sm:%s421]
                  %443 = vst [vmem:[%s429 + $0x18] sm:%s421] %v442
                  %v444 = vld [vmem:[%s428 + $0x1c] sm:%s421]
                  %445 = vst [vmem:[%s429 + $0x1c] sm:%s421] %v444
                  %v446 = vld [vmem:[%s428 + $0x20] sm:%s421]
                  %447 = vst [vmem:[%s429 + $0x20] sm:%s421] %v446
                  %v448 = vld [vmem:[%s428 + $0x24] sm:%s421]
                  %449 = vst [vmem:[%s429 + $0x24] sm:%s421] %v448
                  %v450 = vld [vmem:[%s428 + $0x28] sm:%s421]
                  %451 = vst [vmem:[%s429 + $0x28] sm:%s421] %v450
                  %v452 = vld [vmem:[%s428 + $0x2c] sm:%s421]
                  %453 = vst [vmem:[%s429 + $0x2c] sm:%s421] %v452
                  %v454 = vld [vmem:[%s428 + $0x30] sm:%s421]
                  %455 = vst [vmem:[%s429 + $0x30] sm:%s421] %v454
                  %v456 = vld [vmem:[%s428 + $0x34] sm:%s421]
                  %457 = vst [vmem:[%s429 + $0x34] sm:%s421] %v456
                  %v458 = vld [vmem:[%s428 + $0x38] sm:%s421]
                  %459 = vst [vmem:[%s429 + $0x38] sm:%s421] %v458
                  %v460 = vld [vmem:[%s428 + $0x3c] sm:%s421]
                  %461 = vst [vmem:[%s429 + $0x3c] sm:%s421] %v460
                  %v462 = vld [vmem:[%s428 + $0x40] sm:%s421]
                  %463 = vst [vmem:[%s429 + $0x40] sm:%s421] %v462
                  %v464 = vld [vmem:[%s428 + $0x44] sm:%s421]
                  %465 = vst [vmem:[%s429 + $0x44] sm:%s421] %v464
                  %v466 = vld [vmem:[%s428 + $0x48] sm:%s421]
                  %467 = vst [vmem:[%s429 + $0x48] sm:%s421] %v466
                  %v468 = vld [vmem:[%s428 + $0x4c] sm:%s421]
                  %469 = vst [vmem:[%s429 + $0x4c] sm:%s421] %v468
                  %v470 = vld [vmem:[%s428 + $0x50] sm:%s421]
                  %471 = vst [vmem:[%s429 + $0x50] sm:%s421] %v470
                  %v472 = vld [vmem:[%s428 + $0x54] sm:%s421]
                  %473 = vst [vmem:[%s429 + $0x54] sm:%s421] %v472
                  %v474 = vld [vmem:[%s428 + $0x58] sm:%s421]
                  %475 = vst [vmem:[%s429 + $0x58] sm:%s421] %v474
                  %v476 = vld [vmem:[%s428 + $0x5c] sm:%s421]
                  %477 = vst [vmem:[%s429 + $0x5c] sm:%s421] %v476
                  %v478 = vld [vmem:[%s428 + $0x60] sm:%s421]
                  %479 = vst [vmem:[%s429 + $0x60] sm:%s421] %v478
                  %v480 = vld [vmem:[%s428 + $0x64] sm:%s421]
                  %481 = vst [vmem:[%s429 + $0x64] sm:%s421] %v480
                  %v482 = vld [vmem:[%s428 + $0x68] sm:%s421]
                  %483 = vst [vmem:[%s429 + $0x68] sm:%s421] %v482
                  %v484 = vld [vmem:[%s428 + $0x6c] sm:%s421]
                  %485 = vst [vmem:[%s429 + $0x6c] sm:%s421] %v484
                  %v486 = vld [vmem:[%s428 + $0x70] sm:%s421]
                  %487 = vst [vmem:[%s429 + $0x70] sm:%s421] %v486
                  %v488 = vld [vmem:[%s428 + $0x74] sm:%s421]
                  %489 = vst [vmem:[%s429 + $0x74] sm:%s421] %v488
                  %v490 = vld [vmem:[%s428 + $0x78] sm:%s421]
                  %491 = vst [vmem:[%s429 + $0x78] sm:%s421] %v490
                  %v492 = vld [vmem:[%s428 + $0x7c] sm:%s421]
                  %493 = vst [vmem:[%s429 + $0x7c] sm:%s421] %v492
                  %v494 = vld [vmem:[%s428 + $0x100] sm:%s421]
                  %495 = vst [vmem:[%s429 + $0x80] sm:%s421] %v494
                  %v496 = vld [vmem:[%s428 + $0x104] sm:%s421]
                  %497 = vst [vmem:[%s429 + $0x84] sm:%s421] %v496
                  %v498 = vld [vmem:[%s428 + $0x108] sm:%s421]
                  %499 = vst [vmem:[%s429 + $0x88] sm:%s421] %v498
                  %v500 = vld [vmem:[%s428 + $0x10c] sm:%s421]
                  %501 = vst [vmem:[%s429 + $0x8c] sm:%s421] %v500
                  %v502 = vld [vmem:[%s428 + $0x110] sm:%s421]
                  %503 = vst [vmem:[%s429 + $0x90] sm:%s421] %v502
                  %v504 = vld [vmem:[%s428 + $0x114] sm:%s421]
                  %505 = vst [vmem:[%s429 + $0x94] sm:%s421] %v504
                  %v506 = vld [vmem:[%s428 + $0x118] sm:%s421]
                  %507 = vst [vmem:[%s429 + $0x98] sm:%s421] %v506
                  %v508 = vld [vmem:[%s428 + $0x11c] sm:%s421]
                  %509 = vst [vmem:[%s429 + $0x9c] sm:%s421] %v508
                  %v510 = vld [vmem:[%s428 + $0x120] sm:%s421]
                  %511 = vst [vmem:[%s429 + $0xa0] sm:%s421] %v510
                  %v512 = vld [vmem:[%s428 + $0x124] sm:%s421]
                  %513 = vst [vmem:[%s429 + $0xa4] sm:%s421] %v512
                  %v514 = vld [vmem:[%s428 + $0x128] sm:%s421]
                  %515 = vst [vmem:[%s429 + $0xa8] sm:%s421] %v514
                  %v516 = vld [vmem:[%s428 + $0x12c] sm:%s421]
                  %517 = vst [vmem:[%s429 + $0xac] sm:%s421] %v516
                  %v518 = vld [vmem:[%s428 + $0x130] sm:%s421]
                  %519 = vst [vmem:[%s429 + $0xb0] sm:%s421] %v518
                  %v520 = vld [vmem:[%s428 + $0x134] sm:%s421]
                  %521 = vst [vmem:[%s429 + $0xb4] sm:%s421] %v520
                  %v522 = vld [vmem:[%s428 + $0x138] sm:%s421]
                  %523 = vst [vmem:[%s429 + $0xb8] sm:%s421] %v522
                  %v524 = vld [vmem:[%s428 + $0x13c] sm:%s421]
                  %525 = vst [vmem:[%s429 + $0xbc] sm:%s421] %v524
                  %v526 = vld [vmem:[%s428 + $0x140] sm:%s421]
                  %527 = vst [vmem:[%s429 + $0xc0] sm:%s421] %v526
                  %v528 = vld [vmem:[%s428 + $0x144] sm:%s421]
                  %529 = vst [vmem:[%s429 + $0xc4] sm:%s421] %v528
                  %v530 = vld [vmem:[%s428 + $0x148] sm:%s421]
                  %531 = vst [vmem:[%s429 + $0xc8] sm:%s421] %v530
                  %v532 = vld [vmem:[%s428 + $0x14c] sm:%s421]
                  %533 = vst [vmem:[%s429 + $0xcc] sm:%s421] %v532
                  %v534 = vld [vmem:[%s428 + $0x150] sm:%s421]
                  %535 = vst [vmem:[%s429 + $0xd0] sm:%s421] %v534
                  %v536 = vld [vmem:[%s428 + $0x154] sm:%s421]
                  %537 = vst [vmem:[%s429 + $0xd4] sm:%s421] %v536
                  %v538 = vld [vmem:[%s428 + $0x158] sm:%s421]
                  %539 = vst [vmem:[%s429 + $0xd8] sm:%s421] %v538
                  %v540 = vld [vmem:[%s428 + $0x15c] sm:%s421]
                  %541 = vst [vmem:[%s429 + $0xdc] sm:%s421] %v540
                  %v542 = vld [vmem:[%s428 + $0x160] sm:%s421]
                  %543 = vst [vmem:[%s429 + $0xe0] sm:%s421] %v542
                  %v544 = vld [vmem:[%s428 + $0x164] sm:%s421]
                  %545 = vst [vmem:[%s429 + $0xe4] sm:%s421] %v544
                  %v546 = vld [vmem:[%s428 + $0x168] sm:%s421]
                  %547 = vst [vmem:[%s429 + $0xe8] sm:%s421] %v546
                  %v548 = vld [vmem:[%s428 + $0x16c] sm:%s421]
                  %549 = vst [vmem:[%s429 + $0xec] sm:%s421] %v548
                  %v550 = vld [vmem:[%s428 + $0x170] sm:%s421]
                  %551 = vst [vmem:[%s429 + $0xf0] sm:%s421] %v550
                  %v552 = vld [vmem:[%s428 + $0x174] sm:%s421]
                  %553 = vst [vmem:[%s429 + $0xf4] sm:%s421] %v552
                  %v554 = vld [vmem:[%s428 + $0x178] sm:%s421]
                  %555 = vst [vmem:[%s429 + $0xf8] sm:%s421] %v554
                  %v556 = vld [vmem:[%s428 + $0x17c] sm:%s421]
                  %557 = vst [vmem:[%s429 + $0xfc] sm:%s421] %v556
                  %v558 = vld [vmem:[%s428 + $0x200] sm:%s421]
                  %559 = vst [vmem:[%s429 + $0x100] sm:%s421] %v558
                  %v560 = vld [vmem:[%s428 + $0x204] sm:%s421]
                  %561 = vst [vmem:[%s429 + $0x104] sm:%s421] %v560
                  %v562 = vld [vmem:[%s428 + $0x208] sm:%s421]
                  %563 = vst [vmem:[%s429 + $0x108] sm:%s421] %v562
                  %v564 = vld [vmem:[%s428 + $0x20c] sm:%s421]
                  %565 = vst [vmem:[%s429 + $0x10c] sm:%s421] %v564
                  %v566 = vld [vmem:[%s428 + $0x210] sm:%s421]
                  %567 = vst [vmem:[%s429 + $0x110] sm:%s421] %v566
                  %v568 = vld [vmem:[%s428 + $0x214] sm:%s421]
                  %569 = vst [vmem:[%s429 + $0x114] sm:%s421] %v568
                  %v570 = vld [vmem:[%s428 + $0x218] sm:%s421]
                  %571 = vst [vmem:[%s429 + $0x118] sm:%s421] %v570
                  %v572 = vld [vmem:[%s428 + $0x21c] sm:%s421]
                  %573 = vst [vmem:[%s429 + $0x11c] sm:%s421] %v572
                  %v574 = vld [vmem:[%s428 + $0x220] sm:%s421]
                  %575 = vst [vmem:[%s429 + $0x120] sm:%s421] %v574
                  %v576 = vld [vmem:[%s428 + $0x224] sm:%s421]
                  %577 = vst [vmem:[%s429 + $0x124] sm:%s421] %v576
                  %v578 = vld [vmem:[%s428 + $0x228] sm:%s421]
                  %579 = vst [vmem:[%s429 + $0x128] sm:%s421] %v578
                  %v580 = vld [vmem:[%s428 + $0x22c] sm:%s421]
                  %581 = vst [vmem:[%s429 + $0x12c] sm:%s421] %v580
                  %v582 = vld [vmem:[%s428 + $0x230] sm:%s421]
                  %583 = vst [vmem:[%s429 + $0x130] sm:%s421] %v582
                  %v584 = vld [vmem:[%s428 + $0x234] sm:%s421]
                  %585 = vst [vmem:[%s429 + $0x134] sm:%s421] %v584
                  %v586 = vld [vmem:[%s428 + $0x238] sm:%s421]
                  %587 = vst [vmem:[%s429 + $0x138] sm:%s421] %v586
                  %v588 = vld [vmem:[%s428 + $0x23c] sm:%s421]
                  %589 = vst [vmem:[%s429 + $0x13c] sm:%s421] %v588
                  %v590 = vld [vmem:[%s428 + $0x240] sm:%s421]
                  %591 = vst [vmem:[%s429 + $0x140] sm:%s421] %v590
                  %v592 = vld [vmem:[%s428 + $0x244] sm:%s421]
                  %593 = vst [vmem:[%s429 + $0x144] sm:%s421] %v592
                  %v594 = vld [vmem:[%s428 + $0x248] sm:%s421]
                  %595 = vst [vmem:[%s429 + $0x148] sm:%s421] %v594
                  %v596 = vld [vmem:[%s428 + $0x24c] sm:%s421]
                  %597 = vst [vmem:[%s429 + $0x14c] sm:%s421] %v596
                  %v598 = vld [vmem:[%s428 + $0x250] sm:%s421]
                  %599 = vst [vmem:[%s429 + $0x150] sm:%s421] %v598
                  %v600 = vld [vmem:[%s428 + $0x254] sm:%s421]
                  %601 = vst [vmem:[%s429 + $0x154] sm:%s421] %v600
                  %v602 = vld [vmem:[%s428 + $0x258] sm:%s421]
                  %603 = vst [vmem:[%s429 + $0x158] sm:%s421] %v602
                  %v604 = vld [vmem:[%s428 + $0x25c] sm:%s421]
                  %605 = vst [vmem:[%s429 + $0x15c] sm:%s421] %v604
                  %v606 = vld [vmem:[%s428 + $0x260] sm:%s421]
                  %607 = vst [vmem:[%s429 + $0x160] sm:%s421] %v606
                  %v608 = vld [vmem:[%s428 + $0x264] sm:%s421]
                  %609 = vst [vmem:[%s429 + $0x164] sm:%s421] %v608
                  %v610 = vld [vmem:[%s428 + $0x268] sm:%s421]
                  %611 = vst [vmem:[%s429 + $0x168] sm:%s421] %v610
                  %v612 = vld [vmem:[%s428 + $0x26c] sm:%s421]
                  %613 = vst [vmem:[%s429 + $0x16c] sm:%s421] %v612
                  %v614 = vld [vmem:[%s428 + $0x270] sm:%s421]
                  %615 = vst [vmem:[%s429 + $0x170] sm:%s421] %v614
                  %v616 = vld [vmem:[%s428 + $0x274] sm:%s421]
                  %617 = vst [vmem:[%s429 + $0x174] sm:%s421] %v616
                  %v618 = vld [vmem:[%s428 + $0x278] sm:%s421]
                  %619 = vst [vmem:[%s429 + $0x178] sm:%s421] %v618
                  %v620 = vld [vmem:[%s428 + $0x27c] sm:%s421]
                  %621 = vst [vmem:[%s429 + $0x17c] sm:%s421] %v620
                  %v622 = vld [vmem:[%s428 + $0x300] sm:%s421]
                  %623 = vst [vmem:[%s429 + $0x180] sm:%s421] %v622
                  %v624 = vld [vmem:[%s428 + $0x304] sm:%s421]
                  %625 = vst [vmem:[%s429 + $0x184] sm:%s421] %v624
                  %v626 = vld [vmem:[%s428 + $0x308] sm:%s421]
                  %627 = vst [vmem:[%s429 + $0x188] sm:%s421] %v626
                  %v628 = vld [vmem:[%s428 + $0x30c] sm:%s421]
                  %629 = vst [vmem:[%s429 + $0x18c] sm:%s421] %v628
                  %v630 = vld [vmem:[%s428 + $0x310] sm:%s421]
                  %631 = vst [vmem:[%s429 + $0x190] sm:%s421] %v630
                  %v632 = vld [vmem:[%s428 + $0x314] sm:%s421]
                  %633 = vst [vmem:[%s429 + $0x194] sm:%s421] %v632
                  %v634 = vld [vmem:[%s428 + $0x318] sm:%s421]
                  %635 = vst [vmem:[%s429 + $0x198] sm:%s421] %v634
                  %v636 = vld [vmem:[%s428 + $0x31c] sm:%s421]
                  %637 = vst [vmem:[%s429 + $0x19c] sm:%s421] %v636
                  %v638 = vld [vmem:[%s428 + $0x320] sm:%s421]
                  %639 = vst [vmem:[%s429 + $0x1a0] sm:%s421] %v638
                  %v640 = vld [vmem:[%s428 + $0x324] sm:%s421]
                  %641 = vst [vmem:[%s429 + $0x1a4] sm:%s421] %v640
                  %v642 = vld [vmem:[%s428 + $0x328] sm:%s421]
                  %643 = vst [vmem:[%s429 + $0x1a8] sm:%s421] %v642
                  %v644 = vld [vmem:[%s428 + $0x32c] sm:%s421]
                  %645 = vst [vmem:[%s429 + $0x1ac] sm:%s421] %v644
                  %v646 = vld [vmem:[%s428 + $0x330] sm:%s421]
                  %647 = vst [vmem:[%s429 + $0x1b0] sm:%s421] %v646
                  %v648 = vld [vmem:[%s428 + $0x334] sm:%s421]
                  %649 = vst [vmem:[%s429 + $0x1b4] sm:%s421] %v648
                  %v650 = vld [vmem:[%s428 + $0x338] sm:%s421]
                  %651 = vst [vmem:[%s429 + $0x1b8] sm:%s421] %v650
                  %v652 = vld [vmem:[%s428 + $0x33c] sm:%s421]
                  %653 = vst [vmem:[%s429 + $0x1bc] sm:%s421] %v652
                  %v654 = vld [vmem:[%s428 + $0x340] sm:%s421]
                  %655 = vst [vmem:[%s429 + $0x1c0] sm:%s421] %v654
                  %v656 = vld [vmem:[%s428 + $0x344] sm:%s421]
                  %657 = vst [vmem:[%s429 + $0x1c4] sm:%s421] %v656
                  %v658 = vld [vmem:[%s428 + $0x348] sm:%s421]
                  %659 = vst [vmem:[%s429 + $0x1c8] sm:%s421] %v658
                  %v660 = vld [vmem:[%s428 + $0x34c] sm:%s421]
                  %661 = vst [vmem:[%s429 + $0x1cc] sm:%s421] %v660
                  %v662 = vld [vmem:[%s428 + $0x350] sm:%s421]
                  %663 = vst [vmem:[%s429 + $0x1d0] sm:%s421] %v662
                  %v664 = vld [vmem:[%s428 + $0x354] sm:%s421]
                  %665 = vst [vmem:[%s429 + $0x1d4] sm:%s421] %v664
                  %v666 = vld [vmem:[%s428 + $0x358] sm:%s421]
                  %667 = vst [vmem:[%s429 + $0x1d8] sm:%s421] %v666
                  %v668 = vld [vmem:[%s428 + $0x35c] sm:%s421]
                  %669 = vst [vmem:[%s429 + $0x1dc] sm:%s421] %v668
                  %v670 = vld [vmem:[%s428 + $0x360] sm:%s421]
                  %671 = vst [vmem:[%s429 + $0x1e0] sm:%s421] %v670
                  %v672 = vld [vmem:[%s428 + $0x364] sm:%s421]
                  %673 = vst [vmem:[%s429 + $0x1e4] sm:%s421] %v672
                  %v674 = vld [vmem:[%s428 + $0x368] sm:%s421]
                  %675 = vst [vmem:[%s429 + $0x1e8] sm:%s421] %v674
                  %v676 = vld [vmem:[%s428 + $0x36c] sm:%s421]
                  %677 = vst [vmem:[%s429 + $0x1ec] sm:%s421] %v676
                  %v678 = vld [vmem:[%s428 + $0x370] sm:%s421]
                  %679 = vst [vmem:[%s429 + $0x1f0] sm:%s421] %v678
                  %v680 = vld [vmem:[%s428 + $0x374] sm:%s421]
                  %681 = vst [vmem:[%s429 + $0x1f4] sm:%s421] %v680
                  %v682 = vld [vmem:[%s428 + $0x378] sm:%s421]
                  %683 = vst [vmem:[%s429 + $0x1f8] sm:%s421] %v682
                  %v684 = vld [vmem:[%s428 + $0x37c] sm:%s421]
                  %685 = vst [vmem:[%s429 + $0x1fc] sm:%s421] %v684
                $region63: #{net_forward.3} parent=50 // loop_footer
                  %s427 = sadd.s32 1, %s423
                $region64: #{net_forward.3} parent=50 // loop_footer_branch
                  %422 = sbr.rel target = $region60
                $region65: #{net_forward.3} parent=50 // loop_exit
                  _
              $region51: #{net_forward.3} parent=35 // pred_fallthru
                _
            $region36: #{net_forward.3} parent=31 // pred_fallthru
              _
            // Predicated region
            $region37: #{net_forward.3} parent=31 // pred_check
              _
            $region38: #{net_forward.3} parent=31 // pred_check_branch
              %143 = sbr.rel (0) target = $region40
            $region39: #{net_forward.3} parent=31 // pred_region
              %s145 = ssub.s32 16, 1
              loop: start=0, step=1, limit=1
              $region41: #{net_forward.3} parent=39 // loop_pre_header
                _
              $region42: #{net_forward.3} parent=39 // loop_header
                %s147 = sphi 0, %s151
                %p148 = scmp.ge.s32.totalorder %s147, 1
                %s152 = sphi %s137, %s137
                %s153 = sphi %s134, %s134
              $region43: #{net_forward.3} parent=39 // loop_header_branch
                %150 = sbr.rel (%p148) target = $region47
              $region44: #{net_forward.3} parent=39 // loop_body
                %v154 = vld [vmem:[%s152] sm:%s145]
                %155 = vst [vmem:[%s153] sm:%s145] %v154
                %v156 = vld [vmem:[%s152 + $0x4] sm:%s145]
                %157 = vst [vmem:[%s153 + $0x4] sm:%s145] %v156
                %v158 = vld [vmem:[%s152 + $0x8] sm:%s145]
                %159 = vst [vmem:[%s153 + $0x8] sm:%s145] %v158
                %v160 = vld [vmem:[%s152 + $0xc] sm:%s145]
                %161 = vst [vmem:[%s153 + $0xc] sm:%s145] %v160
                %v162 = vld [vmem:[%s152 + $0x10] sm:%s145]
                %163 = vst [vmem:[%s153 + $0x10] sm:%s145] %v162
                %v164 = vld [vmem:[%s152 + $0x14] sm:%s145]
                %165 = vst [vmem:[%s153 + $0x14] sm:%s145] %v164
                %v166 = vld [vmem:[%s152 + $0x18] sm:%s145]
                %167 = vst [vmem:[%s153 + $0x18] sm:%s145] %v166
                %v168 = vld [vmem:[%s152 + $0x1c] sm:%s145]
                %169 = vst [vmem:[%s153 + $0x1c] sm:%s145] %v168
                %v170 = vld [vmem:[%s152 + $0x20] sm:%s145]
                %171 = vst [vmem:[%s153 + $0x20] sm:%s145] %v170
                %v172 = vld [vmem:[%s152 + $0x24] sm:%s145]
                %173 = vst [vmem:[%s153 + $0x24] sm:%s145] %v172
                %v174 = vld [vmem:[%s152 + $0x28] sm:%s145]
                %175 = vst [vmem:[%s153 + $0x28] sm:%s145] %v174
                %v176 = vld [vmem:[%s152 + $0x2c] sm:%s145]
                %177 = vst [vmem:[%s153 + $0x2c] sm:%s145] %v176
                %v178 = vld [vmem:[%s152 + $0x30] sm:%s145]
                %179 = vst [vmem:[%s153 + $0x30] sm:%s145] %v178
                %v180 = vld [vmem:[%s152 + $0x34] sm:%s145]
                %181 = vst [vmem:[%s153 + $0x34] sm:%s145] %v180
                %v182 = vld [vmem:[%s152 + $0x38] sm:%s145]
                %183 = vst [vmem:[%s153 + $0x38] sm:%s145] %v182
                %v184 = vld [vmem:[%s152 + $0x3c] sm:%s145]
                %185 = vst [vmem:[%s153 + $0x3c] sm:%s145] %v184
                %v186 = vld [vmem:[%s152 + $0x40] sm:%s145]
                %187 = vst [vmem:[%s153 + $0x40] sm:%s145] %v186
                %v188 = vld [vmem:[%s152 + $0x44] sm:%s145]
                %189 = vst [vmem:[%s153 + $0x44] sm:%s145] %v188
                %v190 = vld [vmem:[%s152 + $0x48] sm:%s145]
                %191 = vst [vmem:[%s153 + $0x48] sm:%s145] %v190
                %v192 = vld [vmem:[%s152 + $0x4c] sm:%s145]
                %193 = vst [vmem:[%s153 + $0x4c] sm:%s145] %v192
                %v194 = vld [vmem:[%s152 + $0x50] sm:%s145]
                %195 = vst [vmem:[%s153 + $0x50] sm:%s145] %v194
                %v196 = vld [vmem:[%s152 + $0x54] sm:%s145]
                %197 = vst [vmem:[%s153 + $0x54] sm:%s145] %v196
                %v198 = vld [vmem:[%s152 + $0x58] sm:%s145]
                %199 = vst [vmem:[%s153 + $0x58] sm:%s145] %v198
                %v200 = vld [vmem:[%s152 + $0x5c] sm:%s145]
                %201 = vst [vmem:[%s153 + $0x5c] sm:%s145] %v200
                %v202 = vld [vmem:[%s152 + $0x60] sm:%s145]
                %203 = vst [vmem:[%s153 + $0x60] sm:%s145] %v202
                %v204 = vld [vmem:[%s152 + $0x64] sm:%s145]
                %205 = vst [vmem:[%s153 + $0x64] sm:%s145] %v204
                %v206 = vld [vmem:[%s152 + $0x68] sm:%s145]
                %207 = vst [vmem:[%s153 + $0x68] sm:%s145] %v206
                %v208 = vld [vmem:[%s152 + $0x6c] sm:%s145]
                %209 = vst [vmem:[%s153 + $0x6c] sm:%s145] %v208
                %v210 = vld [vmem:[%s152 + $0x70] sm:%s145]
                %211 = vst [vmem:[%s153 + $0x70] sm:%s145] %v210
                %v212 = vld [vmem:[%s152 + $0x74] sm:%s145]
                %213 = vst [vmem:[%s153 + $0x74] sm:%s145] %v212
                %v214 = vld [vmem:[%s152 + $0x78] sm:%s145]
                %215 = vst [vmem:[%s153 + $0x78] sm:%s145] %v214
                %v216 = vld [vmem:[%s152 + $0x7c] sm:%s145]
                %217 = vst [vmem:[%s153 + $0x7c] sm:%s145] %v216
                %v218 = vld [vmem:[%s152 + $0x100] sm:%s145]
                %219 = vst [vmem:[%s153 + $0x80] sm:%s145] %v218
                %v220 = vld [vmem:[%s152 + $0x104] sm:%s145]
                %221 = vst [vmem:[%s153 + $0x84] sm:%s145] %v220
                %v222 = vld [vmem:[%s152 + $0x108] sm:%s145]
                %223 = vst [vmem:[%s153 + $0x88] sm:%s145] %v222
                %v224 = vld [vmem:[%s152 + $0x10c] sm:%s145]
                %225 = vst [vmem:[%s153 + $0x8c] sm:%s145] %v224
                %v226 = vld [vmem:[%s152 + $0x110] sm:%s145]
                %227 = vst [vmem:[%s153 + $0x90] sm:%s145] %v226
                %v228 = vld [vmem:[%s152 + $0x114] sm:%s145]
                %229 = vst [vmem:[%s153 + $0x94] sm:%s145] %v228
                %v230 = vld [vmem:[%s152 + $0x118] sm:%s145]
                %231 = vst [vmem:[%s153 + $0x98] sm:%s145] %v230
                %v232 = vld [vmem:[%s152 + $0x11c] sm:%s145]
                %233 = vst [vmem:[%s153 + $0x9c] sm:%s145] %v232
                %v234 = vld [vmem:[%s152 + $0x120] sm:%s145]
                %235 = vst [vmem:[%s153 + $0xa0] sm:%s145] %v234
                %v236 = vld [vmem:[%s152 + $0x124] sm:%s145]
                %237 = vst [vmem:[%s153 + $0xa4] sm:%s145] %v236
                %v238 = vld [vmem:[%s152 + $0x128] sm:%s145]
                %239 = vst [vmem:[%s153 + $0xa8] sm:%s145] %v238
                %v240 = vld [vmem:[%s152 + $0x12c] sm:%s145]
                %241 = vst [vmem:[%s153 + $0xac] sm:%s145] %v240
                %v242 = vld [vmem:[%s152 + $0x130] sm:%s145]
                %243 = vst [vmem:[%s153 + $0xb0] sm:%s145] %v242
                %v244 = vld [vmem:[%s152 + $0x134] sm:%s145]
                %245 = vst [vmem:[%s153 + $0xb4] sm:%s145] %v244
                %v246 = vld [vmem:[%s152 + $0x138] sm:%s145]
                %247 = vst [vmem:[%s153 + $0xb8] sm:%s145] %v246
                %v248 = vld [vmem:[%s152 + $0x13c] sm:%s145]
                %249 = vst [vmem:[%s153 + $0xbc] sm:%s145] %v248
                %v250 = vld [vmem:[%s152 + $0x140] sm:%s145]
                %251 = vst [vmem:[%s153 + $0xc0] sm:%s145] %v250
                %v252 = vld [vmem:[%s152 + $0x144] sm:%s145]
                %253 = vst [vmem:[%s153 + $0xc4] sm:%s145] %v252
                %v254 = vld [vmem:[%s152 + $0x148] sm:%s145]
                %255 = vst [vmem:[%s153 + $0xc8] sm:%s145] %v254
                %v256 = vld [vmem:[%s152 + $0x14c] sm:%s145]
                %257 = vst [vmem:[%s153 + $0xcc] sm:%s145] %v256
                %v258 = vld [vmem:[%s152 + $0x150] sm:%s145]
                %259 = vst [vmem:[%s153 + $0xd0] sm:%s145] %v258
                %v260 = vld [vmem:[%s152 + $0x154] sm:%s145]
                %261 = vst [vmem:[%s153 + $0xd4] sm:%s145] %v260
                %v262 = vld [vmem:[%s152 + $0x158] sm:%s145]
                %263 = vst [vmem:[%s153 + $0xd8] sm:%s145] %v262
                %v264 = vld [vmem:[%s152 + $0x15c] sm:%s145]
                %265 = vst [vmem:[%s153 + $0xdc] sm:%s145] %v264
                %v266 = vld [vmem:[%s152 + $0x160] sm:%s145]
                %267 = vst [vmem:[%s153 + $0xe0] sm:%s145] %v266
                %v268 = vld [vmem:[%s152 + $0x164] sm:%s145]
                %269 = vst [vmem:[%s153 + $0xe4] sm:%s145] %v268
                %v270 = vld [vmem:[%s152 + $0x168] sm:%s145]
                %271 = vst [vmem:[%s153 + $0xe8] sm:%s145] %v270
                %v272 = vld [vmem:[%s152 + $0x16c] sm:%s145]
                %273 = vst [vmem:[%s153 + $0xec] sm:%s145] %v272
                %v274 = vld [vmem:[%s152 + $0x170] sm:%s145]
                %275 = vst [vmem:[%s153 + $0xf0] sm:%s145] %v274
                %v276 = vld [vmem:[%s152 + $0x174] sm:%s145]
                %277 = vst [vmem:[%s153 + $0xf4] sm:%s145] %v276
                %v278 = vld [vmem:[%s152 + $0x178] sm:%s145]
                %279 = vst [vmem:[%s153 + $0xf8] sm:%s145] %v278
                %v280 = vld [vmem:[%s152 + $0x17c] sm:%s145]
                %281 = vst [vmem:[%s153 + $0xfc] sm:%s145] %v280
                %v282 = vld [vmem:[%s152 + $0x200] sm:%s145]
                %283 = vst [vmem:[%s153 + $0x100] sm:%s145] %v282
                %v284 = vld [vmem:[%s152 + $0x204] sm:%s145]
                %285 = vst [vmem:[%s153 + $0x104] sm:%s145] %v284
                %v286 = vld [vmem:[%s152 + $0x208] sm:%s145]
                %287 = vst [vmem:[%s153 + $0x108] sm:%s145] %v286
                %v288 = vld [vmem:[%s152 + $0x20c] sm:%s145]
                %289 = vst [vmem:[%s153 + $0x10c] sm:%s145] %v288
                %v290 = vld [vmem:[%s152 + $0x210] sm:%s145]
                %291 = vst [vmem:[%s153 + $0x110] sm:%s145] %v290
                %v292 = vld [vmem:[%s152 + $0x214] sm:%s145]
                %293 = vst [vmem:[%s153 + $0x114] sm:%s145] %v292
                %v294 = vld [vmem:[%s152 + $0x218] sm:%s145]
                %295 = vst [vmem:[%s153 + $0x118] sm:%s145] %v294
                %v296 = vld [vmem:[%s152 + $0x21c] sm:%s145]
                %297 = vst [vmem:[%s153 + $0x11c] sm:%s145] %v296
                %v298 = vld [vmem:[%s152 + $0x220] sm:%s145]
                %299 = vst [vmem:[%s153 + $0x120] sm:%s145] %v298
                %v300 = vld [vmem:[%s152 + $0x224] sm:%s145]
                %301 = vst [vmem:[%s153 + $0x124] sm:%s145] %v300
                %v302 = vld [vmem:[%s152 + $0x228] sm:%s145]
                %303 = vst [vmem:[%s153 + $0x128] sm:%s145] %v302
                %v304 = vld [vmem:[%s152 + $0x22c] sm:%s145]
                %305 = vst [vmem:[%s153 + $0x12c] sm:%s145] %v304
                %v306 = vld [vmem:[%s152 + $0x230] sm:%s145]
                %307 = vst [vmem:[%s153 + $0x130] sm:%s145] %v306
                %v308 = vld [vmem:[%s152 + $0x234] sm:%s145]
                %309 = vst [vmem:[%s153 + $0x134] sm:%s145] %v308
                %v310 = vld [vmem:[%s152 + $0x238] sm:%s145]
                %311 = vst [vmem:[%s153 + $0x138] sm:%s145] %v310
                %v312 = vld [vmem:[%s152 + $0x23c] sm:%s145]
                %313 = vst [vmem:[%s153 + $0x13c] sm:%s145] %v312
                %v314 = vld [vmem:[%s152 + $0x240] sm:%s145]
                %315 = vst [vmem:[%s153 + $0x140] sm:%s145] %v314
                %v316 = vld [vmem:[%s152 + $0x244] sm:%s145]
                %317 = vst [vmem:[%s153 + $0x144] sm:%s145] %v316
                %v318 = vld [vmem:[%s152 + $0x248] sm:%s145]
                %319 = vst [vmem:[%s153 + $0x148] sm:%s145] %v318
                %v320 = vld [vmem:[%s152 + $0x24c] sm:%s145]
                %321 = vst [vmem:[%s153 + $0x14c] sm:%s145] %v320
                %v322 = vld [vmem:[%s152 + $0x250] sm:%s145]
                %323 = vst [vmem:[%s153 + $0x150] sm:%s145] %v322
                %v324 = vld [vmem:[%s152 + $0x254] sm:%s145]
                %325 = vst [vmem:[%s153 + $0x154] sm:%s145] %v324
                %v326 = vld [vmem:[%s152 + $0x258] sm:%s145]
                %327 = vst [vmem:[%s153 + $0x158] sm:%s145] %v326
                %v328 = vld [vmem:[%s152 + $0x25c] sm:%s145]
                %329 = vst [vmem:[%s153 + $0x15c] sm:%s145] %v328
                %v330 = vld [vmem:[%s152 + $0x260] sm:%s145]
                %331 = vst [vmem:[%s153 + $0x160] sm:%s145] %v330
                %v332 = vld [vmem:[%s152 + $0x264] sm:%s145]
                %333 = vst [vmem:[%s153 + $0x164] sm:%s145] %v332
                %v334 = vld [vmem:[%s152 + $0x268] sm:%s145]
                %335 = vst [vmem:[%s153 + $0x168] sm:%s145] %v334
                %v336 = vld [vmem:[%s152 + $0x26c] sm:%s145]
                %337 = vst [vmem:[%s153 + $0x16c] sm:%s145] %v336
                %v338 = vld [vmem:[%s152 + $0x270] sm:%s145]
                %339 = vst [vmem:[%s153 + $0x170] sm:%s145] %v338
                %v340 = vld [vmem:[%s152 + $0x274] sm:%s145]
                %341 = vst [vmem:[%s153 + $0x174] sm:%s145] %v340
                %v342 = vld [vmem:[%s152 + $0x278] sm:%s145]
                %343 = vst [vmem:[%s153 + $0x178] sm:%s145] %v342
                %v344 = vld [vmem:[%s152 + $0x27c] sm:%s145]
                %345 = vst [vmem:[%s153 + $0x17c] sm:%s145] %v344
                %v346 = vld [vmem:[%s152 + $0x300] sm:%s145]
                %347 = vst [vmem:[%s153 + $0x180] sm:%s145] %v346
                %v348 = vld [vmem:[%s152 + $0x304] sm:%s145]
                %349 = vst [vmem:[%s153 + $0x184] sm:%s145] %v348
                %v350 = vld [vmem:[%s152 + $0x308] sm:%s145]
                %351 = vst [vmem:[%s153 + $0x188] sm:%s145] %v350
                %v352 = vld [vmem:[%s152 + $0x30c] sm:%s145]
                %353 = vst [vmem:[%s153 + $0x18c] sm:%s145] %v352
                %v354 = vld [vmem:[%s152 + $0x310] sm:%s145]
                %355 = vst [vmem:[%s153 + $0x190] sm:%s145] %v354
                %v356 = vld [vmem:[%s152 + $0x314] sm:%s145]
                %357 = vst [vmem:[%s153 + $0x194] sm:%s145] %v356
                %v358 = vld [vmem:[%s152 + $0x318] sm:%s145]
                %359 = vst [vmem:[%s153 + $0x198] sm:%s145] %v358
                %v360 = vld [vmem:[%s152 + $0x31c] sm:%s145]
                %361 = vst [vmem:[%s153 + $0x19c] sm:%s145] %v360
                %v362 = vld [vmem:[%s152 + $0x320] sm:%s145]
                %363 = vst [vmem:[%s153 + $0x1a0] sm:%s145] %v362
                %v364 = vld [vmem:[%s152 + $0x324] sm:%s145]
                %365 = vst [vmem:[%s153 + $0x1a4] sm:%s145] %v364
                %v366 = vld [vmem:[%s152 + $0x328] sm:%s145]
                %367 = vst [vmem:[%s153 + $0x1a8] sm:%s145] %v366
                %v368 = vld [vmem:[%s152 + $0x32c] sm:%s145]
                %369 = vst [vmem:[%s153 + $0x1ac] sm:%s145] %v368
                %v370 = vld [vmem:[%s152 + $0x330] sm:%s145]
                %371 = vst [vmem:[%s153 + $0x1b0] sm:%s145] %v370
                %v372 = vld [vmem:[%s152 + $0x334] sm:%s145]
                %373 = vst [vmem:[%s153 + $0x1b4] sm:%s145] %v372
                %v374 = vld [vmem:[%s152 + $0x338] sm:%s145]
                %375 = vst [vmem:[%s153 + $0x1b8] sm:%s145] %v374
                %v376 = vld [vmem:[%s152 + $0x33c] sm:%s145]
                %377 = vst [vmem:[%s153 + $0x1bc] sm:%s145] %v376
                %v378 = vld [vmem:[%s152 + $0x340] sm:%s145]
                %379 = vst [vmem:[%s153 + $0x1c0] sm:%s145] %v378
                %v380 = vld [vmem:[%s152 + $0x344] sm:%s145]
                %381 = vst [vmem:[%s153 + $0x1c4] sm:%s145] %v380
                %v382 = vld [vmem:[%s152 + $0x348] sm:%s145]
                %383 = vst [vmem:[%s153 + $0x1c8] sm:%s145] %v382
                %v384 = vld [vmem:[%s152 + $0x34c] sm:%s145]
                %385 = vst [vmem:[%s153 + $0x1cc] sm:%s145] %v384
                %v386 = vld [vmem:[%s152 + $0x350] sm:%s145]
                %387 = vst [vmem:[%s153 + $0x1d0] sm:%s145] %v386
                %v388 = vld [vmem:[%s152 + $0x354] sm:%s145]
                %389 = vst [vmem:[%s153 + $0x1d4] sm:%s145] %v388
                %v390 = vld [vmem:[%s152 + $0x358] sm:%s145]
                %391 = vst [vmem:[%s153 + $0x1d8] sm:%s145] %v390
                %v392 = vld [vmem:[%s152 + $0x35c] sm:%s145]
                %393 = vst [vmem:[%s153 + $0x1dc] sm:%s145] %v392
                %v394 = vld [vmem:[%s152 + $0x360] sm:%s145]
                %395 = vst [vmem:[%s153 + $0x1e0] sm:%s145] %v394
                %v396 = vld [vmem:[%s152 + $0x364] sm:%s145]
                %397 = vst [vmem:[%s153 + $0x1e4] sm:%s145] %v396
                %v398 = vld [vmem:[%s152 + $0x368] sm:%s145]
                %399 = vst [vmem:[%s153 + $0x1e8] sm:%s145] %v398
                %v400 = vld [vmem:[%s152 + $0x36c] sm:%s145]
                %401 = vst [vmem:[%s153 + $0x1ec] sm:%s145] %v400
                %v402 = vld [vmem:[%s152 + $0x370] sm:%s145]
                %403 = vst [vmem:[%s153 + $0x1f0] sm:%s145] %v402
                %v404 = vld [vmem:[%s152 + $0x374] sm:%s145]
                %405 = vst [vmem:[%s153 + $0x1f4] sm:%s145] %v404
                %v406 = vld [vmem:[%s152 + $0x378] sm:%s145]
                %407 = vst [vmem:[%s153 + $0x1f8] sm:%s145] %v406
                %v408 = vld [vmem:[%s152 + $0x37c] sm:%s145]
                %409 = vst [vmem:[%s153 + $0x1fc] sm:%s145] %v408
              $region45: #{net_forward.3} parent=39 // loop_footer
                %s151 = sadd.s32 1, %s147
              $region46: #{net_forward.3} parent=39 // loop_footer_branch
                %146 = sbr.rel target = $region42
              $region47: #{net_forward.3} parent=39 // loop_exit
                _
            $region40: #{net_forward.3} parent=31 // pred_fallthru
              _
          $region32: #{net_forward.3} parent=27 // pred_fallthru
            _
          %686 = vnop
        $region28: #{net_forward.3} parent=23 // pred_fallthru
          _
      $region24: #{net_forward.3} parent=5 // pred_fallthru
        _
      %p687 = scmp.le.s32.totalorder 1, %s9
      %p688 = scmp.lt.s32.totalorder %s9, 3
      %p689 = pnand %p687, %p688
      %p690 = pneg %p689
      // Predicated region
      $region66: #{net_forward.3} parent=5 // pred_check
        _
      $region67: #{net_forward.3} parent=5 // pred_check_branch
        %692 = sbr.rel (%p689) target = $region69
      $region68: #{net_forward.3} parent=5 // pred_region
        %s693 = ssub.s32 %s9, 1
        %s694 = sand.u32 %s22, 1
        %s695 = sand.u32 %s22, 1
        %s696 = smul.addr %s695, 512
        %s697 = scalar_lea.vmem [#allocation2], %s696
        // Predicated region
        $region70: #{net_forward.3} parent=68 // pred_check
          %p698 = pneg %p35
        $region71: #{net_forward.3} parent=68 // pred_check_branch
          %700 = sbr.rel (%p698) target = $region73
        $region72: #{net_forward.3} parent=68 // pred_region
          _
        $region73: #{net_forward.3} parent=68 // pred_fallthru
          _
        %s701 = sand.u32 %s22, 1
        %s702 = sand.u32 %s22, 1
        %s703 = smul.addr %s702, 512
        %s704 = scalar_lea.vmem [#allocation2], %s703
        %p705 = pneg %p35
        %p706 = pneg %p32
        %p707 = pneg %p56
        %p708 = pneg %p53
        %p709 = pneg %p77
        %p710 = pneg %p74
        %p711 = pneg %p103
        %p712 = pneg %p100
        %s713 = smul.u32 32, %s14
        %p714 = scmp.lt.s32.totalorder %s713, 63
        %s715 = scalar_select %p714, %s713, 63
        %s716 = smul.addr %s715, 4
        %s717 = scalar_lea.vmem %s3, %s716
        %s718 = smul.u32 32, %s14
        %s719 = smul.u32 32, %s14
        %p720 = scmp.lt.s32.totalorder %s719, 63
        %s721 = scalar_select %p720, %s719, 63
        %s722 = smul.addr %s721, 4
        %s723 = scalar_lea.vmem %s3, %s722
        %s724 = smul.u32 32, %s14
        %v726 = vld [vmem:[%s1] sm:$0xf]
        %v727 = vld [vmem:[%s1 + $0x4] sm:$0xf]
        %v728 = vld [vmem:[%s1 + $0x8] sm:$0xf]
        %v729 = vld [vmem:[%s1 + $0xc] sm:$0xf]
        %v730 = vld [vmem:[%s1 + $0x10] sm:$0xf]
        %v731 = vld [vmem:[%s1 + $0x14] sm:$0xf]
        %v732 = vld [vmem:[%s1 + $0x18] sm:$0xf]
        %v733 = vld [vmem:[%s1 + $0x1c] sm:$0xf]
        %v734 = vld [vmem:[%s1 + $0x20] sm:$0xf]
        %v735 = vld [vmem:[%s1 + $0x24] sm:$0xf]
        %v736 = vld [vmem:[%s1 + $0x28] sm:$0xf]
        %v737 = vld [vmem:[%s1 + $0x2c] sm:$0xf]
        %v738 = vld [vmem:[%s1 + $0x30] sm:$0xf]
        %v739 = vld [vmem:[%s1 + $0x34] sm:$0xf]
        %v740 = vld [vmem:[%s1 + $0x38] sm:$0xf]
        %v741 = vld [vmem:[%s1 + $0x3c] sm:$0xf]
        %v742 = vld [vmem:[%s697] sm:$0xf]
        %v743 = vld [vmem:[%s697 + $0x4] sm:$0xf]
        %v744 = vld [vmem:[%s697 + $0x8] sm:$0xf]
        %v745 = vld [vmem:[%s697 + $0xc] sm:$0xf]
        %v746 = vld [vmem:[%s697 + $0x10] sm:$0xf]
        %v747 = vld [vmem:[%s697 + $0x14] sm:$0xf]
        %v748 = vld [vmem:[%s697 + $0x18] sm:$0xf]
        %v749 = vld [vmem:[%s697 + $0x1c] sm:$0xf]
        %v750 = vld [vmem:[%s697 + $0x20] sm:$0xf]
        %v751 = vld [vmem:[%s697 + $0x24] sm:$0xf]
        %v752 = vld [vmem:[%s697 + $0x28] sm:$0xf]
        %v753 = vld [vmem:[%s697 + $0x2c] sm:$0xf]
        %v754 = vld [vmem:[%s697 + $0x30] sm:$0xf]
        %v755 = vld [vmem:[%s697 + $0x34] sm:$0xf]
        %v756 = vld [vmem:[%s697 + $0x38] sm:$0xf]
        %v757 = vld [vmem:[%s697 + $0x3c] sm:$0xf]
        %v758 = vld [vmem:[%s697 + $0x40] sm:$0xf]
        %v759 = vld [vmem:[%s697 + $0x44] sm:$0xf]
        %v760 = vld [vmem:[%s697 + $0x48] sm:$0xf]
        %v761 = vld [vmem:[%s697 + $0x4c] sm:$0xf]
        %v762 = vld [vmem:[%s697 + $0x50] sm:$0xf]
        %v763 = vld [vmem:[%s697 + $0x54] sm:$0xf]
        %v764 = vld [vmem:[%s697 + $0x58] sm:$0xf]
        %v765 = vld [vmem:[%s697 + $0x5c] sm:$0xf]
        %v766 = vld [vmem:[%s697 + $0x60] sm:$0xf]
        %v767 = vld [vmem:[%s697 + $0x64] sm:$0xf]
        %v768 = vld [vmem:[%s697 + $0x68] sm:$0xf]
        %v769 = vld [vmem:[%s697 + $0x6c] sm:$0xf]
        %v770 = vld [vmem:[%s697 + $0x70] sm:$0xf]
        %v771 = vld [vmem:[%s697 + $0x74] sm:$0xf]
        %v772 = vld [vmem:[%s697 + $0x78] sm:$0xf]
        %v773 = vld [vmem:[%s697 + $0x7c] sm:$0xf]
        %v806 = vunpack.c.l.b16 %v742
        %v807 = vunpack.c.l.b16 %v743
        %v808 = vunpack.c.l.b16 %v744
        %v809 = vunpack.c.l.b16 %v745
        %v810 = vunpack.c.l.b16 %v746
        %v811 = vunpack.c.l.b16 %v747
        %v812 = vunpack.c.l.b16 %v748
        %v813 = vunpack.c.l.b16 %v749
        %v814 = vunpack.c.l.b16 %v750
        %v815 = vunpack.c.l.b16 %v751
        %v816 = vunpack.c.l.b16 %v752
        %v817 = vunpack.c.l.b16 %v753
        %v818 = vunpack.c.l.b16 %v754
        %v819 = vunpack.c.l.b16 %v755
        %v820 = vunpack.c.l.b16 %v756
        %v821 = vunpack.c.l.b16 %v757
        %v822 = vunpack.c.l.b16 %v758
        %v823 = vunpack.c.l.b16 %v759
        %v824 = vunpack.c.l.b16 %v760
        %v825 = vunpack.c.l.b16 %v761
        %v826 = vunpack.c.l.b16 %v762
        %v827 = vunpack.c.l.b16 %v763
        %v828 = vunpack.c.l.b16 %v764
        %v829 = vunpack.c.l.b16 %v765
        %v830 = vunpack.c.l.b16 %v766
        %v831 = vunpack.c.l.b16 %v767
        %v832 = vunpack.c.l.b16 %v768
        %v833 = vunpack.c.l.b16 %v769
        %v834 = vunpack.c.l.b16 %v770
        %v835 = vunpack.c.l.b16 %v771
        %v836 = vunpack.c.l.b16 %v772
        %v837 = vunpack.c.l.b16 %v773
        %v838 = vpack.c.b16 %v807, %v806
        %v839 = vpack.c.b16 %v809, %v808
        %v840 = vpack.c.b16 %v811, %v810
        %v841 = vpack.c.b16 %v813, %v812
        %v842 = vpack.c.b16 %v815, %v814
        %v843 = vpack.c.b16 %v817, %v816
        %v844 = vpack.c.b16 %v819, %v818
        %v845 = vpack.c.b16 %v821, %v820
        %v846 = vpack.c.b16 %v823, %v822
        %v847 = vpack.c.b16 %v825, %v824
        %v848 = vpack.c.b16 %v827, %v826
        %v849 = vpack.c.b16 %v829, %v828
        %v850 = vpack.c.b16 %v831, %v830
        %v851 = vpack.c.b16 %v833, %v832
        %v852 = vpack.c.b16 %v835, %v834
        %v853 = vpack.c.b16 %v837, %v836
        %v886 = vunpack.c.l.b16 %v726
        %v887 = vunpack.c.l.b16 %v727
        %v888 = vunpack.c.l.b16 %v728
        %v889 = vunpack.c.l.b16 %v729
        %v890 = vunpack.c.l.b16 %v730
        %v891 = vunpack.c.l.b16 %v731
        %v892 = vunpack.c.l.b16 %v732
        %v893 = vunpack.c.l.b16 %v733
        %v894 = vunpack.c.l.b16 %v734
        %v895 = vunpack.c.l.b16 %v735
        %v896 = vunpack.c.l.b16 %v736
        %v897 = vunpack.c.l.b16 %v737
        %v898 = vunpack.c.l.b16 %v738
        %v899 = vunpack.c.l.b16 %v739
        %v900 = vunpack.c.l.b16 %v740
        %v901 = vunpack.c.l.b16 %v741
        %v902 = vpack.c.b16 %v887, %v886
        %v903 = vpack.c.b16 %v889, %v888
        %v904 = vpack.c.b16 %v891, %v890
        %v905 = vpack.c.b16 %v893, %v892
        %v906 = vpack.c.b16 %v895, %v894
        %v907 = vpack.c.b16 %v897, %v896
        %v908 = vpack.c.b16 %v899, %v898
        %v909 = vpack.c.b16 %v901, %v900
        %918 = vmatprep.subr.bf16.mxu0 0
        %919 = vmatpush1.bf16.msra.mxu0 %v909
        %920 = vmatprep.subr.bf16.mxu0 0
        %921 = vmatpush1.bf16.msra.mxu0 %v908
        %922 = vmatprep.subr.bf16.mxu0 0
        %923 = vmatpush1.bf16.msra.mxu0 %v907
        %924 = vmatprep.subr.bf16.mxu0 0
        %925 = vmatpush1.bf16.msra.mxu0 %v906
        %926 = vmatprep.subr.bf16.mxu0 0
        %927 = vmatpush1.bf16.msra.mxu0 %v905
        %928 = vmatprep.subr.bf16.mxu0 0
        %929 = vmatpush1.bf16.msra.mxu0 %v904
        %930 = vmatprep.subr.bf16.mxu0 0
        %931 = vmatpush1.bf16.msra.mxu0 %v903
        %932 = vmatprep.subr.bf16.mxu0 0
        %933 = vmatpush1.bf16.msra.mxu0 %v902
        %934 = vmatprep.subr.bf16.mxu0 0
        %935 = vmatpush2.bf16.msra.mxu0 0
        %936 = vmatprep.subr.bf16.mxu0 0
        %937 = vmatpush2.bf16.msra.mxu0 0
        %938 = vmatprep.subr.bf16.mxu0 0
        %939 = vmatpush2.bf16.msra.mxu0 0
        %940 = vmatprep.subr.bf16.mxu0 0
        %941 = vmatpush2.bf16.msra.mxu0 0
        %942 = vmatprep.subr.bf16.mxu0 0
        %943 = vmatpush2.bf16.msra.mxu0 0
        %944 = vmatprep.subr.bf16.mxu0 0
        %945 = vmatpush2.bf16.msra.mxu0 0
        %946 = vmatprep.subr.bf16.mxu0 0
        %947 = vmatpush2.bf16.msra.mxu0 0
        %948 = vmatprep.subr.bf16.mxu0 0
        %949 = vmatpush2.bf16.msra.mxu0 0
        %950 = vmatprep.mubr.bf16.mxu0 0
        %951 = vmatmul.mubr.bf16.gmra.mxu0 %v838
        %v952 = vpop.f32.mrf.mxu0
        %v953 = vadd.f32 0.0, %v952
        %v954 = vpop.f32.mrf.mxu0
        %v955 = vpop.f32.mrf.mxu0
        %v956 = vadd.f32 0.0, %v955
        %v957 = vpop.f32.mrf.mxu0
        %958 = vmatprep.mubr.bf16.mxu0 0
        %959 = vmatmul.mubr.bf16.gmra.mxu0 %v839
        %v960 = vpop.f32.mrf.mxu0
        %v961 = vadd.f32 0.0, %v960
        %v962 = vpop.f32.mrf.mxu0
        %v963 = vpop.f32.mrf.mxu0
        %v964 = vadd.f32 0.0, %v963
        %v965 = vpop.f32.mrf.mxu0
        %966 = vmatprep.mubr.bf16.mxu0 0
        %967 = vmatmul.mubr.bf16.gmra.mxu0 %v840
        %v968 = vpop.f32.mrf.mxu0
        %v969 = vadd.f32 0.0, %v968
        %v970 = vpop.f32.mrf.mxu0
        %v971 = vpop.f32.mrf.mxu0
        %v972 = vadd.f32 0.0, %v971
        %v973 = vpop.f32.mrf.mxu0
        %974 = vmatprep.mubr.bf16.mxu0 0
        %975 = vmatmul.mubr.bf16.gmra.mxu0 %v841
        %v976 = vpop.f32.mrf.mxu0
        %v977 = vadd.f32 0.0, %v976
        %v978 = vpop.f32.mrf.mxu0
        %v979 = vpop.f32.mrf.mxu0
        %v980 = vadd.f32 0.0, %v979
        %v981 = vpop.f32.mrf.mxu0
        %982 = vmatprep.mubr.bf16.mxu0 0
        %983 = vmatmul.mubr.bf16.gmra.mxu0 %v842
        %v984 = vpop.f32.mrf.mxu0
        %v985 = vadd.f32 0.0, %v984
        %v986 = vpop.f32.mrf.mxu0
        %v987 = vpop.f32.mrf.mxu0
        %v988 = vadd.f32 0.0, %v987
        %v989 = vpop.f32.mrf.mxu0
        %990 = vmatprep.mubr.bf16.mxu0 0
        %991 = vmatmul.mubr.bf16.gmra.mxu0 %v843
        %v992 = vpop.f32.mrf.mxu0
        %v993 = vadd.f32 0.0, %v992
        %v994 = vpop.f32.mrf.mxu0
        %v995 = vpop.f32.mrf.mxu0
        %v996 = vadd.f32 0.0, %v995
        %v997 = vpop.f32.mrf.mxu0
        %998 = vmatprep.mubr.bf16.mxu0 0
        %999 = vmatmul.mubr.bf16.gmra.mxu0 %v844
        %v1000 = vpop.f32.mrf.mxu0
        %v1001 = vadd.f32 0.0, %v1000
        %v1002 = vpop.f32.mrf.mxu0
        %v1003 = vpop.f32.mrf.mxu0
        %v1004 = vadd.f32 0.0, %v1003
        %v1005 = vpop.f32.mrf.mxu0
        %1006 = vmatprep.mubr.bf16.mxu0 0
        %1007 = vmatmul.mubr.bf16.gmra.mxu0 %v845
        %v1008 = vpop.f32.mrf.mxu0
        %v1009 = vadd.f32 0.0, %v1008
        %v1010 = vpop.f32.mrf.mxu0
        %v1011 = vpop.f32.mrf.mxu0
        %v1012 = vadd.f32 0.0, %v1011
        %v1013 = vpop.f32.mrf.mxu0
        %1014 = vmatprep.mubr.bf16.mxu0 0
        %1015 = vmatmul.mubr.bf16.gmra.mxu0 %v846
        %v1016 = vpop.f32.mrf.mxu0
        %v1017 = vadd.f32 0.0, %v1016
        %v1018 = vpop.f32.mrf.mxu0
        %v1019 = vpop.f32.mrf.mxu0
        %v1020 = vadd.f32 0.0, %v1019
        %v1021 = vpop.f32.mrf.mxu0
        %1022 = vmatprep.mubr.bf16.mxu0 0
        %1023 = vmatmul.mubr.bf16.gmra.mxu0 %v847
        %v1024 = vpop.f32.mrf.mxu0
        %v1025 = vadd.f32 0.0, %v1024
        %v1026 = vpop.f32.mrf.mxu0
        %v1027 = vpop.f32.mrf.mxu0
        %v1028 = vadd.f32 0.0, %v1027
        %v1029 = vpop.f32.mrf.mxu0
        %1030 = vmatprep.mubr.bf16.mxu0 0
        %1031 = vmatmul.mubr.bf16.gmra.mxu0 %v848
        %v1032 = vpop.f32.mrf.mxu0
        %v1033 = vadd.f32 0.0, %v1032
        %v1034 = vpop.f32.mrf.mxu0
        %v1035 = vpop.f32.mrf.mxu0
        %v1036 = vadd.f32 0.0, %v1035
        %v1037 = vpop.f32.mrf.mxu0
        %1038 = vmatprep.mubr.bf16.mxu0 0
        %1039 = vmatmul.mubr.bf16.gmra.mxu0 %v849
        %v1040 = vpop.f32.mrf.mxu0
        %v1041 = vadd.f32 0.0, %v1040
        %v1042 = vpop.f32.mrf.mxu0
        %v1043 = vpop.f32.mrf.mxu0
        %v1044 = vadd.f32 0.0, %v1043
        %v1045 = vpop.f32.mrf.mxu0
        %1046 = vmatprep.mubr.bf16.mxu0 0
        %1047 = vmatmul.mubr.bf16.gmra.mxu0 %v850
        %v1048 = vpop.f32.mrf.mxu0
        %v1049 = vadd.f32 0.0, %v1048
        %v1050 = vpop.f32.mrf.mxu0
        %v1051 = vpop.f32.mrf.mxu0
        %v1052 = vadd.f32 0.0, %v1051
        %v1053 = vpop.f32.mrf.mxu0
        %1054 = vmatprep.mubr.bf16.mxu0 0
        %1055 = vmatmul.mubr.bf16.gmra.mxu0 %v851
        %v1056 = vpop.f32.mrf.mxu0
        %v1057 = vadd.f32 0.0, %v1056
        %v1058 = vpop.f32.mrf.mxu0
        %v1059 = vpop.f32.mrf.mxu0
        %v1060 = vadd.f32 0.0, %v1059
        %v1061 = vpop.f32.mrf.mxu0
        %1062 = vmatprep.mubr.bf16.mxu0 0
        %1063 = vmatmul.mubr.bf16.gmra.mxu0 %v852
        %v1064 = vpop.f32.mrf.mxu0
        %v1065 = vadd.f32 0.0, %v1064
        %v1066 = vpop.f32.mrf.mxu0
        %v1067 = vpop.f32.mrf.mxu0
        %v1068 = vadd.f32 0.0, %v1067
        %v1069 = vpop.f32.mrf.mxu0
        %1070 = vmatprep.mubr.bf16.mxu0 0
        %1071 = vmatmul.mubr.bf16.gmra.mxu0 %v853
        %v1072 = vpop.f32.mrf.mxu0
        %v1073 = vadd.f32 0.0, %v1072
        %v1074 = vpop.f32.mrf.mxu0
        %v1075 = vpop.f32.mrf.mxu0
        %v1076 = vadd.f32 0.0, %v1075
        %v1077 = vpop.f32.mrf.mxu0
        %1078 = vdwg.mxu0
        %s1079 = scalar_lea.vmem %s697, 128 [#allocation2]
        %v1080 = vld [vmem:[%s1079] sm:$0xf]
        %v1081 = vld [vmem:[%s1079 + $0x4] sm:$0xf]
        %v1082 = vld [vmem:[%s1079 + $0x8] sm:$0xf]
        %v1083 = vld [vmem:[%s1079 + $0xc] sm:$0xf]
        %v1084 = vld [vmem:[%s1079 + $0x10] sm:$0xf]
        %v1085 = vld [vmem:[%s1079 + $0x14] sm:$0xf]
        %v1086 = vld [vmem:[%s1079 + $0x18] sm:$0xf]
        %v1087 = vld [vmem:[%s1079 + $0x1c] sm:$0xf]
        %v1088 = vld [vmem:[%s1079 + $0x20] sm:$0xf]
        %v1089 = vld [vmem:[%s1079 + $0x24] sm:$0xf]
        %v1090 = vld [vmem:[%s1079 + $0x28] sm:$0xf]
        %v1091 = vld [vmem:[%s1079 + $0x2c] sm:$0xf]
        %v1092 = vld [vmem:[%s1079 + $0x30] sm:$0xf]
        %v1093 = vld [vmem:[%s1079 + $0x34] sm:$0xf]
        %v1094 = vld [vmem:[%s1079 + $0x38] sm:$0xf]
        %v1095 = vld [vmem:[%s1079 + $0x3c] sm:$0xf]
        %v1096 = vld [vmem:[%s1079 + $0x40] sm:$0xf]
        %v1097 = vld [vmem:[%s1079 + $0x44] sm:$0xf]
        %v1098 = vld [vmem:[%s1079 + $0x48] sm:$0xf]
        %v1099 = vld [vmem:[%s1079 + $0x4c] sm:$0xf]
        %v1100 = vld [vmem:[%s1079 + $0x50] sm:$0xf]
        %v1101 = vld [vmem:[%s1079 + $0x54] sm:$0xf]
        %v1102 = vld [vmem:[%s1079 + $0x58] sm:$0xf]
        %v1103 = vld [vmem:[%s1079 + $0x5c] sm:$0xf]
        %v1104 = vld [vmem:[%s1079 + $0x60] sm:$0xf]
        %v1105 = vld [vmem:[%s1079 + $0x64] sm:$0xf]
        %v1106 = vld [vmem:[%s1079 + $0x68] sm:$0xf]
        %v1107 = vld [vmem:[%s1079 + $0x6c] sm:$0xf]
        %v1108 = vld [vmem:[%s1079 + $0x70] sm:$0xf]
        %v1109 = vld [vmem:[%s1079 + $0x74] sm:$0xf]
        %v1110 = vld [vmem:[%s1079 + $0x78] sm:$0xf]
        %v1111 = vld [vmem:[%s1079 + $0x7c] sm:$0xf]
        %v1144 = vunpack.c.l.b16 %v1080
        %v1145 = vunpack.c.l.b16 %v1081
        %v1146 = vunpack.c.l.b16 %v1082
        %v1147 = vunpack.c.l.b16 %v1083
        %v1148 = vunpack.c.l.b16 %v1084
        %v1149 = vunpack.c.l.b16 %v1085
        %v1150 = vunpack.c.l.b16 %v1086
        %v1151 = vunpack.c.l.b16 %v1087
        %v1152 = vunpack.c.l.b16 %v1088
        %v1153 = vunpack.c.l.b16 %v1089
        %v1154 = vunpack.c.l.b16 %v1090
        %v1155 = vunpack.c.l.b16 %v1091
        %v1156 = vunpack.c.l.b16 %v1092
        %v1157 = vunpack.c.l.b16 %v1093
        %v1158 = vunpack.c.l.b16 %v1094
        %v1159 = vunpack.c.l.b16 %v1095
        %v1160 = vunpack.c.l.b16 %v1096
        %v1161 = vunpack.c.l.b16 %v1097
        %v1162 = vunpack.c.l.b16 %v1098
        %v1163 = vunpack.c.l.b16 %v1099
        %v1164 = vunpack.c.l.b16 %v1100
        %v1165 = vunpack.c.l.b16 %v1101
        %v1166 = vunpack.c.l.b16 %v1102
        %v1167 = vunpack.c.l.b16 %v1103
        %v1168 = vunpack.c.l.b16 %v1104
        %v1169 = vunpack.c.l.b16 %v1105
        %v1170 = vunpack.c.l.b16 %v1106
        %v1171 = vunpack.c.l.b16 %v1107
        %v1172 = vunpack.c.l.b16 %v1108
        %v1173 = vunpack.c.l.b16 %v1109
        %v1174 = vunpack.c.l.b16 %v1110
        %v1175 = vunpack.c.l.b16 %v1111
        %v1176 = vpack.c.b16 %v1145, %v1144
        %v1177 = vpack.c.b16 %v1147, %v1146
        %v1178 = vpack.c.b16 %v1149, %v1148
        %v1179 = vpack.c.b16 %v1151, %v1150
        %v1180 = vpack.c.b16 %v1153, %v1152
        %v1181 = vpack.c.b16 %v1155, %v1154
        %v1182 = vpack.c.b16 %v1157, %v1156
        %v1183 = vpack.c.b16 %v1159, %v1158
        %v1184 = vpack.c.b16 %v1161, %v1160
        %v1185 = vpack.c.b16 %v1163, %v1162
        %v1186 = vpack.c.b16 %v1165, %v1164
        %v1187 = vpack.c.b16 %v1167, %v1166
        %v1188 = vpack.c.b16 %v1169, %v1168
        %v1189 = vpack.c.b16 %v1171, %v1170
        %v1190 = vpack.c.b16 %v1173, %v1172
        %v1191 = vpack.c.b16 %v1175, %v1174
        %1208 = vmatprep.subr.bf16.mxu0 0
        %1209 = vmatpush1.bf16.msra.mxu0 %v909
        %1210 = vmatprep.subr.bf16.mxu0 0
        %1211 = vmatpush1.bf16.msra.mxu0 %v908
        %1212 = vmatprep.subr.bf16.mxu0 0
        %1213 = vmatpush1.bf16.msra.mxu0 %v907
        %1214 = vmatprep.subr.bf16.mxu0 0
        %1215 = vmatpush1.bf16.msra.mxu0 %v906
        %1216 = vmatprep.subr.bf16.mxu0 0
        %1217 = vmatpush1.bf16.msra.mxu0 %v905
        %1218 = vmatprep.subr.bf16.mxu0 0
        %1219 = vmatpush1.bf16.msra.mxu0 %v904
        %1220 = vmatprep.subr.bf16.mxu0 0
        %1221 = vmatpush1.bf16.msra.mxu0 %v903
        %1222 = vmatprep.subr.bf16.mxu0 0
        %1223 = vmatpush1.bf16.msra.mxu0 %v902
        %1224 = vmatprep.subr.bf16.mxu0 0
        %1225 = vmatpush2.bf16.msra.mxu0 0
        %1226 = vmatprep.subr.bf16.mxu0 0
        %1227 = vmatpush2.bf16.msra.mxu0 0
        %1228 = vmatprep.subr.bf16.mxu0 0
        %1229 = vmatpush2.bf16.msra.mxu0 0
        %1230 = vmatprep.subr.bf16.mxu0 0
        %1231 = vmatpush2.bf16.msra.mxu0 0
        %1232 = vmatprep.subr.bf16.mxu0 0
        %1233 = vmatpush2.bf16.msra.mxu0 0
        %1234 = vmatprep.subr.bf16.mxu0 0
        %1235 = vmatpush2.bf16.msra.mxu0 0
        %1236 = vmatprep.subr.bf16.mxu0 0
        %1237 = vmatpush2.bf16.msra.mxu0 0
        %1238 = vmatprep.subr.bf16.mxu0 0
        %1239 = vmatpush2.bf16.msra.mxu0 0
        %1240 = vmatprep.mubr.bf16.mxu0 0
        %1241 = vmatmul.mubr.bf16.gmra.mxu0 %v1176
        %v1242 = vpop.f32.mrf.mxu0
        %v1243 = vadd.f32 0.0, %v1242
        %v1244 = vpop.f32.mrf.mxu0
        %v1245 = vpop.f32.mrf.mxu0
        %v1246 = vadd.f32 0.0, %v1245
        %v1247 = vpop.f32.mrf.mxu0
        %1248 = vmatprep.mubr.bf16.mxu0 0
        %1249 = vmatmul.mubr.bf16.gmra.mxu0 %v1177
        %v1250 = vpop.f32.mrf.mxu0
        %v1251 = vadd.f32 0.0, %v1250
        %v1252 = vpop.f32.mrf.mxu0
        %v1253 = vpop.f32.mrf.mxu0
        %v1254 = vadd.f32 0.0, %v1253
        %v1255 = vpop.f32.mrf.mxu0
        %1256 = vmatprep.mubr.bf16.mxu0 0
        %1257 = vmatmul.mubr.bf16.gmra.mxu0 %v1178
        %v1258 = vpop.f32.mrf.mxu0
        %v1259 = vadd.f32 0.0, %v1258
        %v1260 = vpop.f32.mrf.mxu0
        %v1261 = vpop.f32.mrf.mxu0
        %v1262 = vadd.f32 0.0, %v1261
        %v1263 = vpop.f32.mrf.mxu0
        %1264 = vmatprep.mubr.bf16.mxu0 0
        %1265 = vmatmul.mubr.bf16.gmra.mxu0 %v1179
        %v1266 = vpop.f32.mrf.mxu0
        %v1267 = vadd.f32 0.0, %v1266
        %v1268 = vpop.f32.mrf.mxu0
        %v1269 = vpop.f32.mrf.mxu0
        %v1270 = vadd.f32 0.0, %v1269
        %v1271 = vpop.f32.mrf.mxu0
        %1272 = vmatprep.mubr.bf16.mxu0 0
        %1273 = vmatmul.mubr.bf16.gmra.mxu0 %v1180
        %v1274 = vpop.f32.mrf.mxu0
        %v1275 = vadd.f32 0.0, %v1274
        %v1276 = vpop.f32.mrf.mxu0
        %v1277 = vpop.f32.mrf.mxu0
        %v1278 = vadd.f32 0.0, %v1277
        %v1279 = vpop.f32.mrf.mxu0
        %1280 = vmatprep.mubr.bf16.mxu0 0
        %1281 = vmatmul.mubr.bf16.gmra.mxu0 %v1181
        %v1282 = vpop.f32.mrf.mxu0
        %v1283 = vadd.f32 0.0, %v1282
        %v1284 = vpop.f32.mrf.mxu0
        %v1285 = vpop.f32.mrf.mxu0
        %v1286 = vadd.f32 0.0, %v1285
        %v1287 = vpop.f32.mrf.mxu0
        %1288 = vmatprep.mubr.bf16.mxu0 0
        %1289 = vmatmul.mubr.bf16.gmra.mxu0 %v1182
        %v1290 = vpop.f32.mrf.mxu0
        %v1291 = vadd.f32 0.0, %v1290
        %v1292 = vpop.f32.mrf.mxu0
        %v1293 = vpop.f32.mrf.mxu0
        %v1294 = vadd.f32 0.0, %v1293
        %v1295 = vpop.f32.mrf.mxu0
        %1296 = vmatprep.mubr.bf16.mxu0 0
        %1297 = vmatmul.mubr.bf16.gmra.mxu0 %v1183
        %v1298 = vpop.f32.mrf.mxu0
        %v1299 = vadd.f32 0.0, %v1298
        %v1300 = vpop.f32.mrf.mxu0
        %v1301 = vpop.f32.mrf.mxu0
        %v1302 = vadd.f32 0.0, %v1301
        %v1303 = vpop.f32.mrf.mxu0
        %1304 = vmatprep.mubr.bf16.mxu0 0
        %1305 = vmatmul.mubr.bf16.gmra.mxu0 %v1184
        %v1306 = vpop.f32.mrf.mxu0
        %v1307 = vadd.f32 0.0, %v1306
        %v1308 = vpop.f32.mrf.mxu0
        %v1309 = vpop.f32.mrf.mxu0
        %v1310 = vadd.f32 0.0, %v1309
        %v1311 = vpop.f32.mrf.mxu0
        %1312 = vmatprep.mubr.bf16.mxu0 0
        %1313 = vmatmul.mubr.bf16.gmra.mxu0 %v1185
        %v1314 = vpop.f32.mrf.mxu0
        %v1315 = vadd.f32 0.0, %v1314
        %v1316 = vpop.f32.mrf.mxu0
        %v1317 = vpop.f32.mrf.mxu0
        %v1318 = vadd.f32 0.0, %v1317
        %v1319 = vpop.f32.mrf.mxu0
        %1320 = vmatprep.mubr.bf16.mxu0 0
        %1321 = vmatmul.mubr.bf16.gmra.mxu0 %v1186
        %v1322 = vpop.f32.mrf.mxu0
        %v1323 = vadd.f32 0.0, %v1322
        %v1324 = vpop.f32.mrf.mxu0
        %v1325 = vpop.f32.mrf.mxu0
        %v1326 = vadd.f32 0.0, %v1325
        %v1327 = vpop.f32.mrf.mxu0
        %1328 = vmatprep.mubr.bf16.mxu0 0
        %1329 = vmatmul.mubr.bf16.gmra.mxu0 %v1187
        %v1330 = vpop.f32.mrf.mxu0
        %v1331 = vadd.f32 0.0, %v1330
        %v1332 = vpop.f32.mrf.mxu0
        %v1333 = vpop.f32.mrf.mxu0
        %v1334 = vadd.f32 0.0, %v1333
        %v1335 = vpop.f32.mrf.mxu0
        %1336 = vmatprep.mubr.bf16.mxu0 0
        %1337 = vmatmul.mubr.bf16.gmra.mxu0 %v1188
        %v1338 = vpop.f32.mrf.mxu0
        %v1339 = vadd.f32 0.0, %v1338
        %v1340 = vpop.f32.mrf.mxu0
        %v1341 = vpop.f32.mrf.mxu0
        %v1342 = vadd.f32 0.0, %v1341
        %v1343 = vpop.f32.mrf.mxu0
        %1344 = vmatprep.mubr.bf16.mxu0 0
        %1345 = vmatmul.mubr.bf16.gmra.mxu0 %v1189
        %v1346 = vpop.f32.mrf.mxu0
        %v1347 = vadd.f32 0.0, %v1346
        %v1348 = vpop.f32.mrf.mxu0
        %v1349 = vpop.f32.mrf.mxu0
        %v1350 = vadd.f32 0.0, %v1349
        %v1351 = vpop.f32.mrf.mxu0
        %1352 = vmatprep.mubr.bf16.mxu0 0
        %1353 = vmatmul.mubr.bf16.gmra.mxu0 %v1190
        %v1354 = vpop.f32.mrf.mxu0
        %v1355 = vadd.f32 0.0, %v1354
        %v1356 = vpop.f32.mrf.mxu0
        %v1357 = vpop.f32.mrf.mxu0
        %v1358 = vadd.f32 0.0, %v1357
        %v1359 = vpop.f32.mrf.mxu0
        %1360 = vmatprep.mubr.bf16.mxu0 0
        %1361 = vmatmul.mubr.bf16.gmra.mxu0 %v1191
        %v1362 = vpop.f32.mrf.mxu0
        %v1363 = vadd.f32 0.0, %v1362
        %v1364 = vpop.f32.mrf.mxu0
        %v1365 = vpop.f32.mrf.mxu0
        %v1366 = vadd.f32 0.0, %v1365
        %v1367 = vpop.f32.mrf.mxu0
        %1368 = vdwg.mxu0
        %v1369 = vmax.f32 %v953, %v1243
        %v1370 = vmax.f32 %v956, %v1246
        %v1371 = vmax.f32 %v961, %v1251
        %v1372 = vmax.f32 %v964, %v1254
        %v1373 = vmax.f32 %v969, %v1259
        %v1374 = vmax.f32 %v972, %v1262
        %v1375 = vmax.f32 %v977, %v1267
        %v1376 = vmax.f32 %v980, %v1270
        %v1377 = vmax.f32 %v985, %v1275
        %v1378 = vmax.f32 %v988, %v1278
        %v1379 = vmax.f32 %v993, %v1283
        %v1380 = vmax.f32 %v996, %v1286
        %v1381 = vmax.f32 %v1001, %v1291
        %v1382 = vmax.f32 %v1004, %v1294
        %v1383 = vmax.f32 %v1009, %v1299
        %v1384 = vmax.f32 %v1012, %v1302
        %v1385 = vmax.f32 %v1017, %v1307
        %v1386 = vmax.f32 %v1020, %v1310
        %v1387 = vmax.f32 %v1025, %v1315
        %v1388 = vmax.f32 %v1028, %v1318
        %v1389 = vmax.f32 %v1033, %v1323
        %v1390 = vmax.f32 %v1036, %v1326
        %v1391 = vmax.f32 %v1041, %v1331
        %v1392 = vmax.f32 %v1044, %v1334
        %v1393 = vmax.f32 %v1049, %v1339
        %v1394 = vmax.f32 %v1052, %v1342
        %v1395 = vmax.f32 %v1057, %v1347
        %v1396 = vmax.f32 %v1060, %v1350
        %v1397 = vmax.f32 %v1065, %v1355
        %v1398 = vmax.f32 %v1068, %v1358
        %v1399 = vmax.f32 %v1073, %v1363
        %v1400 = vmax.f32 %v1076, %v1366
        %s1401 = scalar_lea.vmem %s697, 256 [#allocation2]
        %v1402 = vld [vmem:[%s1401] sm:$0xf]
        %v1403 = vld [vmem:[%s1401 + $0x4] sm:$0xf]
        %v1404 = vld [vmem:[%s1401 + $0x8] sm:$0xf]
        %v1405 = vld [vmem:[%s1401 + $0xc] sm:$0xf]
        %v1406 = vld [vmem:[%s1401 + $0x10] sm:$0xf]
        %v1407 = vld [vmem:[%s1401 + $0x14] sm:$0xf]
        %v1408 = vld [vmem:[%s1401 + $0x18] sm:$0xf]
        %v1409 = vld [vmem:[%s1401 + $0x1c] sm:$0xf]
        %v1410 = vld [vmem:[%s1401 + $0x20] sm:$0xf]
        %v1411 = vld [vmem:[%s1401 + $0x24] sm:$0xf]
        %v1412 = vld [vmem:[%s1401 + $0x28] sm:$0xf]
        %v1413 = vld [vmem:[%s1401 + $0x2c] sm:$0xf]
        %v1414 = vld [vmem:[%s1401 + $0x30] sm:$0xf]
        %v1415 = vld [vmem:[%s1401 + $0x34] sm:$0xf]
        %v1416 = vld [vmem:[%s1401 + $0x38] sm:$0xf]
        %v1417 = vld [vmem:[%s1401 + $0x3c] sm:$0xf]
        %v1418 = vld [vmem:[%s1401 + $0x40] sm:$0xf]
        %v1419 = vld [vmem:[%s1401 + $0x44] sm:$0xf]
        %v1420 = vld [vmem:[%s1401 + $0x48] sm:$0xf]
        %v1421 = vld [vmem:[%s1401 + $0x4c] sm:$0xf]
        %v1422 = vld [vmem:[%s1401 + $0x50] sm:$0xf]
        %v1423 = vld [vmem:[%s1401 + $0x54] sm:$0xf]
        %v1424 = vld [vmem:[%s1401 + $0x58] sm:$0xf]
        %v1425 = vld [vmem:[%s1401 + $0x5c] sm:$0xf]
        %v1426 = vld [vmem:[%s1401 + $0x60] sm:$0xf]
        %v1427 = vld [vmem:[%s1401 + $0x64] sm:$0xf]
        %v1428 = vld [vmem:[%s1401 + $0x68] sm:$0xf]
        %v1429 = vld [vmem:[%s1401 + $0x6c] sm:$0xf]
        %v1430 = vld [vmem:[%s1401 + $0x70] sm:$0xf]
        %v1431 = vld [vmem:[%s1401 + $0x74] sm:$0xf]
        %v1432 = vld [vmem:[%s1401 + $0x78] sm:$0xf]
        %v1433 = vld [vmem:[%s1401 + $0x7c] sm:$0xf]
        %v1466 = vunpack.c.l.b16 %v1402
        %v1467 = vunpack.c.l.b16 %v1403
        %v1468 = vunpack.c.l.b16 %v1404
        %v1469 = vunpack.c.l.b16 %v1405
        %v1470 = vunpack.c.l.b16 %v1406
        %v1471 = vunpack.c.l.b16 %v1407
        %v1472 = vunpack.c.l.b16 %v1408
        %v1473 = vunpack.c.l.b16 %v1409
        %v1474 = vunpack.c.l.b16 %v1410
        %v1475 = vunpack.c.l.b16 %v1411
        %v1476 = vunpack.c.l.b16 %v1412
        %v1477 = vunpack.c.l.b16 %v1413
        %v1478 = vunpack.c.l.b16 %v1414
        %v1479 = vunpack.c.l.b16 %v1415
        %v1480 = vunpack.c.l.b16 %v1416
        %v1481 = vunpack.c.l.b16 %v1417
        %v1482 = vunpack.c.l.b16 %v1418
        %v1483 = vunpack.c.l.b16 %v1419
        %v1484 = vunpack.c.l.b16 %v1420
        %v1485 = vunpack.c.l.b16 %v1421
        %v1486 = vunpack.c.l.b16 %v1422
        %v1487 = vunpack.c.l.b16 %v1423
        %v1488 = vunpack.c.l.b16 %v1424
        %v1489 = vunpack.c.l.b16 %v1425
        %v1490 = vunpack.c.l.b16 %v1426
        %v1491 = vunpack.c.l.b16 %v1427
        %v1492 = vunpack.c.l.b16 %v1428
        %v1493 = vunpack.c.l.b16 %v1429
        %v1494 = vunpack.c.l.b16 %v1430
        %v1495 = vunpack.c.l.b16 %v1431
        %v1496 = vunpack.c.l.b16 %v1432
        %v1497 = vunpack.c.l.b16 %v1433
        %v1498 = vpack.c.b16 %v1467, %v1466
        %v1499 = vpack.c.b16 %v1469, %v1468
        %v1500 = vpack.c.b16 %v1471, %v1470
        %v1501 = vpack.c.b16 %v1473, %v1472
        %v1502 = vpack.c.b16 %v1475, %v1474
        %v1503 = vpack.c.b16 %v1477, %v1476
        %v1504 = vpack.c.b16 %v1479, %v1478
        %v1505 = vpack.c.b16 %v1481, %v1480
        %v1506 = vpack.c.b16 %v1483, %v1482
        %v1507 = vpack.c.b16 %v1485, %v1484
        %v1508 = vpack.c.b16 %v1487, %v1486
        %v1509 = vpack.c.b16 %v1489, %v1488
        %v1510 = vpack.c.b16 %v1491, %v1490
        %v1511 = vpack.c.b16 %v1493, %v1492
        %v1512 = vpack.c.b16 %v1495, %v1494
        %v1513 = vpack.c.b16 %v1497, %v1496
        %1530 = vmatprep.subr.bf16.mxu0 0
        %1531 = vmatpush1.bf16.msra.mxu0 %v909
        %1532 = vmatprep.subr.bf16.mxu0 0
        %1533 = vmatpush1.bf16.msra.mxu0 %v908
        %1534 = vmatprep.subr.bf16.mxu0 0
        %1535 = vmatpush1.bf16.msra.mxu0 %v907
        %1536 = vmatprep.subr.bf16.mxu0 0
        %1537 = vmatpush1.bf16.msra.mxu0 %v906
        %1538 = vmatprep.subr.bf16.mxu0 0
        %1539 = vmatpush1.bf16.msra.mxu0 %v905
        %1540 = vmatprep.subr.bf16.mxu0 0
        %1541 = vmatpush1.bf16.msra.mxu0 %v904
        %1542 = vmatprep.subr.bf16.mxu0 0
        %1543 = vmatpush1.bf16.msra.mxu0 %v903
        %1544 = vmatprep.subr.bf16.mxu0 0
        %1545 = vmatpush1.bf16.msra.mxu0 %v902
        %1546 = vmatprep.subr.bf16.mxu0 0
        %1547 = vmatpush2.bf16.msra.mxu0 0
        %1548 = vmatprep.subr.bf16.mxu0 0
        %1549 = vmatpush2.bf16.msra.mxu0 0
        %1550 = vmatprep.subr.bf16.mxu0 0
        %1551 = vmatpush2.bf16.msra.mxu0 0
        %1552 = vmatprep.subr.bf16.mxu0 0
        %1553 = vmatpush2.bf16.msra.mxu0 0
        %1554 = vmatprep.subr.bf16.mxu0 0
        %1555 = vmatpush2.bf16.msra.mxu0 0
        %1556 = vmatprep.subr.bf16.mxu0 0
        %1557 = vmatpush2.bf16.msra.mxu0 0
        %1558 = vmatprep.subr.bf16.mxu0 0
        %1559 = vmatpush2.bf16.msra.mxu0 0
        %1560 = vmatprep.subr.bf16.mxu0 0
        %1561 = vmatpush2.bf16.msra.mxu0 0
        %1562 = vmatprep.mubr.bf16.mxu0 0
        %1563 = vmatmul.mubr.bf16.gmra.mxu0 %v1498
        %v1564 = vpop.f32.mrf.mxu0
        %v1565 = vadd.f32 0.0, %v1564
        %v1566 = vpop.f32.mrf.mxu0
        %v1567 = vpop.f32.mrf.mxu0
        %v1568 = vadd.f32 0.0, %v1567
        %v1569 = vpop.f32.mrf.mxu0
        %1570 = vmatprep.mubr.bf16.mxu0 0
        %1571 = vmatmul.mubr.bf16.gmra.mxu0 %v1499
        %v1572 = vpop.f32.mrf.mxu0
        %v1573 = vadd.f32 0.0, %v1572
        %v1574 = vpop.f32.mrf.mxu0
        %v1575 = vpop.f32.mrf.mxu0
        %v1576 = vadd.f32 0.0, %v1575
        %v1577 = vpop.f32.mrf.mxu0
        %1578 = vmatprep.mubr.bf16.mxu0 0
        %1579 = vmatmul.mubr.bf16.gmra.mxu0 %v1500
        %v1580 = vpop.f32.mrf.mxu0
        %v1581 = vadd.f32 0.0, %v1580
        %v1582 = vpop.f32.mrf.mxu0
        %v1583 = vpop.f32.mrf.mxu0
        %v1584 = vadd.f32 0.0, %v1583
        %v1585 = vpop.f32.mrf.mxu0
        %1586 = vmatprep.mubr.bf16.mxu0 0
        %1587 = vmatmul.mubr.bf16.gmra.mxu0 %v1501
        %v1588 = vpop.f32.mrf.mxu0
        %v1589 = vadd.f32 0.0, %v1588
        %v1590 = vpop.f32.mrf.mxu0
        %v1591 = vpop.f32.mrf.mxu0
        %v1592 = vadd.f32 0.0, %v1591
        %v1593 = vpop.f32.mrf.mxu0
        %1594 = vmatprep.mubr.bf16.mxu0 0
        %1595 = vmatmul.mubr.bf16.gmra.mxu0 %v1502
        %v1596 = vpop.f32.mrf.mxu0
        %v1597 = vadd.f32 0.0, %v1596
        %v1598 = vpop.f32.mrf.mxu0
        %v1599 = vpop.f32.mrf.mxu0
        %v1600 = vadd.f32 0.0, %v1599
        %v1601 = vpop.f32.mrf.mxu0
        %1602 = vmatprep.mubr.bf16.mxu0 0
        %1603 = vmatmul.mubr.bf16.gmra.mxu0 %v1503
        %v1604 = vpop.f32.mrf.mxu0
        %v1605 = vadd.f32 0.0, %v1604
        %v1606 = vpop.f32.mrf.mxu0
        %v1607 = vpop.f32.mrf.mxu0
        %v1608 = vadd.f32 0.0, %v1607
        %v1609 = vpop.f32.mrf.mxu0
        %1610 = vmatprep.mubr.bf16.mxu0 0
        %1611 = vmatmul.mubr.bf16.gmra.mxu0 %v1504
        %v1612 = vpop.f32.mrf.mxu0
        %v1613 = vadd.f32 0.0, %v1612
        %v1614 = vpop.f32.mrf.mxu0
        %v1615 = vpop.f32.mrf.mxu0
        %v1616 = vadd.f32 0.0, %v1615
        %v1617 = vpop.f32.mrf.mxu0
        %1618 = vmatprep.mubr.bf16.mxu0 0
        %1619 = vmatmul.mubr.bf16.gmra.mxu0 %v1505
        %v1620 = vpop.f32.mrf.mxu0
        %v1621 = vadd.f32 0.0, %v1620
        %v1622 = vpop.f32.mrf.mxu0
        %v1623 = vpop.f32.mrf.mxu0
        %v1624 = vadd.f32 0.0, %v1623
        %v1625 = vpop.f32.mrf.mxu0
        %1626 = vmatprep.mubr.bf16.mxu0 0
        %1627 = vmatmul.mubr.bf16.gmra.mxu0 %v1506
        %v1628 = vpop.f32.mrf.mxu0
        %v1629 = vadd.f32 0.0, %v1628
        %v1630 = vpop.f32.mrf.mxu0
        %v1631 = vpop.f32.mrf.mxu0
        %v1632 = vadd.f32 0.0, %v1631
        %v1633 = vpop.f32.mrf.mxu0
        %1634 = vmatprep.mubr.bf16.mxu0 0
        %1635 = vmatmul.mubr.bf16.gmra.mxu0 %v1507
        %v1636 = vpop.f32.mrf.mxu0
        %v1637 = vadd.f32 0.0, %v1636
        %v1638 = vpop.f32.mrf.mxu0
        %v1639 = vpop.f32.mrf.mxu0
        %v1640 = vadd.f32 0.0, %v1639
        %v1641 = vpop.f32.mrf.mxu0
        %1642 = vmatprep.mubr.bf16.mxu0 0
        %1643 = vmatmul.mubr.bf16.gmra.mxu0 %v1508
        %v1644 = vpop.f32.mrf.mxu0
        %v1645 = vadd.f32 0.0, %v1644
        %v1646 = vpop.f32.mrf.mxu0
        %v1647 = vpop.f32.mrf.mxu0
        %v1648 = vadd.f32 0.0, %v1647
        %v1649 = vpop.f32.mrf.mxu0
        %1650 = vmatprep.mubr.bf16.mxu0 0
        %1651 = vmatmul.mubr.bf16.gmra.mxu0 %v1509
        %v1652 = vpop.f32.mrf.mxu0
        %v1653 = vadd.f32 0.0, %v1652
        %v1654 = vpop.f32.mrf.mxu0
        %v1655 = vpop.f32.mrf.mxu0
        %v1656 = vadd.f32 0.0, %v1655
        %v1657 = vpop.f32.mrf.mxu0
        %1658 = vmatprep.mubr.bf16.mxu0 0
        %1659 = vmatmul.mubr.bf16.gmra.mxu0 %v1510
        %v1660 = vpop.f32.mrf.mxu0
        %v1661 = vadd.f32 0.0, %v1660
        %v1662 = vpop.f32.mrf.mxu0
        %v1663 = vpop.f32.mrf.mxu0
        %v1664 = vadd.f32 0.0, %v1663
        %v1665 = vpop.f32.mrf.mxu0
        %1666 = vmatprep.mubr.bf16.mxu0 0
        %1667 = vmatmul.mubr.bf16.gmra.mxu0 %v1511
        %v1668 = vpop.f32.mrf.mxu0
        %v1669 = vadd.f32 0.0, %v1668
        %v1670 = vpop.f32.mrf.mxu0
        %v1671 = vpop.f32.mrf.mxu0
        %v1672 = vadd.f32 0.0, %v1671
        %v1673 = vpop.f32.mrf.mxu0
        %1674 = vmatprep.mubr.bf16.mxu0 0
        %1675 = vmatmul.mubr.bf16.gmra.mxu0 %v1512
        %v1676 = vpop.f32.mrf.mxu0
        %v1677 = vadd.f32 0.0, %v1676
        %v1678 = vpop.f32.mrf.mxu0
        %v1679 = vpop.f32.mrf.mxu0
        %v1680 = vadd.f32 0.0, %v1679
        %v1681 = vpop.f32.mrf.mxu0
        %1682 = vmatprep.mubr.bf16.mxu0 0
        %1683 = vmatmul.mubr.bf16.gmra.mxu0 %v1513
        %v1684 = vpop.f32.mrf.mxu0
        %v1685 = vadd.f32 0.0, %v1684
        %v1686 = vpop.f32.mrf.mxu0
        %v1687 = vpop.f32.mrf.mxu0
        %v1688 = vadd.f32 0.0, %v1687
        %v1689 = vpop.f32.mrf.mxu0
        %1690 = vdwg.mxu0
        %v1691 = vmax.f32 %v1369, %v1565
        %v1692 = vmax.f32 %v1370, %v1568
        %v1693 = vmax.f32 %v1371, %v1573
        %v1694 = vmax.f32 %v1372, %v1576
        %v1695 = vmax.f32 %v1373, %v1581
        %v1696 = vmax.f32 %v1374, %v1584
        %v1697 = vmax.f32 %v1375, %v1589
        %v1698 = vmax.f32 %v1376, %v1592
        %v1699 = vmax.f32 %v1377, %v1597
        %v1700 = vmax.f32 %v1378, %v1600
        %v1701 = vmax.f32 %v1379, %v1605
        %v1702 = vmax.f32 %v1380, %v1608
        %v1703 = vmax.f32 %v1381, %v1613
        %v1704 = vmax.f32 %v1382, %v1616
        %v1705 = vmax.f32 %v1383, %v1621
        %v1706 = vmax.f32 %v1384, %v1624
        %v1707 = vmax.f32 %v1385, %v1629
        %v1708 = vmax.f32 %v1386, %v1632
        %v1709 = vmax.f32 %v1387, %v1637
        %v1710 = vmax.f32 %v1388, %v1640
        %v1711 = vmax.f32 %v1389, %v1645
        %v1712 = vmax.f32 %v1390, %v1648
        %v1713 = vmax.f32 %v1391, %v1653
        %v1714 = vmax.f32 %v1392, %v1656
        %v1715 = vmax.f32 %v1393, %v1661
        %v1716 = vmax.f32 %v1394, %v1664
        %v1717 = vmax.f32 %v1395, %v1669
        %v1718 = vmax.f32 %v1396, %v1672
        %v1719 = vmax.f32 %v1397, %v1677
        %v1720 = vmax.f32 %v1398, %v1680
        %v1721 = vmax.f32 %v1399, %v1685
        %v1722 = vmax.f32 %v1400, %v1688
        %s1723 = scalar_lea.vmem %s697, 384 [#allocation2]
        %v1724 = vld [vmem:[%s1723] sm:$0xf]
        %v1725 = vld [vmem:[%s1723 + $0x4] sm:$0xf]
        %v1726 = vld [vmem:[%s1723 + $0x8] sm:$0xf]
        %v1727 = vld [vmem:[%s1723 + $0xc] sm:$0xf]
        %v1728 = vld [vmem:[%s1723 + $0x10] sm:$0xf]
        %v1729 = vld [vmem:[%s1723 + $0x14] sm:$0xf]
        %v1730 = vld [vmem:[%s1723 + $0x18] sm:$0xf]
        %v1731 = vld [vmem:[%s1723 + $0x1c] sm:$0xf]
        %v1732 = vld [vmem:[%s1723 + $0x20] sm:$0xf]
        %v1733 = vld [vmem:[%s1723 + $0x24] sm:$0xf]
        %v1734 = vld [vmem:[%s1723 + $0x28] sm:$0xf]
        %v1735 = vld [vmem:[%s1723 + $0x2c] sm:$0xf]
        %v1736 = vld [vmem:[%s1723 + $0x30] sm:$0xf]
        %v1737 = vld [vmem:[%s1723 + $0x34] sm:$0xf]
        %v1738 = vld [vmem:[%s1723 + $0x38] sm:$0xf]
        %v1739 = vld [vmem:[%s1723 + $0x3c] sm:$0xf]
        %v1740 = vld [vmem:[%s1723 + $0x40] sm:$0xf]
        %v1741 = vld [vmem:[%s1723 + $0x44] sm:$0xf]
        %v1742 = vld [vmem:[%s1723 + $0x48] sm:$0xf]
        %v1743 = vld [vmem:[%s1723 + $0x4c] sm:$0xf]
        %v1744 = vld [vmem:[%s1723 + $0x50] sm:$0xf]
        %v1745 = vld [vmem:[%s1723 + $0x54] sm:$0xf]
        %v1746 = vld [vmem:[%s1723 + $0x58] sm:$0xf]
        %v1747 = vld [vmem:[%s1723 + $0x5c] sm:$0xf]
        %v1748 = vld [vmem:[%s1723 + $0x60] sm:$0xf]
        %v1749 = vld [vmem:[%s1723 + $0x64] sm:$0xf]
        %v1750 = vld [vmem:[%s1723 + $0x68] sm:$0xf]
        %v1751 = vld [vmem:[%s1723 + $0x6c] sm:$0xf]
        %v1752 = vld [vmem:[%s1723 + $0x70] sm:$0xf]
        %v1753 = vld [vmem:[%s1723 + $0x74] sm:$0xf]
        %v1754 = vld [vmem:[%s1723 + $0x78] sm:$0xf]
        %v1755 = vld [vmem:[%s1723 + $0x7c] sm:$0xf]
        %v1788 = vunpack.c.l.b16 %v1724
        %v1789 = vunpack.c.l.b16 %v1725
        %v1790 = vunpack.c.l.b16 %v1726
        %v1791 = vunpack.c.l.b16 %v1727
        %v1792 = vunpack.c.l.b16 %v1728
        %v1793 = vunpack.c.l.b16 %v1729
        %v1794 = vunpack.c.l.b16 %v1730
        %v1795 = vunpack.c.l.b16 %v1731
        %v1796 = vunpack.c.l.b16 %v1732
        %v1797 = vunpack.c.l.b16 %v1733
        %v1798 = vunpack.c.l.b16 %v1734
        %v1799 = vunpack.c.l.b16 %v1735
        %v1800 = vunpack.c.l.b16 %v1736
        %v1801 = vunpack.c.l.b16 %v1737
        %v1802 = vunpack.c.l.b16 %v1738
        %v1803 = vunpack.c.l.b16 %v1739
        %v1804 = vunpack.c.l.b16 %v1740
        %v1805 = vunpack.c.l.b16 %v1741
        %v1806 = vunpack.c.l.b16 %v1742
        %v1807 = vunpack.c.l.b16 %v1743
        %v1808 = vunpack.c.l.b16 %v1744
        %v1809 = vunpack.c.l.b16 %v1745
        %v1810 = vunpack.c.l.b16 %v1746
        %v1811 = vunpack.c.l.b16 %v1747
        %v1812 = vunpack.c.l.b16 %v1748
        %v1813 = vunpack.c.l.b16 %v1749
        %v1814 = vunpack.c.l.b16 %v1750
        %v1815 = vunpack.c.l.b16 %v1751
        %v1816 = vunpack.c.l.b16 %v1752
        %v1817 = vunpack.c.l.b16 %v1753
        %v1818 = vunpack.c.l.b16 %v1754
        %v1819 = vunpack.c.l.b16 %v1755
        %v1820 = vpack.c.b16 %v1789, %v1788
        %v1821 = vpack.c.b16 %v1791, %v1790
        %v1822 = vpack.c.b16 %v1793, %v1792
        %v1823 = vpack.c.b16 %v1795, %v1794
        %v1824 = vpack.c.b16 %v1797, %v1796
        %v1825 = vpack.c.b16 %v1799, %v1798
        %v1826 = vpack.c.b16 %v1801, %v1800
        %v1827 = vpack.c.b16 %v1803, %v1802
        %v1828 = vpack.c.b16 %v1805, %v1804
        %v1829 = vpack.c.b16 %v1807, %v1806
        %v1830 = vpack.c.b16 %v1809, %v1808
        %v1831 = vpack.c.b16 %v1811, %v1810
        %v1832 = vpack.c.b16 %v1813, %v1812
        %v1833 = vpack.c.b16 %v1815, %v1814
        %v1834 = vpack.c.b16 %v1817, %v1816
        %v1835 = vpack.c.b16 %v1819, %v1818
        %1852 = vmatprep.subr.bf16.mxu0 0
        %1853 = vmatpush1.bf16.msra.mxu0 %v909
        %1854 = vmatprep.subr.bf16.mxu0 0
        %1855 = vmatpush1.bf16.msra.mxu0 %v908
        %1856 = vmatprep.subr.bf16.mxu0 0
        %1857 = vmatpush1.bf16.msra.mxu0 %v907
        %1858 = vmatprep.subr.bf16.mxu0 0
        %1859 = vmatpush1.bf16.msra.mxu0 %v906
        %1860 = vmatprep.subr.bf16.mxu0 0
        %1861 = vmatpush1.bf16.msra.mxu0 %v905
        %1862 = vmatprep.subr.bf16.mxu0 0
        %1863 = vmatpush1.bf16.msra.mxu0 %v904
        %1864 = vmatprep.subr.bf16.mxu0 0
        %1865 = vmatpush1.bf16.msra.mxu0 %v903
        %1866 = vmatprep.subr.bf16.mxu0 0
        %1867 = vmatpush1.bf16.msra.mxu0 %v902
        %1868 = vmatprep.subr.bf16.mxu0 0
        %1869 = vmatpush2.bf16.msra.mxu0 0
        %1870 = vmatprep.subr.bf16.mxu0 0
        %1871 = vmatpush2.bf16.msra.mxu0 0
        %1872 = vmatprep.subr.bf16.mxu0 0
        %1873 = vmatpush2.bf16.msra.mxu0 0
        %1874 = vmatprep.subr.bf16.mxu0 0
        %1875 = vmatpush2.bf16.msra.mxu0 0
        %1876 = vmatprep.subr.bf16.mxu0 0
        %1877 = vmatpush2.bf16.msra.mxu0 0
        %1878 = vmatprep.subr.bf16.mxu0 0
        %1879 = vmatpush2.bf16.msra.mxu0 0
        %1880 = vmatprep.subr.bf16.mxu0 0
        %1881 = vmatpush2.bf16.msra.mxu0 0
        %1882 = vmatprep.subr.bf16.mxu0 0
        %1883 = vmatpush2.bf16.msra.mxu0 0
        %1884 = vmatprep.mubr.bf16.mxu0 0
        %1885 = vmatmul.mubr.bf16.gmra.mxu0 %v1820
        %v1886 = vpop.f32.mrf.mxu0
        %v1887 = vadd.f32 0.0, %v1886
        %v1888 = vpop.f32.mrf.mxu0
        %v1889 = vpop.f32.mrf.mxu0
        %v1890 = vadd.f32 0.0, %v1889
        %v1891 = vpop.f32.mrf.mxu0
        %1892 = vmatprep.mubr.bf16.mxu0 0
        %1893 = vmatmul.mubr.bf16.gmra.mxu0 %v1821
        %v1894 = vpop.f32.mrf.mxu0
        %v1895 = vadd.f32 0.0, %v1894
        %v1896 = vpop.f32.mrf.mxu0
        %v1897 = vpop.f32.mrf.mxu0
        %v1898 = vadd.f32 0.0, %v1897
        %v1899 = vpop.f32.mrf.mxu0
        %1900 = vmatprep.mubr.bf16.mxu0 0
        %1901 = vmatmul.mubr.bf16.gmra.mxu0 %v1822
        %v1902 = vpop.f32.mrf.mxu0
        %v1903 = vadd.f32 0.0, %v1902
        %v1904 = vpop.f32.mrf.mxu0
        %v1905 = vpop.f32.mrf.mxu0
        %v1906 = vadd.f32 0.0, %v1905
        %v1907 = vpop.f32.mrf.mxu0
        %1908 = vmatprep.mubr.bf16.mxu0 0
        %1909 = vmatmul.mubr.bf16.gmra.mxu0 %v1823
        %v1910 = vpop.f32.mrf.mxu0
        %v1911 = vadd.f32 0.0, %v1910
        %v1912 = vpop.f32.mrf.mxu0
        %v1913 = vpop.f32.mrf.mxu0
        %v1914 = vadd.f32 0.0, %v1913
        %v1915 = vpop.f32.mrf.mxu0
        %1916 = vmatprep.mubr.bf16.mxu0 0
        %1917 = vmatmul.mubr.bf16.gmra.mxu0 %v1824
        %v1918 = vpop.f32.mrf.mxu0
        %v1919 = vadd.f32 0.0, %v1918
        %v1920 = vpop.f32.mrf.mxu0
        %v1921 = vpop.f32.mrf.mxu0
        %v1922 = vadd.f32 0.0, %v1921
        %v1923 = vpop.f32.mrf.mxu0
        %1924 = vmatprep.mubr.bf16.mxu0 0
        %1925 = vmatmul.mubr.bf16.gmra.mxu0 %v1825
        %v1926 = vpop.f32.mrf.mxu0
        %v1927 = vadd.f32 0.0, %v1926
        %v1928 = vpop.f32.mrf.mxu0
        %v1929 = vpop.f32.mrf.mxu0
        %v1930 = vadd.f32 0.0, %v1929
        %v1931 = vpop.f32.mrf.mxu0
        %1932 = vmatprep.mubr.bf16.mxu0 0
        %1933 = vmatmul.mubr.bf16.gmra.mxu0 %v1826
        %v1934 = vpop.f32.mrf.mxu0
        %v1935 = vadd.f32 0.0, %v1934
        %v1936 = vpop.f32.mrf.mxu0
        %v1937 = vpop.f32.mrf.mxu0
        %v1938 = vadd.f32 0.0, %v1937
        %v1939 = vpop.f32.mrf.mxu0
        %1940 = vmatprep.mubr.bf16.mxu0 0
        %1941 = vmatmul.mubr.bf16.gmra.mxu0 %v1827
        %v1942 = vpop.f32.mrf.mxu0
        %v1943 = vadd.f32 0.0, %v1942
        %v1944 = vpop.f32.mrf.mxu0
        %v1945 = vpop.f32.mrf.mxu0
        %v1946 = vadd.f32 0.0, %v1945
        %v1947 = vpop.f32.mrf.mxu0
        %1948 = vmatprep.mubr.bf16.mxu0 0
        %1949 = vmatmul.mubr.bf16.gmra.mxu0 %v1828
        %v1950 = vpop.f32.mrf.mxu0
        %v1951 = vadd.f32 0.0, %v1950
        %v1952 = vpop.f32.mrf.mxu0
        %v1953 = vpop.f32.mrf.mxu0
        %v1954 = vadd.f32 0.0, %v1953
        %v1955 = vpop.f32.mrf.mxu0
        %1956 = vmatprep.mubr.bf16.mxu0 0
        %1957 = vmatmul.mubr.bf16.gmra.mxu0 %v1829
        %v1958 = vpop.f32.mrf.mxu0
        %v1959 = vadd.f32 0.0, %v1958
        %v1960 = vpop.f32.mrf.mxu0
        %v1961 = vpop.f32.mrf.mxu0
        %v1962 = vadd.f32 0.0, %v1961
        %v1963 = vpop.f32.mrf.mxu0
        %1964 = vmatprep.mubr.bf16.mxu0 0
        %1965 = vmatmul.mubr.bf16.gmra.mxu0 %v1830
        %v1966 = vpop.f32.mrf.mxu0
        %v1967 = vadd.f32 0.0, %v1966
        %v1968 = vpop.f32.mrf.mxu0
        %v1969 = vpop.f32.mrf.mxu0
        %v1970 = vadd.f32 0.0, %v1969
        %v1971 = vpop.f32.mrf.mxu0
        %1972 = vmatprep.mubr.bf16.mxu0 0
        %1973 = vmatmul.mubr.bf16.gmra.mxu0 %v1831
        %v1974 = vpop.f32.mrf.mxu0
        %v1975 = vadd.f32 0.0, %v1974
        %v1976 = vpop.f32.mrf.mxu0
        %v1977 = vpop.f32.mrf.mxu0
        %v1978 = vadd.f32 0.0, %v1977
        %v1979 = vpop.f32.mrf.mxu0
        %1980 = vmatprep.mubr.bf16.mxu0 0
        %1981 = vmatmul.mubr.bf16.gmra.mxu0 %v1832
        %v1982 = vpop.f32.mrf.mxu0
        %v1983 = vadd.f32 0.0, %v1982
        %v1984 = vpop.f32.mrf.mxu0
        %v1985 = vpop.f32.mrf.mxu0
        %v1986 = vadd.f32 0.0, %v1985
        %v1987 = vpop.f32.mrf.mxu0
        %1988 = vmatprep.mubr.bf16.mxu0 0
        %1989 = vmatmul.mubr.bf16.gmra.mxu0 %v1833
        %v1990 = vpop.f32.mrf.mxu0
        %v1991 = vadd.f32 0.0, %v1990
        %v1992 = vpop.f32.mrf.mxu0
        %v1993 = vpop.f32.mrf.mxu0
        %v1994 = vadd.f32 0.0, %v1993
        %v1995 = vpop.f32.mrf.mxu0
        %1996 = vmatprep.mubr.bf16.mxu0 0
        %1997 = vmatmul.mubr.bf16.gmra.mxu0 %v1834
        %v1998 = vpop.f32.mrf.mxu0
        %v1999 = vadd.f32 0.0, %v1998
        %v2000 = vpop.f32.mrf.mxu0
        %v2001 = vpop.f32.mrf.mxu0
        %v2002 = vadd.f32 0.0, %v2001
        %v2003 = vpop.f32.mrf.mxu0
        %2004 = vmatprep.mubr.bf16.mxu0 0
        %2005 = vmatmul.mubr.bf16.gmra.mxu0 %v1835
        %v2006 = vpop.f32.mrf.mxu0
        %v2007 = vadd.f32 0.0, %v2006
        %v2008 = vpop.f32.mrf.mxu0
        %v2009 = vpop.f32.mrf.mxu0
        %v2010 = vadd.f32 0.0, %v2009
        %v2011 = vpop.f32.mrf.mxu0
        %2012 = vdwg.mxu0
        %v2013 = vmax.f32 %v1691, %v1887
        %v2014 = vmax.f32 %v1692, %v1890
        %v2015 = vmax.f32 %v1693, %v1895
        %v2016 = vmax.f32 %v1694, %v1898
        %v2017 = vmax.f32 %v1695, %v1903
        %v2018 = vmax.f32 %v1696, %v1906
        %v2019 = vmax.f32 %v1697, %v1911
        %v2020 = vmax.f32 %v1698, %v1914
        %v2021 = vmax.f32 %v1699, %v1919
        %v2022 = vmax.f32 %v1700, %v1922
        %v2023 = vmax.f32 %v1701, %v1927
        %v2024 = vmax.f32 %v1702, %v1930
        %v2025 = vmax.f32 %v1703, %v1935
        %v2026 = vmax.f32 %v1704, %v1938
        %v2027 = vmax.f32 %v1705, %v1943
        %v2028 = vmax.f32 %v1706, %v1946
        %v2029 = vmax.f32 %v1707, %v1951
        %v2030 = vmax.f32 %v1708, %v1954
        %v2031 = vmax.f32 %v1709, %v1959
        %v2032 = vmax.f32 %v1710, %v1962
        %v2033 = vmax.f32 %v1711, %v1967
        %v2034 = vmax.f32 %v1712, %v1970
        %v2035 = vmax.f32 %v1713, %v1975
        %v2036 = vmax.f32 %v1714, %v1978
        %v2037 = vmax.f32 %v1715, %v1983
        %v2038 = vmax.f32 %v1716, %v1986
        %v2039 = vmax.f32 %v1717, %v1991
        %v2040 = vmax.f32 %v1718, %v1994
        %v2041 = vmax.f32 %v1719, %v1999
        %v2042 = vmax.f32 %v1720, %v2002
        %v2043 = vmax.f32 %v1721, %v2007
        %v2044 = vmax.f32 %v1722, %v2010
        %v2045 = vld [vmem:[%s2] sm:$0x1]
        %v2047 = vlaneseq
        %v2048 = vshrl.u32 %v2047, 7
        %v2049 = vsub.s32 0, %v2048
        %v2050 = vrot.slane %v2045, %v2049
        %v2052 = vadd.f32 %v2013, %v2050
        %v2053 = vadd.f32 %v2014, %v2050
        %v2054 = vadd.f32 %v2015, %v2050
        %v2055 = vadd.f32 %v2016, %v2050
        %v2056 = vadd.f32 %v2017, %v2050
        %v2057 = vadd.f32 %v2018, %v2050
        %v2058 = vadd.f32 %v2019, %v2050
        %v2059 = vadd.f32 %v2020, %v2050
        %v2060 = vadd.f32 %v2021, %v2050
        %v2061 = vadd.f32 %v2022, %v2050
        %v2062 = vadd.f32 %v2023, %v2050
        %v2063 = vadd.f32 %v2024, %v2050
        %v2064 = vadd.f32 %v2025, %v2050
        %v2065 = vadd.f32 %v2026, %v2050
        %v2066 = vadd.f32 %v2027, %v2050
        %v2067 = vadd.f32 %v2028, %v2050
        %v2068 = vadd.f32 %v2029, %v2050
        %v2069 = vadd.f32 %v2030, %v2050
        %v2070 = vadd.f32 %v2031, %v2050
        %v2071 = vadd.f32 %v2032, %v2050
        %v2072 = vadd.f32 %v2033, %v2050
        %v2073 = vadd.f32 %v2034, %v2050
        %v2074 = vadd.f32 %v2035, %v2050
        %v2075 = vadd.f32 %v2036, %v2050
        %v2076 = vadd.f32 %v2037, %v2050
        %v2077 = vadd.f32 %v2038, %v2050
        %v2078 = vadd.f32 %v2039, %v2050
        %v2079 = vadd.f32 %v2040, %v2050
        %v2080 = vadd.f32 %v2041, %v2050
        %v2081 = vadd.f32 %v2042, %v2050
        %v2082 = vadd.f32 %v2043, %v2050
        %v2083 = vadd.f32 %v2044, %v2050
        %v2084 = vmax.f32 %v2052, 0.0
        %v2085 = vmax.f32 %v2053, 0.0
        %v2086 = vmax.f32 %v2054, 0.0
        %v2087 = vmax.f32 %v2055, 0.0
        %v2088 = vmax.f32 %v2056, 0.0
        %v2089 = vmax.f32 %v2057, 0.0
        %v2090 = vmax.f32 %v2058, 0.0
        %v2091 = vmax.f32 %v2059, 0.0
        %v2092 = vmax.f32 %v2060, 0.0
        %v2093 = vmax.f32 %v2061, 0.0
        %v2094 = vmax.f32 %v2062, 0.0
        %v2095 = vmax.f32 %v2063, 0.0
        %v2096 = vmax.f32 %v2064, 0.0
        %v2097 = vmax.f32 %v2065, 0.0
        %v2098 = vmax.f32 %v2066, 0.0
        %v2099 = vmax.f32 %v2067, 0.0
        %v2100 = vmax.f32 %v2068, 0.0
        %v2101 = vmax.f32 %v2069, 0.0
        %v2102 = vmax.f32 %v2070, 0.0
        %v2103 = vmax.f32 %v2071, 0.0
        %v2104 = vmax.f32 %v2072, 0.0
        %v2105 = vmax.f32 %v2073, 0.0
        %v2106 = vmax.f32 %v2074, 0.0
        %v2107 = vmax.f32 %v2075, 0.0
        %v2108 = vmax.f32 %v2076, 0.0
        %v2109 = vmax.f32 %v2077, 0.0
        %v2110 = vmax.f32 %v2078, 0.0
        %v2111 = vmax.f32 %v2079, 0.0
        %v2112 = vmax.f32 %v2080, 0.0
        %v2113 = vmax.f32 %v2081, 0.0
        %v2114 = vmax.f32 %v2082, 0.0
        %v2115 = vmax.f32 %v2083, 0.0
        %v2116 = vpack.c.bf16 %v2085, %v2084
        %v2117 = vpack.c.bf16 %v2087, %v2086
        %v2118 = vpack.c.bf16 %v2089, %v2088
        %v2119 = vpack.c.bf16 %v2091, %v2090
        %v2120 = vpack.c.bf16 %v2093, %v2092
        %v2121 = vpack.c.bf16 %v2095, %v2094
        %v2122 = vpack.c.bf16 %v2097, %v2096
        %v2123 = vpack.c.bf16 %v2099, %v2098
        %v2124 = vpack.c.bf16 %v2101, %v2100
        %v2125 = vpack.c.bf16 %v2103, %v2102
        %v2126 = vpack.c.bf16 %v2105, %v2104
        %v2127 = vpack.c.bf16 %v2107, %v2106
        %v2128 = vpack.c.bf16 %v2109, %v2108
        %v2129 = vpack.c.bf16 %v2111, %v2110
        %v2130 = vpack.c.bf16 %v2113, %v2112
        %v2131 = vpack.c.bf16 %v2115, %v2114
        %v2148 = vunpack.c.l.b16 %v2116
        %v2149 = vunpack.c.h.b16 %v2116
        %v2150 = vunpack.c.l.b16 %v2117
        %v2151 = vunpack.c.h.b16 %v2117
        %v2152 = vunpack.c.l.b16 %v2118
        %v2153 = vunpack.c.h.b16 %v2118
        %v2154 = vunpack.c.l.b16 %v2119
        %v2155 = vunpack.c.h.b16 %v2119
        %v2156 = vunpack.c.l.b16 %v2120
        %v2157 = vunpack.c.h.b16 %v2120
        %v2158 = vunpack.c.l.b16 %v2121
        %v2159 = vunpack.c.h.b16 %v2121
        %v2160 = vunpack.c.l.b16 %v2122
        %v2161 = vunpack.c.h.b16 %v2122
        %v2162 = vunpack.c.l.b16 %v2123
        %v2163 = vunpack.c.h.b16 %v2123
        %v2164 = vunpack.c.l.b16 %v2124
        %v2165 = vunpack.c.h.b16 %v2124
        %v2166 = vunpack.c.l.b16 %v2125
        %v2167 = vunpack.c.h.b16 %v2125
        %v2168 = vunpack.c.l.b16 %v2126
        %v2169 = vunpack.c.h.b16 %v2126
        %v2170 = vunpack.c.l.b16 %v2127
        %v2171 = vunpack.c.h.b16 %v2127
        %v2172 = vunpack.c.l.b16 %v2128
        %v2173 = vunpack.c.h.b16 %v2128
        %v2174 = vunpack.c.l.b16 %v2129
        %v2175 = vunpack.c.h.b16 %v2129
        %v2176 = vunpack.c.l.b16 %v2130
        %v2177 = vunpack.c.h.b16 %v2130
        %v2178 = vunpack.c.l.b16 %v2131
        %v2179 = vunpack.c.h.b16 %v2131
        %v2180 = vpack.c.b16 %v2148, %v2148
        %v2181 = vpack.c.b16 %v2149, %v2149
        %v2182 = vpack.c.b16 %v2150, %v2150
        %v2183 = vpack.c.b16 %v2151, %v2151
        %v2184 = vpack.c.b16 %v2152, %v2152
        %v2185 = vpack.c.b16 %v2153, %v2153
        %v2186 = vpack.c.b16 %v2154, %v2154
        %v2187 = vpack.c.b16 %v2155, %v2155
        %v2188 = vpack.c.b16 %v2156, %v2156
        %v2189 = vpack.c.b16 %v2157, %v2157
        %v2190 = vpack.c.b16 %v2158, %v2158
        %v2191 = vpack.c.b16 %v2159, %v2159
        %v2192 = vpack.c.b16 %v2160, %v2160
        %v2193 = vpack.c.b16 %v2161, %v2161
        %v2194 = vpack.c.b16 %v2162, %v2162
        %v2195 = vpack.c.b16 %v2163, %v2163
        %v2196 = vpack.c.b16 %v2164, %v2164
        %v2197 = vpack.c.b16 %v2165, %v2165
        %v2198 = vpack.c.b16 %v2166, %v2166
        %v2199 = vpack.c.b16 %v2167, %v2167
        %v2200 = vpack.c.b16 %v2168, %v2168
        %v2201 = vpack.c.b16 %v2169, %v2169
        %v2202 = vpack.c.b16 %v2170, %v2170
        %v2203 = vpack.c.b16 %v2171, %v2171
        %v2204 = vpack.c.b16 %v2172, %v2172
        %v2205 = vpack.c.b16 %v2173, %v2173
        %v2206 = vpack.c.b16 %v2174, %v2174
        %v2207 = vpack.c.b16 %v2175, %v2175
        %v2208 = vpack.c.b16 %v2176, %v2176
        %v2209 = vpack.c.b16 %v2177, %v2177
        %v2210 = vpack.c.b16 %v2178, %v2178
        %v2211 = vpack.c.b16 %v2179, %v2179
        %2244 = vst [vmem:[%s723] sm:$0xf] %v2180
        %2245 = vst [vmem:[%s723 + $0x4] sm:$0xf] %v2181
        %2246 = vst [vmem:[%s723 + $0x8] sm:$0xf] %v2182
        %2247 = vst [vmem:[%s723 + $0xc] sm:$0xf] %v2183
        %2248 = vst [vmem:[%s723 + $0x10] sm:$0xf] %v2184
        %2249 = vst [vmem:[%s723 + $0x14] sm:$0xf] %v2185
        %2250 = vst [vmem:[%s723 + $0x18] sm:$0xf] %v2186
        %2251 = vst [vmem:[%s723 + $0x1c] sm:$0xf] %v2187
        %2252 = vst [vmem:[%s723 + $0x20] sm:$0xf] %v2188
        %2253 = vst [vmem:[%s723 + $0x24] sm:$0xf] %v2189
        %2254 = vst [vmem:[%s723 + $0x28] sm:$0xf] %v2190
        %2255 = vst [vmem:[%s723 + $0x2c] sm:$0xf] %v2191
        %2256 = vst [vmem:[%s723 + $0x30] sm:$0xf] %v2192
        %2257 = vst [vmem:[%s723 + $0x34] sm:$0xf] %v2193
        %2258 = vst [vmem:[%s723 + $0x38] sm:$0xf] %v2194
        %2259 = vst [vmem:[%s723 + $0x3c] sm:$0xf] %v2195
        %2260 = vst [vmem:[%s723 + $0x40] sm:$0xf] %v2196
        %2261 = vst [vmem:[%s723 + $0x44] sm:$0xf] %v2197
        %2262 = vst [vmem:[%s723 + $0x48] sm:$0xf] %v2198
        %2263 = vst [vmem:[%s723 + $0x4c] sm:$0xf] %v2199
        %2264 = vst [vmem:[%s723 + $0x50] sm:$0xf] %v2200
        %2265 = vst [vmem:[%s723 + $0x54] sm:$0xf] %v2201
        %2266 = vst [vmem:[%s723 + $0x58] sm:$0xf] %v2202
        %2267 = vst [vmem:[%s723 + $0x5c] sm:$0xf] %v2203
        %2268 = vst [vmem:[%s723 + $0x60] sm:$0xf] %v2204
        %2269 = vst [vmem:[%s723 + $0x64] sm:$0xf] %v2205
        %2270 = vst [vmem:[%s723 + $0x68] sm:$0xf] %v2206
        %2271 = vst [vmem:[%s723 + $0x6c] sm:$0xf] %v2207
        %2272 = vst [vmem:[%s723 + $0x70] sm:$0xf] %v2208
        %2273 = vst [vmem:[%s723 + $0x74] sm:$0xf] %v2209
        %2274 = vst [vmem:[%s723 + $0x78] sm:$0xf] %v2210
        %2275 = vst [vmem:[%s723 + $0x7c] sm:$0xf] %v2211
        %s2276 = smul.u32 32, %s14
        %p2277 = scmp.lt.s32.totalorder %s2276, 63
        %s2278 = scalar_select %p2277, %s2276, 63
        %s2279 = smul.addr %s2278, 4
        %s2280 = scalar_lea.vmem %s3, %s2279
        // Predicated region
        $region74: #{net_forward.3} parent=68 // pred_check
          %p2281 = pneg %p100
        $region75: #{net_forward.3} parent=68 // pred_check_branch
          %2283 = sbr.rel (%p2281) target = $region77
        $region76: #{net_forward.3} parent=68 // pred_region
          %s2284 = smul.u32 32, %s14
        $region77: #{net_forward.3} parent=68 // pred_fallthru
          _
      $region69: #{net_forward.3} parent=5 // pred_fallthru
        _
      %p2285 = scmp.le.s32.totalorder 2, %s9
      // Predicated region
      $region78: #{net_forward.3} parent=5 // pred_check
        %p2286 = pneg %p2285
      $region79: #{net_forward.3} parent=5 // pred_check_branch
        %2288 = sbr.rel (%p2286) target = $region81
      $region80: #{net_forward.3} parent=5 // pred_region
        %s2289 = ssub.s32 %s9, 2
        // Predicated region
        $region82: #{net_forward.3} parent=80 // pred_check
          %p2290 = pneg %p106
        $region83: #{net_forward.3} parent=80 // pred_check_branch
          %2292 = sbr.rel (%p2290) target = $region85
        $region84: #{net_forward.3} parent=80 // pred_region
          %s2293 = smul.u32 32, %s15
          %p2294 = scmp.lt.s32.totalorder %s2293, 63
          %s2295 = scalar_select %p2294, %s2293, 63
          %s2296 = smul.addr %s2295, 4
          %s2297 = scalar_lea.vmem %s3, %s2296
        $region85: #{net_forward.3} parent=80 // pred_fallthru
          _
      $region81: #{net_forward.3} parent=5 // pred_fallthru
        _
    $region6: #{net_forward.3} parent=1 // loop_footer
      %s13 = sadd.s32 1, %s9
    $region7: #{net_forward.3} parent=1 // loop_footer_branch
      %8 = sbr.rel target = $region3
    $region8: #{net_forward.3} parent=1 // loop_exit
      _

// kernel: net_forward.4
$region0: #{net_forward.4}
  #allocation0 [shape = 'u32[]', space=smem, size = 0x4, offset = 0x4, fixed_abs, tag = 'smem constant byte address 0x4 - core index']
  #allocation1 [shape = 'u32[144,128]{1,0:T(1,128)}', space=vmem, size = 0x12000, scoped, tag = 'internal scratch']
  %s0 = inlined_call_operand.vmem [shape: bf16[4,72,640], index: 0, kind: input, shape index: {}]
  %s1 = inlined_call_operand.vmem [shape: bf16[640,128], index: 1, kind: input, shape index: {}]
  %s2 = inlined_call_operand.vmem [shape: f32[1,128], index: 2, kind: input, shape index: {}]
  %s3 = inlined_call_operand.vmem [shape: bf16[72,128], index: 3, kind: output, shape index: {}]
  %s4 = sld [smem:[#allocation0]]
  $region22: #{net_forward.4} parent=0
    _
  %s6 = ssub.s32 1, %s4
  %s7 = scalar_select 0, %s6, %s4
  // Predicated region
  $region2: #{net_forward.4} parent=0 // pred_check
    _
  $region3: #{net_forward.4} parent=0 // pred_check_branch
    %9 = sbr.rel (0) target = $region5
  $region4: #{net_forward.4} parent=0 // pred_region
    _
  $region5: #{net_forward.4} parent=0 // pred_fallthru
    _
  // Predicated region
  $region6: #{net_forward.4} parent=0 // pred_check
    _
  $region7: #{net_forward.4} parent=0 // pred_check_branch
    %11 = sbr.rel (0) target = $region9
  $region8: #{net_forward.4} parent=0 // pred_region
    _
  $region9: #{net_forward.4} parent=0 // pred_fallthru
    _
  // Predicated region
  $region10: #{net_forward.4} parent=0 // pred_check
    _
  $region11: #{net_forward.4} parent=0 // pred_check_branch
    %13 = sbr.rel (0) target = $region13
  $region12: #{net_forward.4} parent=0 // pred_region
    _
  $region13: #{net_forward.4} parent=0 // pred_fallthru
    _
  %v15 = vld [vmem:[%s1] sm:$0xf]
  %v16 = vld [vmem:[%s1 + $0x4] sm:$0xf]
  %v17 = vld [vmem:[%s1 + $0x8] sm:$0xf]
  %v18 = vld [vmem:[%s1 + $0xc] sm:$0xf]
  %v19 = vld [vmem:[%s1 + $0x10] sm:$0xf]
  %v20 = vld [vmem:[%s1 + $0x14] sm:$0xf]
  %v21 = vld [vmem:[%s1 + $0x18] sm:$0xf]
  %v22 = vld [vmem:[%s1 + $0x1c] sm:$0xf]
  %v23 = vld [vmem:[%s1 + $0x20] sm:$0xf]
  %v24 = vld [vmem:[%s1 + $0x24] sm:$0xf]
  %v25 = vld [vmem:[%s1 + $0x28] sm:$0xf]
  %v26 = vld [vmem:[%s1 + $0x2c] sm:$0xf]
  %v27 = vld [vmem:[%s1 + $0x30] sm:$0xf]
  %v28 = vld [vmem:[%s1 + $0x34] sm:$0xf]
  %v29 = vld [vmem:[%s1 + $0x38] sm:$0xf]
  %v30 = vld [vmem:[%s1 + $0x3c] sm:$0xf]
  %v31 = vld [vmem:[%s1 + $0x40] sm:$0xf]
  %v32 = vld [vmem:[%s1 + $0x44] sm:$0xf]
  %v33 = vld [vmem:[%s1 + $0x48] sm:$0xf]
  %v34 = vld [vmem:[%s1 + $0x4c] sm:$0xf]
  %v35 = vld [vmem:[%s1 + $0x50] sm:$0xf]
  %v36 = vld [vmem:[%s1 + $0x54] sm:$0xf]
  %v37 = vld [vmem:[%s1 + $0x58] sm:$0xf]
  %v38 = vld [vmem:[%s1 + $0x5c] sm:$0xf]
  %v39 = vld [vmem:[%s1 + $0x60] sm:$0xf]
  %v40 = vld [vmem:[%s1 + $0x64] sm:$0xf]
  %v41 = vld [vmem:[%s1 + $0x68] sm:$0xf]
  %v42 = vld [vmem:[%s1 + $0x6c] sm:$0xf]
  %v43 = vld [vmem:[%s1 + $0x70] sm:$0xf]
  %v44 = vld [vmem:[%s1 + $0x74] sm:$0xf]
  %v45 = vld [vmem:[%s1 + $0x78] sm:$0xf]
  %v46 = vld [vmem:[%s1 + $0x7c] sm:$0xf]
  %v47 = vld [vmem:[%s1 + $0x80] sm:$0xf]
  %v48 = vld [vmem:[%s1 + $0x84] sm:$0xf]
  %v49 = vld [vmem:[%s1 + $0x88] sm:$0xf]
  %v50 = vld [vmem:[%s1 + $0x8c] sm:$0xf]
  %v51 = vld [vmem:[%s1 + $0x90] sm:$0xf]
  %v52 = vld [vmem:[%s1 + $0x94] sm:$0xf]
  %v53 = vld [vmem:[%s1 + $0x98] sm:$0xf]
  %v54 = vld [vmem:[%s1 + $0x9c] sm:$0xf]
  %v55 = vld [vmem:[%s1 + $0xa0] sm:$0xf]
  %v56 = vld [vmem:[%s1 + $0xa4] sm:$0xf]
  %v57 = vld [vmem:[%s1 + $0xa8] sm:$0xf]
  %v58 = vld [vmem:[%s1 + $0xac] sm:$0xf]
  %v59 = vld [vmem:[%s1 + $0xb0] sm:$0xf]
  %v60 = vld [vmem:[%s1 + $0xb4] sm:$0xf]
  %v61 = vld [vmem:[%s1 + $0xb8] sm:$0xf]
  %v62 = vld [vmem:[%s1 + $0xbc] sm:$0xf]
  %v63 = vld [vmem:[%s1 + $0xc0] sm:$0xf]
  %v64 = vld [vmem:[%s1 + $0xc4] sm:$0xf]
  %v65 = vld [vmem:[%s1 + $0xc8] sm:$0xf]
  %v66 = vld [vmem:[%s1 + $0xcc] sm:$0xf]
  %v67 = vld [vmem:[%s1 + $0xd0] sm:$0xf]
  %v68 = vld [vmem:[%s1 + $0xd4] sm:$0xf]
  %v69 = vld [vmem:[%s1 + $0xd8] sm:$0xf]
  %v70 = vld [vmem:[%s1 + $0xdc] sm:$0xf]
  %v71 = vld [vmem:[%s1 + $0xe0] sm:$0xf]
  %v72 = vld [vmem:[%s1 + $0xe4] sm:$0xf]
  %v73 = vld [vmem:[%s1 + $0xe8] sm:$0xf]
  %v74 = vld [vmem:[%s1 + $0xec] sm:$0xf]
  %v75 = vld [vmem:[%s1 + $0xf0] sm:$0xf]
  %v76 = vld [vmem:[%s1 + $0xf4] sm:$0xf]
  %v77 = vld [vmem:[%s1 + $0xf8] sm:$0xf]
  %v78 = vld [vmem:[%s1 + $0xfc] sm:$0xf]
  %v79 = vld [vmem:[%s1 + $0x100] sm:$0xf]
  %v80 = vld [vmem:[%s1 + $0x104] sm:$0xf]
  %v81 = vld [vmem:[%s1 + $0x108] sm:$0xf]
  %v82 = vld [vmem:[%s1 + $0x10c] sm:$0xf]
  %v83 = vld [vmem:[%s1 + $0x110] sm:$0xf]
  %v84 = vld [vmem:[%s1 + $0x114] sm:$0xf]
  %v85 = vld [vmem:[%s1 + $0x118] sm:$0xf]
  %v86 = vld [vmem:[%s1 + $0x11c] sm:$0xf]
  %v87 = vld [vmem:[%s1 + $0x120] sm:$0xf]
  %v88 = vld [vmem:[%s1 + $0x124] sm:$0xf]
  %v89 = vld [vmem:[%s1 + $0x128] sm:$0xf]
  %v90 = vld [vmem:[%s1 + $0x12c] sm:$0xf]
  %v91 = vld [vmem:[%s1 + $0x130] sm:$0xf]
  %v92 = vld [vmem:[%s1 + $0x134] sm:$0xf]
  %v93 = vld [vmem:[%s1 + $0x138] sm:$0xf]
  %v94 = vld [vmem:[%s1 + $0x13c] sm:$0xf]
  %v95 = vld [vmem:[%s0] sm:$0xff]
  %v96 = vld [vmem:[%s0 + $0x8] sm:$0xff]
  %v97 = vld [vmem:[%s0 + $0x10] sm:$0xf]
  %v98 = vld [vmem:[%s0 + $0x14] sm:$0xff]
  %v99 = vld [vmem:[%s0 + $0x1c] sm:$0xff]
  %v100 = vld [vmem:[%s0 + $0x24] sm:$0xf]
  %v101 = vld [vmem:[%s0 + $0x28] sm:$0xff]
  %v102 = vld [vmem:[%s0 + $0x30] sm:$0xff]
  %v103 = vld [vmem:[%s0 + $0x38] sm:$0xf]
  %v104 = vld [vmem:[%s0 + $0x3c] sm:$0xff]
  %v105 = vld [vmem:[%s0 + $0x44] sm:$0xff]
  %v106 = vld [vmem:[%s0 + $0x4c] sm:$0xf]
  %v107 = vld [vmem:[%s0 + $0x50] sm:$0xff]
  %v108 = vld [vmem:[%s0 + $0x58] sm:$0xff]
  %v109 = vld [vmem:[%s0 + $0x60] sm:$0xf]
  %v110 = vld [vmem:[%s0 + $0x64] sm:$0xff]
  %v111 = vld [vmem:[%s0 + $0x6c] sm:$0xff]
  %v112 = vld [vmem:[%s0 + $0x74] sm:$0xf]
  %v113 = vld [vmem:[%s0 + $0x78] sm:$0xff]
  %v114 = vld [vmem:[%s0 + $0x80] sm:$0xff]
  %v115 = vld [vmem:[%s0 + $0x88] sm:$0xf]
  %v116 = vld [vmem:[%s0 + $0x8c] sm:$0xff]
  %v117 = vld [vmem:[%s0 + $0x94] sm:$0xff]
  %v118 = vld [vmem:[%s0 + $0x9c] sm:$0xf]
  %v119 = vld [vmem:[%s0 + $0xa0] sm:$0xff]
  %v120 = vld [vmem:[%s0 + $0xa8] sm:$0xff]
  %v121 = vld [vmem:[%s0 + $0xb0] sm:$0xf]
  %v149 = vunpack.c.l.b16 %v95
  %v150 = vunpack.c.h.b16 %v95
  %v151 = vunpack.c.l.b16 %v96
  %v152 = vunpack.c.h.b16 %v96
  %v153 = vunpack.c.l.b16 %v97
  %v154 = vunpack.c.l.b16 %v98
  %v155 = vunpack.c.h.b16 %v98
  %v156 = vunpack.c.l.b16 %v99
  %v157 = vunpack.c.h.b16 %v99
  %v158 = vunpack.c.l.b16 %v100
  %v159 = vunpack.c.l.b16 %v101
  %v160 = vunpack.c.h.b16 %v101
  %v161 = vunpack.c.l.b16 %v102
  %v162 = vunpack.c.h.b16 %v102
  %v163 = vunpack.c.l.b16 %v103
  %v164 = vunpack.c.l.b16 %v104
  %v165 = vunpack.c.h.b16 %v104
  %v166 = vunpack.c.l.b16 %v105
  %v167 = vunpack.c.h.b16 %v105
  %v168 = vunpack.c.l.b16 %v106
  %v169 = vunpack.c.l.b16 %v107
  %v170 = vunpack.c.h.b16 %v107
  %v171 = vunpack.c.l.b16 %v108
  %v172 = vunpack.c.h.b16 %v108
  %v173 = vunpack.c.l.b16 %v109
  %v174 = vunpack.c.l.b16 %v110
  %v175 = vunpack.c.h.b16 %v110
  %v176 = vunpack.c.l.b16 %v111
  %v177 = vunpack.c.h.b16 %v111
  %v178 = vunpack.c.l.b16 %v112
  %v179 = vunpack.c.l.b16 %v113
  %v180 = vunpack.c.h.b16 %v113
  %v181 = vunpack.c.l.b16 %v114
  %v182 = vunpack.c.h.b16 %v114
  %v183 = vunpack.c.l.b16 %v115
  %v184 = vunpack.c.l.b16 %v116
  %v185 = vunpack.c.h.b16 %v116
  %v186 = vunpack.c.l.b16 %v117
  %v187 = vunpack.c.h.b16 %v117
  %v188 = vunpack.c.l.b16 %v118
  %v189 = vunpack.c.l.b16 %v119
  %v190 = vunpack.c.h.b16 %v119
  %v191 = vunpack.c.l.b16 %v120
  %v192 = vunpack.c.h.b16 %v120
  %v193 = vunpack.c.l.b16 %v121
  %v194 = vpack.c.b16 %v154, %v149
  %v195 = vpack.c.b16 %v155, %v150
  %v196 = vpack.c.b16 %v156, %v151
  %v197 = vpack.c.b16 %v157, %v152
  %v198 = vpack.c.b16 %v158, %v153
  %v199 = vpack.c.b16 %v164, %v159
  %v200 = vpack.c.b16 %v165, %v160
  %v201 = vpack.c.b16 %v166, %v161
  %v202 = vpack.c.b16 %v167, %v162
  %v203 = vpack.c.b16 %v168, %v163
  %v204 = vpack.c.b16 %v174, %v169
  %v205 = vpack.c.b16 %v175, %v170
  %v206 = vpack.c.b16 %v176, %v171
  %v207 = vpack.c.b16 %v177, %v172
  %v208 = vpack.c.b16 %v178, %v173
  %v209 = vpack.c.b16 %v184, %v179
  %v210 = vpack.c.b16 %v185, %v180
  %v211 = vpack.c.b16 %v186, %v181
  %v212 = vpack.c.b16 %v187, %v182
  %v213 = vpack.c.b16 %v188, %v183
  %v214 = vpack.c.b16 %v189, %v189
  %v215 = vpack.c.b16 %v190, %v190
  %v216 = vpack.c.b16 %v191, %v191
  %v217 = vpack.c.b16 %v192, %v192
  %v218 = vpack.c.b16 %v193, %v193
  %v324 = vunpack.c.l.b16 %v15
  %v325 = vunpack.c.l.b16 %v16
  %v326 = vunpack.c.l.b16 %v17
  %v327 = vunpack.c.l.b16 %v18
  %v328 = vunpack.c.l.b16 %v19
  %v329 = vunpack.c.l.b16 %v20
  %v330 = vunpack.c.l.b16 %v21
  %v331 = vunpack.c.l.b16 %v22
  %v332 = vunpack.c.l.b16 %v23
  %v333 = vunpack.c.l.b16 %v24
  %v334 = vunpack.c.l.b16 %v25
  %v335 = vunpack.c.l.b16 %v26
  %v336 = vunpack.c.l.b16 %v27
  %v337 = vunpack.c.l.b16 %v28
  %v338 = vunpack.c.l.b16 %v29
  %v339 = vunpack.c.l.b16 %v30
  %v340 = vunpack.c.l.b16 %v31
  %v341 = vunpack.c.l.b16 %v32
  %v342 = vunpack.c.l.b16 %v33
  %v343 = vunpack.c.l.b16 %v34
  %v344 = vunpack.c.l.b16 %v35
  %v345 = vunpack.c.l.b16 %v36
  %v346 = vunpack.c.l.b16 %v37
  %v347 = vunpack.c.l.b16 %v38
  %v348 = vunpack.c.l.b16 %v39
  %v349 = vunpack.c.l.b16 %v40
  %v350 = vunpack.c.l.b16 %v41
  %v351 = vunpack.c.l.b16 %v42
  %v352 = vunpack.c.l.b16 %v43
  %v353 = vunpack.c.l.b16 %v44
  %v354 = vunpack.c.l.b16 %v45
  %v355 = vunpack.c.l.b16 %v46
  %v356 = vunpack.c.l.b16 %v47
  %v357 = vunpack.c.l.b16 %v48
  %v358 = vunpack.c.l.b16 %v49
  %v359 = vunpack.c.l.b16 %v50
  %v360 = vunpack.c.l.b16 %v51
  %v361 = vunpack.c.l.b16 %v52
  %v362 = vunpack.c.l.b16 %v53
  %v363 = vunpack.c.l.b16 %v54
  %v364 = vunpack.c.l.b16 %v55
  %v365 = vunpack.c.l.b16 %v56
  %v366 = vunpack.c.l.b16 %v57
  %v367 = vunpack.c.l.b16 %v58
  %v368 = vunpack.c.l.b16 %v59
  %v369 = vunpack.c.l.b16 %v60
  %v370 = vunpack.c.l.b16 %v61
  %v371 = vunpack.c.l.b16 %v62
  %v372 = vunpack.c.l.b16 %v63
  %v373 = vunpack.c.l.b16 %v64
  %v374 = vunpack.c.l.b16 %v65
  %v375 = vunpack.c.l.b16 %v66
  %v376 = vunpack.c.l.b16 %v67
  %v377 = vunpack.c.l.b16 %v68
  %v378 = vunpack.c.l.b16 %v69
  %v379 = vunpack.c.l.b16 %v70
  %v380 = vunpack.c.l.b16 %v71
  %v381 = vunpack.c.l.b16 %v72
  %v382 = vunpack.c.l.b16 %v73
  %v383 = vunpack.c.l.b16 %v74
  %v384 = vunpack.c.l.b16 %v75
  %v385 = vunpack.c.l.b16 %v76
  %v386 = vunpack.c.l.b16 %v77
  %v387 = vunpack.c.l.b16 %v78
  %v388 = vunpack.c.l.b16 %v79
  %v389 = vunpack.c.l.b16 %v80
  %v390 = vunpack.c.l.b16 %v81
  %v391 = vunpack.c.l.b16 %v82
  %v392 = vunpack.c.l.b16 %v83
  %v393 = vunpack.c.l.b16 %v84
  %v394 = vunpack.c.l.b16 %v85
  %v395 = vunpack.c.l.b16 %v86
  %v396 = vunpack.c.l.b16 %v87
  %v397 = vunpack.c.l.b16 %v88
  %v398 = vunpack.c.l.b16 %v89
  %v399 = vunpack.c.l.b16 %v90
  %v400 = vunpack.c.l.b16 %v91
  %v401 = vunpack.c.l.b16 %v92
  %v402 = vunpack.c.l.b16 %v93
  %v403 = vunpack.c.l.b16 %v94
  %v404 = vpack.c.b16 %v325, %v324
  %v405 = vpack.c.b16 %v327, %v326
  %v406 = vpack.c.b16 %v329, %v328
  %v407 = vpack.c.b16 %v331, %v330
  %v408 = vpack.c.b16 %v333, %v332
  %v409 = vpack.c.b16 %v335, %v334
  %v410 = vpack.c.b16 %v337, %v336
  %v411 = vpack.c.b16 %v339, %v338
  %v412 = vpack.c.b16 %v341, %v340
  %v413 = vpack.c.b16 %v343, %v342
  %v414 = vpack.c.b16 %v345, %v344
  %v415 = vpack.c.b16 %v347, %v346
  %v416 = vpack.c.b16 %v349, %v348
  %v417 = vpack.c.b16 %v351, %v350
  %v418 = vpack.c.b16 %v353, %v352
  %v419 = vpack.c.b16 %v355, %v354
  %v420 = vpack.c.b16 %v357, %v356
  %v421 = vpack.c.b16 %v359, %v358
  %v422 = vpack.c.b16 %v361, %v360
  %v423 = vpack.c.b16 %v363, %v362
  %v424 = vpack.c.b16 %v365, %v364
  %v425 = vpack.c.b16 %v367, %v366
  %v426 = vpack.c.b16 %v369, %v368
  %v427 = vpack.c.b16 %v371, %v370
  %v428 = vpack.c.b16 %v373, %v372
  %v429 = vpack.c.b16 %v375, %v374
  %v430 = vpack.c.b16 %v377, %v376
  %v431 = vpack.c.b16 %v379, %v378
  %v432 = vpack.c.b16 %v381, %v380
  %v433 = vpack.c.b16 %v383, %v382
  %v434 = vpack.c.b16 %v385, %v384
  %v435 = vpack.c.b16 %v387, %v386
  %v436 = vpack.c.b16 %v389, %v388
  %v437 = vpack.c.b16 %v391, %v390
  %v438 = vpack.c.b16 %v393, %v392
  %v439 = vpack.c.b16 %v395, %v394
  %v440 = vpack.c.b16 %v397, %v396
  %v441 = vpack.c.b16 %v399, %v398
  %v442 = vpack.c.b16 %v401, %v400
  %v443 = vpack.c.b16 %v403, %v402
  %484 = vmatprep.subr.bf16.mxu0 0
  %485 = vmatpush1.bf16.msra.mxu0 %v411
  %486 = vmatprep.subr.bf16.mxu0 0
  %487 = vmatpush1.bf16.msra.mxu0 %v410
  %488 = vmatprep.subr.bf16.mxu0 0
  %489 = vmatpush1.bf16.msra.mxu0 %v409
  %490 = vmatprep.subr.bf16.mxu0 0
  %491 = vmatpush1.bf16.msra.mxu0 %v408
  %492 = vmatprep.subr.bf16.mxu0 0
  %493 = vmatpush1.bf16.msra.mxu0 %v407
  %494 = vmatprep.subr.bf16.mxu0 0
  %495 = vmatpush1.bf16.msra.mxu0 %v406
  %496 = vmatprep.subr.bf16.mxu0 0
  %497 = vmatpush1.bf16.msra.mxu0 %v405
  %498 = vmatprep.subr.bf16.mxu0 0
  %499 = vmatpush1.bf16.msra.mxu0 %v404
  %500 = vmatprep.subr.bf16.mxu0 0
  %501 = vmatpush2.bf16.msra.mxu0 %v419
  %502 = vmatprep.subr.bf16.mxu0 0
  %503 = vmatpush2.bf16.msra.mxu0 %v418
  %504 = vmatprep.subr.bf16.mxu0 0
  %505 = vmatpush2.bf16.msra.mxu0 %v417
  %506 = vmatprep.subr.bf16.mxu0 0
  %507 = vmatpush2.bf16.msra.mxu0 %v416
  %508 = vmatprep.subr.bf16.mxu0 0
  %509 = vmatpush2.bf16.msra.mxu0 %v415
  %510 = vmatprep.subr.bf16.mxu0 0
  %511 = vmatpush2.bf16.msra.mxu0 %v414
  %512 = vmatprep.subr.bf16.mxu0 0
  %513 = vmatpush2.bf16.msra.mxu0 %v413
  %514 = vmatprep.subr.bf16.mxu0 0
  %515 = vmatpush2.bf16.msra.mxu0 %v412
  %516 = vmatprep.mubr.bf16.mxu0 %v195
  %517 = vmatmul.mubr.bf16.gmra.mxu0 %v194
  %v518 = vpop.f32.mrf.mxu0
  %v519 = vadd.f32 0.0, %v518
  %v520 = vpop.f32.mrf.mxu0
  %v521 = vpop.f32.mrf.mxu0
  %v522 = vadd.f32 0.0, %v521
  %v523 = vpop.f32.mrf.mxu0
  %524 = vmatprep.mubr.bf16.mxu0 %v200
  %525 = vmatmul.mubr.bf16.gmra.mxu0 %v199
  %v526 = vpop.f32.mrf.mxu0
  %v527 = vadd.f32 0.0, %v526
  %v528 = vpop.f32.mrf.mxu0
  %v529 = vpop.f32.mrf.mxu0
  %v530 = vadd.f32 0.0, %v529
  %v531 = vpop.f32.mrf.mxu0
  %532 = vmatprep.mubr.bf16.mxu0 %v205
  %533 = vmatmul.mubr.bf16.gmra.mxu0 %v204
  %v534 = vpop.f32.mrf.mxu0
  %v535 = vadd.f32 0.0, %v534
  %v536 = vpop.f32.mrf.mxu0
  %v537 = vpop.f32.mrf.mxu0
  %v538 = vadd.f32 0.0, %v537
  %v539 = vpop.f32.mrf.mxu0
  %540 = vmatprep.mubr.bf16.mxu0 %v210
  %541 = vmatmul.mubr.bf16.gmra.mxu0 %v209
  %v542 = vpop.f32.mrf.mxu0
  %v543 = vadd.f32 0.0, %v542
  %v544 = vpop.f32.mrf.mxu0
  %v545 = vpop.f32.mrf.mxu0
  %v546 = vadd.f32 0.0, %v545
  %v547 = vpop.f32.mrf.mxu0
  %548 = vmatprep.mubr.bf16.mxu0 %v215
  %549 = vmatmul.mubr.bf16.gmra.mxu0 %v214
  %v550 = vpop.f32.mrf.mxu0
  %v551 = vadd.f32 0.0, %v550
  %v552 = vpop.f32.mrf.mxu0
  %v553 = vpop.f32.mrf.mxu0
  %v554 = vpop.f32.mrf.mxu0
  %555 = vdwg.mxu0
  %556 = vmatprep.subr.bf16.mxu0 0
  %557 = vmatpush1.bf16.msra.mxu0 %v427
  %558 = vmatprep.subr.bf16.mxu0 0
  %559 = vmatpush1.bf16.msra.mxu0 %v426
  %560 = vmatprep.subr.bf16.mxu0 0
  %561 = vmatpush1.bf16.msra.mxu0 %v425
  %562 = vmatprep.subr.bf16.mxu0 0
  %563 = vmatpush1.bf16.msra.mxu0 %v424
  %564 = vmatprep.subr.bf16.mxu0 0
  %565 = vmatpush1.bf16.msra.mxu0 %v423
  %566 = vmatprep.subr.bf16.mxu0 0
  %567 = vmatpush1.bf16.msra.mxu0 %v422
  %568 = vmatprep.subr.bf16.mxu0 0
  %569 = vmatpush1.bf16.msra.mxu0 %v421
  %570 = vmatprep.subr.bf16.mxu0 0
  %571 = vmatpush1.bf16.msra.mxu0 %v420
  %572 = vmatprep.subr.bf16.mxu0 0
  %573 = vmatpush2.bf16.msra.mxu0 %v435
  %574 = vmatprep.subr.bf16.mxu0 0
  %575 = vmatpush2.bf16.msra.mxu0 %v434
  %576 = vmatprep.subr.bf16.mxu0 0
  %577 = vmatpush2.bf16.msra.mxu0 %v433
  %578 = vmatprep.subr.bf16.mxu0 0
  %579 = vmatpush2.bf16.msra.mxu0 %v432
  %580 = vmatprep.subr.bf16.mxu0 0
  %581 = vmatpush2.bf16.msra.mxu0 %v431
  %582 = vmatprep.subr.bf16.mxu0 0
  %583 = vmatpush2.bf16.msra.mxu0 %v430
  %584 = vmatprep.subr.bf16.mxu0 0
  %585 = vmatpush2.bf16.msra.mxu0 %v429
  %586 = vmatprep.subr.bf16.mxu0 0
  %587 = vmatpush2.bf16.msra.mxu0 %v428
  %588 = vmatprep.mubr.bf16.mxu0 %v197
  %589 = vmatmul.mubr.bf16.gmra.mxu0 %v196
  %v590 = vpop.f32.mrf.mxu0
  %v591 = vadd.f32 %v519, %v590
  %v592 = vpop.f32.mrf.mxu0
  %v593 = vpop.f32.mrf.mxu0
  %v594 = vadd.f32 %v522, %v593
  %v595 = vpop.f32.mrf.mxu0
  %596 = vmatprep.mubr.bf16.mxu0 %v202
  %597 = vmatmul.mubr.bf16.gmra.mxu0 %v201
  %v598 = vpop.f32.mrf.mxu0
  %v599 = vadd.f32 %v527, %v598
  %v600 = vpop.f32.mrf.mxu0
  %v601 = vpop.f32.mrf.mxu0
  %v602 = vadd.f32 %v530, %v601
  %v603 = vpop.f32.mrf.mxu0
  %604 = vmatprep.mubr.bf16.mxu0 %v207
  %605 = vmatmul.mubr.bf16.gmra.mxu0 %v206
  %v606 = vpop.f32.mrf.mxu0
  %v607 = vadd.f32 %v535, %v606
  %v608 = vpop.f32.mrf.mxu0
  %v609 = vpop.f32.mrf.mxu0
  %v610 = vadd.f32 %v538, %v609
  %v611 = vpop.f32.mrf.mxu0
  %612 = vmatprep.mubr.bf16.mxu0 %v212
  %613 = vmatmul.mubr.bf16.gmra.mxu0 %v211
  %v614 = vpop.f32.mrf.mxu0
  %v615 = vadd.f32 %v543, %v614
  %v616 = vpop.f32.mrf.mxu0
  %v617 = vpop.f32.mrf.mxu0
  %v618 = vadd.f32 %v546, %v617
  %v619 = vpop.f32.mrf.mxu0
  %620 = vmatprep.mubr.bf16.mxu0 %v217
  %621 = vmatmul.mubr.bf16.gmra.mxu0 %v216
  %v622 = vpop.f32.mrf.mxu0
  %v623 = vadd.f32 %v551, %v622
  %v624 = vpop.f32.mrf.mxu0
  %v625 = vpop.f32.mrf.mxu0
  %v626 = vpop.f32.mrf.mxu0
  %627 = vdwg.mxu0
  %628 = vmatprep.subr.bf16.mxu0 0
  %629 = vmatpush1.bf16.msra.mxu0 %v443
  %630 = vmatprep.subr.bf16.mxu0 0
  %631 = vmatpush1.bf16.msra.mxu0 %v442
  %632 = vmatprep.subr.bf16.mxu0 0
  %633 = vmatpush1.bf16.msra.mxu0 %v441
  %634 = vmatprep.subr.bf16.mxu0 0
  %635 = vmatpush1.bf16.msra.mxu0 %v440
  %636 = vmatprep.subr.bf16.mxu0 0
  %637 = vmatpush1.bf16.msra.mxu0 %v439
  %638 = vmatprep.subr.bf16.mxu0 0
  %639 = vmatpush1.bf16.msra.mxu0 %v438
  %640 = vmatprep.subr.bf16.mxu0 0
  %641 = vmatpush1.bf16.msra.mxu0 %v437
  %642 = vmatprep.subr.bf16.mxu0 0
  %643 = vmatpush1.bf16.msra.mxu0 %v436
  %644 = vmatprep.subr.bf16.mxu0 0
  %645 = vmatpush2.bf16.msra.mxu0 0
  %646 = vmatprep.subr.bf16.mxu0 0
  %647 = vmatpush2.bf16.msra.mxu0 0
  %648 = vmatprep.subr.bf16.mxu0 0
  %649 = vmatpush2.bf16.msra.mxu0 0
  %650 = vmatprep.subr.bf16.mxu0 0
  %651 = vmatpush2.bf16.msra.mxu0 0
  %652 = vmatprep.subr.bf16.mxu0 0
  %653 = vmatpush2.bf16.msra.mxu0 0
  %654 = vmatprep.subr.bf16.mxu0 0
  %655 = vmatpush2.bf16.msra.mxu0 0
  %656 = vmatprep.subr.bf16.mxu0 0
  %657 = vmatpush2.bf16.msra.mxu0 0
  %658 = vmatprep.subr.bf16.mxu0 0
  %659 = vmatpush2.bf16.msra.mxu0 0
  %660 = vmatprep.mubr.bf16.mxu0 0
  %661 = vmatmul.mubr.bf16.gmra.mxu0 %v198
  %v662 = vpop.f32.mrf.mxu0
  %v663 = vadd.f32 %v591, %v662
  %v664 = vpop.f32.mrf.mxu0
  %v665 = vpop.f32.mrf.mxu0
  %v666 = vadd.f32 %v594, %v665
  %v667 = vpop.f32.mrf.mxu0
  %668 = vmatprep.mubr.bf16.mxu0 0
  %669 = vmatmul.mubr.bf16.gmra.mxu0 %v203
  %v670 = vpop.f32.mrf.mxu0
  %v671 = vadd.f32 %v599, %v670
  %v672 = vpop.f32.mrf.mxu0
  %v673 = vpop.f32.mrf.mxu0
  %v674 = vadd.f32 %v602, %v673
  %v675 = vpop.f32.mrf.mxu0
  %676 = vmatprep.mubr.bf16.mxu0 0
  %677 = vmatmul.mubr.bf16.gmra.mxu0 %v208
  %v678 = vpop.f32.mrf.mxu0
  %v679 = vadd.f32 %v607, %v678
  %v680 = vpop.f32.mrf.mxu0
  %v681 = vpop.f32.mrf.mxu0
  %v682 = vadd.f32 %v610, %v681
  %v683 = vpop.f32.mrf.mxu0
  %684 = vmatprep.mubr.bf16.mxu0 0
  %685 = vmatmul.mubr.bf16.gmra.mxu0 %v213
  %v686 = vpop.f32.mrf.mxu0
  %v687 = vadd.f32 %v615, %v686
  %v688 = vpop.f32.mrf.mxu0
  %v689 = vpop.f32.mrf.mxu0
  %v690 = vadd.f32 %v618, %v689
  %v691 = vpop.f32.mrf.mxu0
  %692 = vmatprep.mubr.bf16.mxu0 0
  %693 = vmatmul.mubr.bf16.gmra.mxu0 %v218
  %v694 = vpop.f32.mrf.mxu0
  %v695 = vadd.f32 %v623, %v694
  %v696 = vpop.f32.mrf.mxu0
  %v697 = vpop.f32.mrf.mxu0
  %v698 = vpop.f32.mrf.mxu0
  %699 = vdwg.mxu0
  %s700 = scalar_lea.vmem %s0, 180
  %v701 = vld [vmem:[%s700] sm:$0xff]
  %v702 = vld [vmem:[%s700 + $0x8] sm:$0xff]
  %v703 = vld [vmem:[%s700 + $0x10] sm:$0xf]
  %v704 = vld [vmem:[%s700 + $0x14] sm:$0xff]
  %v705 = vld [vmem:[%s700 + $0x1c] sm:$0xff]
  %v706 = vld [vmem:[%s700 + $0x24] sm:$0xf]
  %v707 = vld [vmem:[%s700 + $0x28] sm:$0xff]
  %v708 = vld [vmem:[%s700 + $0x30] sm:$0xff]
  %v709 = vld [vmem:[%s700 + $0x38] sm:$0xf]
  %v710 = vld [vmem:[%s700 + $0x3c] sm:$0xff]
  %v711 = vld [vmem:[%s700 + $0x44] sm:$0xff]
  %v712 = vld [vmem:[%s700 + $0x4c] sm:$0xf]
  %v713 = vld [vmem:[%s700 + $0x50] sm:$0xff]
  %v714 = vld [vmem:[%s700 + $0x58] sm:$0xff]
  %v715 = vld [vmem:[%s700 + $0x60] sm:$0xf]
  %v716 = vld [vmem:[%s700 + $0x64] sm:$0xff]
  %v717 = vld [vmem:[%s700 + $0x6c] sm:$0xff]
  %v718 = vld [vmem:[%s700 + $0x74] sm:$0xf]
  %v719 = vld [vmem:[%s700 + $0x78] sm:$0xff]
  %v720 = vld [vmem:[%s700 + $0x80] sm:$0xff]
  %v721 = vld [vmem:[%s700 + $0x88] sm:$0xf]
  %v722 = vld [vmem:[%s700 + $0x8c] sm:$0xff]
  %v723 = vld [vmem:[%s700 + $0x94] sm:$0xff]
  %v724 = vld [vmem:[%s700 + $0x9c] sm:$0xf]
  %v725 = vld [vmem:[%s700 + $0xa0] sm:$0xff]
  %v726 = vld [vmem:[%s700 + $0xa8] sm:$0xff]
  %v727 = vld [vmem:[%s700 + $0xb0] sm:$0xf]
  %v755 = vunpack.c.l.b16 %v701
  %v756 = vunpack.c.h.b16 %v701
  %v757 = vunpack.c.l.b16 %v702
  %v758 = vunpack.c.h.b16 %v702
  %v759 = vunpack.c.l.b16 %v703
  %v760 = vunpack.c.l.b16 %v704
  %v761 = vunpack.c.h.b16 %v704
  %v762 = vunpack.c.l.b16 %v705
  %v763 = vunpack.c.h.b16 %v705
  %v764 = vunpack.c.l.b16 %v706
  %v765 = vunpack.c.l.b16 %v707
  %v766 = vunpack.c.h.b16 %v707
  %v767 = vunpack.c.l.b16 %v708
  %v768 = vunpack.c.h.b16 %v708
  %v769 = vunpack.c.l.b16 %v709
  %v770 = vunpack.c.l.b16 %v710
  %v771 = vunpack.c.h.b16 %v710
  %v772 = vunpack.c.l.b16 %v711
  %v773 = vunpack.c.h.b16 %v711
  %v774 = vunpack.c.l.b16 %v712
  %v775 = vunpack.c.l.b16 %v713
  %v776 = vunpack.c.h.b16 %v713
  %v777 = vunpack.c.l.b16 %v714
  %v778 = vunpack.c.h.b16 %v714
  %v779 = vunpack.c.l.b16 %v715
  %v780 = vunpack.c.l.b16 %v716
  %v781 = vunpack.c.h.b16 %v716
  %v782 = vunpack.c.l.b16 %v717
  %v783 = vunpack.c.h.b16 %v717
  %v784 = vunpack.c.l.b16 %v718
  %v785 = vunpack.c.l.b16 %v719
  %v786 = vunpack.c.h.b16 %v719
  %v787 = vunpack.c.l.b16 %v720
  %v788 = vunpack.c.h.b16 %v720
  %v789 = vunpack.c.l.b16 %v721
  %v790 = vunpack.c.l.b16 %v722
  %v791 = vunpack.c.h.b16 %v722
  %v792 = vunpack.c.l.b16 %v723
  %v793 = vunpack.c.h.b16 %v723
  %v794 = vunpack.c.l.b16 %v724
  %v795 = vunpack.c.l.b16 %v725
  %v796 = vunpack.c.h.b16 %v725
  %v797 = vunpack.c.l.b16 %v726
  %v798 = vunpack.c.h.b16 %v726
  %v799 = vunpack.c.l.b16 %v727
  %v800 = vpack.c.b16 %v760, %v755
  %v801 = vpack.c.b16 %v761, %v756
  %v802 = vpack.c.b16 %v762, %v757
  %v803 = vpack.c.b16 %v763, %v758
  %v804 = vpack.c.b16 %v764, %v759
  %v805 = vpack.c.b16 %v770, %v765
  %v806 = vpack.c.b16 %v771, %v766
  %v807 = vpack.c.b16 %v772, %v767
  %v808 = vpack.c.b16 %v773, %v768
  %v809 = vpack.c.b16 %v774, %v769
  %v810 = vpack.c.b16 %v780, %v775
  %v811 = vpack.c.b16 %v781, %v776
  %v812 = vpack.c.b16 %v782, %v777
  %v813 = vpack.c.b16 %v783, %v778
  %v814 = vpack.c.b16 %v784, %v779
  %v815 = vpack.c.b16 %v790, %v785
  %v816 = vpack.c.b16 %v791, %v786
  %v817 = vpack.c.b16 %v792, %v787
  %v818 = vpack.c.b16 %v793, %v788
  %v819 = vpack.c.b16 %v794, %v789
  %v820 = vpack.c.b16 %v795, %v795
  %v821 = vpack.c.b16 %v796, %v796
  %v822 = vpack.c.b16 %v797, %v797
  %v823 = vpack.c.b16 %v798, %v798
  %v824 = vpack.c.b16 %v799, %v799
  %850 = vmatprep.subr.bf16.mxu0 0
  %851 = vmatpush1.bf16.msra.mxu0 %v411
  %852 = vmatprep.subr.bf16.mxu0 0
  %853 = vmatpush1.bf16.msra.mxu0 %v410
  %854 = vmatprep.subr.bf16.mxu0 0
  %855 = vmatpush1.bf16.msra.mxu0 %v409
  %856 = vmatprep.subr.bf16.mxu0 0
  %857 = vmatpush1.bf16.msra.mxu0 %v408
  %858 = vmatprep.subr.bf16.mxu0 0
  %859 = vmatpush1.bf16.msra.mxu0 %v407
  %860 = vmatprep.subr.bf16.mxu0 0
  %861 = vmatpush1.bf16.msra.mxu0 %v406
  %862 = vmatprep.subr.bf16.mxu0 0
  %863 = vmatpush1.bf16.msra.mxu0 %v405
  %864 = vmatprep.subr.bf16.mxu0 0
  %865 = vmatpush1.bf16.msra.mxu0 %v404
  %866 = vmatprep.subr.bf16.mxu0 0
  %867 = vmatpush2.bf16.msra.mxu0 %v419
  %868 = vmatprep.subr.bf16.mxu0 0
  %869 = vmatpush2.bf16.msra.mxu0 %v418
  %870 = vmatprep.subr.bf16.mxu0 0
  %871 = vmatpush2.bf16.msra.mxu0 %v417
  %872 = vmatprep.subr.bf16.mxu0 0
  %873 = vmatpush2.bf16.msra.mxu0 %v416
  %874 = vmatprep.subr.bf16.mxu0 0
  %875 = vmatpush2.bf16.msra.mxu0 %v415
  %876 = vmatprep.subr.bf16.mxu0 0
  %877 = vmatpush2.bf16.msra.mxu0 %v414
  %878 = vmatprep.subr.bf16.mxu0 0
  %879 = vmatpush2.bf16.msra.mxu0 %v413
  %880 = vmatprep.subr.bf16.mxu0 0
  %881 = vmatpush2.bf16.msra.mxu0 %v412
  %882 = vmatprep.mubr.bf16.mxu0 %v801
  %883 = vmatmul.mubr.bf16.gmra.mxu0 %v800
  %v884 = vpop.f32.mrf.mxu0
  %v885 = vadd.f32 0.0, %v884
  %v886 = vpop.f32.mrf.mxu0
  %v887 = vpop.f32.mrf.mxu0
  %v888 = vadd.f32 0.0, %v887
  %v889 = vpop.f32.mrf.mxu0
  %890 = vmatprep.mubr.bf16.mxu0 %v806
  %891 = vmatmul.mubr.bf16.gmra.mxu0 %v805
  %v892 = vpop.f32.mrf.mxu0
  %v893 = vadd.f32 0.0, %v892
  %v894 = vpop.f32.mrf.mxu0
  %v895 = vpop.f32.mrf.mxu0
  %v896 = vadd.f32 0.0, %v895
  %v897 = vpop.f32.mrf.mxu0
  %898 = vmatprep.mubr.bf16.mxu0 %v811
  %899 = vmatmul.mubr.bf16.gmra.mxu0 %v810
  %v900 = vpop.f32.mrf.mxu0
  %v901 = vadd.f32 0.0, %v900
  %v902 = vpop.f32.mrf.mxu0
  %v903 = vpop.f32.mrf.mxu0
  %v904 = vadd.f32 0.0, %v903
  %v905 = vpop.f32.mrf.mxu0
  %906 = vmatprep.mubr.bf16.mxu0 %v816
  %907 = vmatmul.mubr.bf16.gmra.mxu0 %v815
  %v908 = vpop.f32.mrf.mxu0
  %v909 = vadd.f32 0.0, %v908
  %v910 = vpop.f32.mrf.mxu0
  %v911 = vpop.f32.mrf.mxu0
  %v912 = vadd.f32 0.0, %v911
  %v913 = vpop.f32.mrf.mxu0
  %914 = vmatprep.mubr.bf16.mxu0 %v821
  %915 = vmatmul.mubr.bf16.gmra.mxu0 %v820
  %v916 = vpop.f32.mrf.mxu0
  %v917 = vadd.f32 0.0, %v916
  %v918 = vpop.f32.mrf.mxu0
  %v919 = vpop.f32.mrf.mxu0
  %v920 = vpop.f32.mrf.mxu0
  %921 = vdwg.mxu0
  %922 = vmatprep.subr.bf16.mxu0 0
  %923 = vmatpush1.bf16.msra.mxu0 %v427
  %924 = vmatprep.subr.bf16.mxu0 0
  %925 = vmatpush1.bf16.msra.mxu0 %v426
  %926 = vmatprep.subr.bf16.mxu0 0
  %927 = vmatpush1.bf16.msra.mxu0 %v425
  %928 = vmatprep.subr.bf16.mxu0 0
  %929 = vmatpush1.bf16.msra.mxu0 %v424
  %930 = vmatprep.subr.bf16.mxu0 0
  %931 = vmatpush1.bf16.msra.mxu0 %v423
  %932 = vmatprep.subr.bf16.mxu0 0
  %933 = vmatpush1.bf16.msra.mxu0 %v422
  %934 = vmatprep.subr.bf16.mxu0 0
  %935 = vmatpush1.bf16.msra.mxu0 %v421
  %936 = vmatprep.subr.bf16.mxu0 0
  %937 = vmatpush1.bf16.msra.mxu0 %v420
  %938 = vmatprep.subr.bf16.mxu0 0
  %939 = vmatpush2.bf16.msra.mxu0 %v435
  %940 = vmatprep.subr.bf16.mxu0 0
  %941 = vmatpush2.bf16.msra.mxu0 %v434
  %942 = vmatprep.subr.bf16.mxu0 0
  %943 = vmatpush2.bf16.msra.mxu0 %v433
  %944 = vmatprep.subr.bf16.mxu0 0
  %945 = vmatpush2.bf16.msra.mxu0 %v432
  %946 = vmatprep.subr.bf16.mxu0 0
  %947 = vmatpush2.bf16.msra.mxu0 %v431
  %948 = vmatprep.subr.bf16.mxu0 0
  %949 = vmatpush2.bf16.msra.mxu0 %v430
  %950 = vmatprep.subr.bf16.mxu0 0
  %951 = vmatpush2.bf16.msra.mxu0 %v429
  %952 = vmatprep.subr.bf16.mxu0 0
  %953 = vmatpush2.bf16.msra.mxu0 %v428
  %954 = vmatprep.mubr.bf16.mxu0 %v803
  %955 = vmatmul.mubr.bf16.gmra.mxu0 %v802
  %v956 = vpop.f32.mrf.mxu0
  %v957 = vadd.f32 %v885, %v956
  %v958 = vpop.f32.mrf.mxu0
  %v959 = vpop.f32.mrf.mxu0
  %v960 = vadd.f32 %v888, %v959
  %v961 = vpop.f32.mrf.mxu0
  %962 = vmatprep.mubr.bf16.mxu0 %v808
  %963 = vmatmul.mubr.bf16.gmra.mxu0 %v807
  %v964 = vpop.f32.mrf.mxu0
  %v965 = vadd.f32 %v893, %v964
  %v966 = vpop.f32.mrf.mxu0
  %v967 = vpop.f32.mrf.mxu0
  %v968 = vadd.f32 %v896, %v967
  %v969 = vpop.f32.mrf.mxu0
  %970 = vmatprep.mubr.bf16.mxu0 %v813
  %971 = vmatmul.mubr.bf16.gmra.mxu0 %v812
  %v972 = vpop.f32.mrf.mxu0
  %v973 = vadd.f32 %v901, %v972
  %v974 = vpop.f32.mrf.mxu0
  %v975 = vpop.f32.mrf.mxu0
  %v976 = vadd.f32 %v904, %v975
  %v977 = vpop.f32.mrf.mxu0
  %978 = vmatprep.mubr.bf16.mxu0 %v818
  %979 = vmatmul.mubr.bf16.gmra.mxu0 %v817
  %v980 = vpop.f32.mrf.mxu0
  %v981 = vadd.f32 %v909, %v980
  %v982 = vpop.f32.mrf.mxu0
  %v983 = vpop.f32.mrf.mxu0
  %v984 = vadd.f32 %v912, %v983
  %v985 = vpop.f32.mrf.mxu0
  %986 = vmatprep.mubr.bf16.mxu0 %v823
  %987 = vmatmul.mubr.bf16.gmra.mxu0 %v822
  %v988 = vpop.f32.mrf.mxu0
  %v989 = vadd.f32 %v917, %v988
  %v990 = vpop.f32.mrf.mxu0
  %v991 = vpop.f32.mrf.mxu0
  %v992 = vpop.f32.mrf.mxu0
  %993 = vdwg.mxu0
  %994 = vmatprep.subr.bf16.mxu0 0
  %995 = vmatpush1.bf16.msra.mxu0 %v443
  %996 = vmatprep.subr.bf16.mxu0 0
  %997 = vmatpush1.bf16.msra.mxu0 %v442
  %998 = vmatprep.subr.bf16.mxu0 0
  %999 = vmatpush1.bf16.msra.mxu0 %v441
  %1000 = vmatprep.subr.bf16.mxu0 0
  %1001 = vmatpush1.bf16.msra.mxu0 %v440
  %1002 = vmatprep.subr.bf16.mxu0 0
  %1003 = vmatpush1.bf16.msra.mxu0 %v439
  %1004 = vmatprep.subr.bf16.mxu0 0
  %1005 = vmatpush1.bf16.msra.mxu0 %v438
  %1006 = vmatprep.subr.bf16.mxu0 0
  %1007 = vmatpush1.bf16.msra.mxu0 %v437
  %1008 = vmatprep.subr.bf16.mxu0 0
  %1009 = vmatpush1.bf16.msra.mxu0 %v436
  %1010 = vmatprep.subr.bf16.mxu0 0
  %1011 = vmatpush2.bf16.msra.mxu0 0
  %1012 = vmatprep.subr.bf16.mxu0 0
  %1013 = vmatpush2.bf16.msra.mxu0 0
  %1014 = vmatprep.subr.bf16.mxu0 0
  %1015 = vmatpush2.bf16.msra.mxu0 0
  %1016 = vmatprep.subr.bf16.mxu0 0
  %1017 = vmatpush2.bf16.msra.mxu0 0
  %1018 = vmatprep.subr.bf16.mxu0 0
  %1019 = vmatpush2.bf16.msra.mxu0 0
  %1020 = vmatprep.subr.bf16.mxu0 0
  %1021 = vmatpush2.bf16.msra.mxu0 0
  %1022 = vmatprep.subr.bf16.mxu0 0
  %1023 = vmatpush2.bf16.msra.mxu0 0
  %1024 = vmatprep.subr.bf16.mxu0 0
  %1025 = vmatpush2.bf16.msra.mxu0 0
  %1026 = vmatprep.mubr.bf16.mxu0 0
  %1027 = vmatmul.mubr.bf16.gmra.mxu0 %v804
  %v1028 = vpop.f32.mrf.mxu0
  %v1029 = vadd.f32 %v957, %v1028
  %v1030 = vpop.f32.mrf.mxu0
  %v1031 = vpop.f32.mrf.mxu0
  %v1032 = vadd.f32 %v960, %v1031
  %v1033 = vpop.f32.mrf.mxu0
  %1034 = vmatprep.mubr.bf16.mxu0 0
  %1035 = vmatmul.mubr.bf16.gmra.mxu0 %v809
  %v1036 = vpop.f32.mrf.mxu0
  %v1037 = vadd.f32 %v965, %v1036
  %v1038 = vpop.f32.mrf.mxu0
  %v1039 = vpop.f32.mrf.mxu0
  %v1040 = vadd.f32 %v968, %v1039
  %v1041 = vpop.f32.mrf.mxu0
  %1042 = vmatprep.mubr.bf16.mxu0 0
  %1043 = vmatmul.mubr.bf16.gmra.mxu0 %v814
  %v1044 = vpop.f32.mrf.mxu0
  %v1045 = vadd.f32 %v973, %v1044
  %v1046 = vpop.f32.mrf.mxu0
  %v1047 = vpop.f32.mrf.mxu0
  %v1048 = vadd.f32 %v976, %v1047
  %v1049 = vpop.f32.mrf.mxu0
  %1050 = vmatprep.mubr.bf16.mxu0 0
  %1051 = vmatmul.mubr.bf16.gmra.mxu0 %v819
  %v1052 = vpop.f32.mrf.mxu0
  %v1053 = vadd.f32 %v981, %v1052
  %v1054 = vpop.f32.mrf.mxu0
  %v1055 = vpop.f32.mrf.mxu0
  %v1056 = vadd.f32 %v984, %v1055
  %v1057 = vpop.f32.mrf.mxu0
  %1058 = vmatprep.mubr.bf16.mxu0 0
  %1059 = vmatmul.mubr.bf16.gmra.mxu0 %v824
  %v1060 = vpop.f32.mrf.mxu0
  %v1061 = vadd.f32 %v989, %v1060
  %v1062 = vpop.f32.mrf.mxu0
  %v1063 = vpop.f32.mrf.mxu0
  %v1064 = vpop.f32.mrf.mxu0
  %1065 = vdwg.mxu0
  %v1066 = vmax.f32 %v663, %v1029
  %v1067 = vmax.f32 %v666, %v1032
  %v1068 = vmax.f32 %v671, %v1037
  %v1069 = vmax.f32 %v674, %v1040
  %v1070 = vmax.f32 %v679, %v1045
  %v1071 = vmax.f32 %v682, %v1048
  %v1072 = vmax.f32 %v687, %v1053
  %v1073 = vmax.f32 %v690, %v1056
  %v1074 = vmax.f32 %v695, %v1061
  %s1075 = scalar_lea.vmem %s0, 360
  %v1076 = vld [vmem:[%s1075] sm:$0xff]
  %v1077 = vld [vmem:[%s1075 + $0x8] sm:$0xff]
  %v1078 = vld [vmem:[%s1075 + $0x10] sm:$0xf]
  %v1079 = vld [vmem:[%s1075 + $0x14] sm:$0xff]
  %v1080 = vld [vmem:[%s1075 + $0x1c] sm:$0xff]
  %v1081 = vld [vmem:[%s1075 + $0x24] sm:$0xf]
  %v1082 = vld [vmem:[%s1075 + $0x28] sm:$0xff]
  %v1083 = vld [vmem:[%s1075 + $0x30] sm:$0xff]
  %v1084 = vld [vmem:[%s1075 + $0x38] sm:$0xf]
  %v1085 = vld [vmem:[%s1075 + $0x3c] sm:$0xff]
  %v1086 = vld [vmem:[%s1075 + $0x44] sm:$0xff]
  %v1087 = vld [vmem:[%s1075 + $0x4c] sm:$0xf]
  %v1088 = vld [vmem:[%s1075 + $0x50] sm:$0xff]
  %v1089 = vld [vmem:[%s1075 + $0x58] sm:$0xff]
  %v1090 = vld [vmem:[%s1075 + $0x60] sm:$0xf]
  %v1091 = vld [vmem:[%s1075 + $0x64] sm:$0xff]
  %v1092 = vld [vmem:[%s1075 + $0x6c] sm:$0xff]
  %v1093 = vld [vmem:[%s1075 + $0x74] sm:$0xf]
  %v1094 = vld [vmem:[%s1075 + $0x78] sm:$0xff]
  %v1095 = vld [vmem:[%s1075 + $0x80] sm:$0xff]
  %v1096 = vld [vmem:[%s1075 + $0x88] sm:$0xf]
  %v1097 = vld [vmem:[%s1075 + $0x8c] sm:$0xff]
  %v1098 = vld [vmem:[%s1075 + $0x94] sm:$0xff]
  %v1099 = vld [vmem:[%s1075 + $0x9c] sm:$0xf]
  %v1100 = vld [vmem:[%s1075 + $0xa0] sm:$0xff]
  %v1101 = vld [vmem:[%s1075 + $0xa8] sm:$0xff]
  %v1102 = vld [vmem:[%s1075 + $0xb0] sm:$0xf]
  %v1130 = vunpack.c.l.b16 %v1076
  %v1131 = vunpack.c.h.b16 %v1076
  %v1132 = vunpack.c.l.b16 %v1077
  %v1133 = vunpack.c.h.b16 %v1077
  %v1134 = vunpack.c.l.b16 %v1078
  %v1135 = vunpack.c.l.b16 %v1079
  %v1136 = vunpack.c.h.b16 %v1079
  %v1137 = vunpack.c.l.b16 %v1080
  %v1138 = vunpack.c.h.b16 %v1080
  %v1139 = vunpack.c.l.b16 %v1081
  %v1140 = vunpack.c.l.b16 %v1082
  %v1141 = vunpack.c.h.b16 %v1082
  %v1142 = vunpack.c.l.b16 %v1083
  %v1143 = vunpack.c.h.b16 %v1083
  %v1144 = vunpack.c.l.b16 %v1084
  %v1145 = vunpack.c.l.b16 %v1085
  %v1146 = vunpack.c.h.b16 %v1085
  %v1147 = vunpack.c.l.b16 %v1086
  %v1148 = vunpack.c.h.b16 %v1086
  %v1149 = vunpack.c.l.b16 %v1087
  %v1150 = vunpack.c.l.b16 %v1088
  %v1151 = vunpack.c.h.b16 %v1088
  %v1152 = vunpack.c.l.b16 %v1089
  %v1153 = vunpack.c.h.b16 %v1089
  %v1154 = vunpack.c.l.b16 %v1090
  %v1155 = vunpack.c.l.b16 %v1091
  %v1156 = vunpack.c.h.b16 %v1091
  %v1157 = vunpack.c.l.b16 %v1092
  %v1158 = vunpack.c.h.b16 %v1092
  %v1159 = vunpack.c.l.b16 %v1093
  %v1160 = vunpack.c.l.b16 %v1094
  %v1161 = vunpack.c.h.b16 %v1094
  %v1162 = vunpack.c.l.b16 %v1095
  %v1163 = vunpack.c.h.b16 %v1095
  %v1164 = vunpack.c.l.b16 %v1096
  %v1165 = vunpack.c.l.b16 %v1097
  %v1166 = vunpack.c.h.b16 %v1097
  %v1167 = vunpack.c.l.b16 %v1098
  %v1168 = vunpack.c.h.b16 %v1098
  %v1169 = vunpack.c.l.b16 %v1099
  %v1170 = vunpack.c.l.b16 %v1100
  %v1171 = vunpack.c.h.b16 %v1100
  %v1172 = vunpack.c.l.b16 %v1101
  %v1173 = vunpack.c.h.b16 %v1101
  %v1174 = vunpack.c.l.b16 %v1102
  %v1175 = vpack.c.b16 %v1135, %v1130
  %v1176 = vpack.c.b16 %v1136, %v1131
  %v1177 = vpack.c.b16 %v1137, %v1132
  %v1178 = vpack.c.b16 %v1138, %v1133
  %v1179 = vpack.c.b16 %v1139, %v1134
  %v1180 = vpack.c.b16 %v1145, %v1140
  %v1181 = vpack.c.b16 %v1146, %v1141
  %v1182 = vpack.c.b16 %v1147, %v1142
  %v1183 = vpack.c.b16 %v1148, %v1143
  %v1184 = vpack.c.b16 %v1149, %v1144
  %v1185 = vpack.c.b16 %v1155, %v1150
  %v1186 = vpack.c.b16 %v1156, %v1151
  %v1187 = vpack.c.b16 %v1157, %v1152
  %v1188 = vpack.c.b16 %v1158, %v1153
  %v1189 = vpack.c.b16 %v1159, %v1154
  %v1190 = vpack.c.b16 %v1165, %v1160
  %v1191 = vpack.c.b16 %v1166, %v1161
  %v1192 = vpack.c.b16 %v1167, %v1162
  %v1193 = vpack.c.b16 %v1168, %v1163
  %v1194 = vpack.c.b16 %v1169, %v1164
  %v1195 = vpack.c.b16 %v1170, %v1170
  %v1196 = vpack.c.b16 %v1171, %v1171
  %v1197 = vpack.c.b16 %v1172, %v1172
  %v1198 = vpack.c.b16 %v1173, %v1173
  %v1199 = vpack.c.b16 %v1174, %v1174
  %1225 = vmatprep.subr.bf16.mxu0 0
  %1226 = vmatpush1.bf16.msra.mxu0 %v411
  %1227 = vmatprep.subr.bf16.mxu0 0
  %1228 = vmatpush1.bf16.msra.mxu0 %v410
  %1229 = vmatprep.subr.bf16.mxu0 0
  %1230 = vmatpush1.bf16.msra.mxu0 %v409
  %1231 = vmatprep.subr.bf16.mxu0 0
  %1232 = vmatpush1.bf16.msra.mxu0 %v408
  %1233 = vmatprep.subr.bf16.mxu0 0
  %1234 = vmatpush1.bf16.msra.mxu0 %v407
  %1235 = vmatprep.subr.bf16.mxu0 0
  %1236 = vmatpush1.bf16.msra.mxu0 %v406
  %1237 = vmatprep.subr.bf16.mxu0 0
  %1238 = vmatpush1.bf16.msra.mxu0 %v405
  %1239 = vmatprep.subr.bf16.mxu0 0
  %1240 = vmatpush1.bf16.msra.mxu0 %v404
  %1241 = vmatprep.subr.bf16.mxu0 0
  %1242 = vmatpush2.bf16.msra.mxu0 %v419
  %1243 = vmatprep.subr.bf16.mxu0 0
  %1244 = vmatpush2.bf16.msra.mxu0 %v418
  %1245 = vmatprep.subr.bf16.mxu0 0
  %1246 = vmatpush2.bf16.msra.mxu0 %v417
  %1247 = vmatprep.subr.bf16.mxu0 0
  %1248 = vmatpush2.bf16.msra.mxu0 %v416
  %1249 = vmatprep.subr.bf16.mxu0 0
  %1250 = vmatpush2.bf16.msra.mxu0 %v415
  %1251 = vmatprep.subr.bf16.mxu0 0
  %1252 = vmatpush2.bf16.msra.mxu0 %v414
  %1253 = vmatprep.subr.bf16.mxu0 0
  %1254 = vmatpush2.bf16.msra.mxu0 %v413
  %1255 = vmatprep.subr.bf16.mxu0 0
  %1256 = vmatpush2.bf16.msra.mxu0 %v412
  %1257 = vmatprep.mubr.bf16.mxu0 %v1176
  %1258 = vmatmul.mubr.bf16.gmra.mxu0 %v1175
  %v1259 = vpop.f32.mrf.mxu0
  %v1260 = vadd.f32 0.0, %v1259
  %v1261 = vpop.f32.mrf.mxu0
  %v1262 = vpop.f32.mrf.mxu0
  %v1263 = vadd.f32 0.0, %v1262
  %v1264 = vpop.f32.mrf.mxu0
  %1265 = vmatprep.mubr.bf16.mxu0 %v1181
  %1266 = vmatmul.mubr.bf16.gmra.mxu0 %v1180
  %v1267 = vpop.f32.mrf.mxu0
  %v1268 = vadd.f32 0.0, %v1267
  %v1269 = vpop.f32.mrf.mxu0
  %v1270 = vpop.f32.mrf.mxu0
  %v1271 = vadd.f32 0.0, %v1270
  %v1272 = vpop.f32.mrf.mxu0
  %1273 = vmatprep.mubr.bf16.mxu0 %v1186
  %1274 = vmatmul.mubr.bf16.gmra.mxu0 %v1185
  %v1275 = vpop.f32.mrf.mxu0
  %v1276 = vadd.f32 0.0, %v1275
  %v1277 = vpop.f32.mrf.mxu0
  %v1278 = vpop.f32.mrf.mxu0
  %v1279 = vadd.f32 0.0, %v1278
  %v1280 = vpop.f32.mrf.mxu0
  %1281 = vmatprep.mubr.bf16.mxu0 %v1191
  %1282 = vmatmul.mubr.bf16.gmra.mxu0 %v1190
  %v1283 = vpop.f32.mrf.mxu0
  %v1284 = vadd.f32 0.0, %v1283
  %v1285 = vpop.f32.mrf.mxu0
  %v1286 = vpop.f32.mrf.mxu0
  %v1287 = vadd.f32 0.0, %v1286
  %v1288 = vpop.f32.mrf.mxu0
  %1289 = vmatprep.mubr.bf16.mxu0 %v1196
  %1290 = vmatmul.mubr.bf16.gmra.mxu0 %v1195
  %v1291 = vpop.f32.mrf.mxu0
  %v1292 = vadd.f32 0.0, %v1291
  %v1293 = vpop.f32.mrf.mxu0
  %v1294 = vpop.f32.mrf.mxu0
  %v1295 = vpop.f32.mrf.mxu0
  %1296 = vdwg.mxu0
  %1297 = vmatprep.subr.bf16.mxu0 0
  %1298 = vmatpush1.bf16.msra.mxu0 %v427
  %1299 = vmatprep.subr.bf16.mxu0 0
  %1300 = vmatpush1.bf16.msra.mxu0 %v426
  %1301 = vmatprep.subr.bf16.mxu0 0
  %1302 = vmatpush1.bf16.msra.mxu0 %v425
  %1303 = vmatprep.subr.bf16.mxu0 0
  %1304 = vmatpush1.bf16.msra.mxu0 %v424
  %1305 = vmatprep.subr.bf16.mxu0 0
  %1306 = vmatpush1.bf16.msra.mxu0 %v423
  %1307 = vmatprep.subr.bf16.mxu0 0
  %1308 = vmatpush1.bf16.msra.mxu0 %v422
  %1309 = vmatprep.subr.bf16.mxu0 0
  %1310 = vmatpush1.bf16.msra.mxu0 %v421
  %1311 = vmatprep.subr.bf16.mxu0 0
  %1312 = vmatpush1.bf16.msra.mxu0 %v420
  %1313 = vmatprep.subr.bf16.mxu0 0
  %1314 = vmatpush2.bf16.msra.mxu0 %v435
  %1315 = vmatprep.subr.bf16.mxu0 0
  %1316 = vmatpush2.bf16.msra.mxu0 %v434
  %1317 = vmatprep.subr.bf16.mxu0 0
  %1318 = vmatpush2.bf16.msra.mxu0 %v433
  %1319 = vmatprep.subr.bf16.mxu0 0
  %1320 = vmatpush2.bf16.msra.mxu0 %v432
  %1321 = vmatprep.subr.bf16.mxu0 0
  %1322 = vmatpush2.bf16.msra.mxu0 %v431
  %1323 = vmatprep.subr.bf16.mxu0 0
  %1324 = vmatpush2.bf16.msra.mxu0 %v430
  %1325 = vmatprep.subr.bf16.mxu0 0
  %1326 = vmatpush2.bf16.msra.mxu0 %v429
  %1327 = vmatprep.subr.bf16.mxu0 0
  %1328 = vmatpush2.bf16.msra.mxu0 %v428
  %1329 = vmatprep.mubr.bf16.mxu0 %v1178
  %1330 = vmatmul.mubr.bf16.gmra.mxu0 %v1177
  %v1331 = vpop.f32.mrf.mxu0
  %v1332 = vadd.f32 %v1260, %v1331
  %v1333 = vpop.f32.mrf.mxu0
  %v1334 = vpop.f32.mrf.mxu0
  %v1335 = vadd.f32 %v1263, %v1334
  %v1336 = vpop.f32.mrf.mxu0
  %1337 = vmatprep.mubr.bf16.mxu0 %v1183
  %1338 = vmatmul.mubr.bf16.gmra.mxu0 %v1182
  %v1339 = vpop.f32.mrf.mxu0
  %v1340 = vadd.f32 %v1268, %v1339
  %v1341 = vpop.f32.mrf.mxu0
  %v1342 = vpop.f32.mrf.mxu0
  %v1343 = vadd.f32 %v1271, %v1342
  %v1344 = vpop.f32.mrf.mxu0
  %1345 = vmatprep.mubr.bf16.mxu0 %v1188
  %1346 = vmatmul.mubr.bf16.gmra.mxu0 %v1187
  %v1347 = vpop.f32.mrf.mxu0
  %v1348 = vadd.f32 %v1276, %v1347
  %v1349 = vpop.f32.mrf.mxu0
  %v1350 = vpop.f32.mrf.mxu0
  %v1351 = vadd.f32 %v1279, %v1350
  %v1352 = vpop.f32.mrf.mxu0
  %1353 = vmatprep.mubr.bf16.mxu0 %v1193
  %1354 = vmatmul.mubr.bf16.gmra.mxu0 %v1192
  %v1355 = vpop.f32.mrf.mxu0
  %v1356 = vadd.f32 %v1284, %v1355
  %v1357 = vpop.f32.mrf.mxu0
  %v1358 = vpop.f32.mrf.mxu0
  %v1359 = vadd.f32 %v1287, %v1358
  %v1360 = vpop.f32.mrf.mxu0
  %1361 = vmatprep.mubr.bf16.mxu0 %v1198
  %1362 = vmatmul.mubr.bf16.gmra.mxu0 %v1197
  %v1363 = vpop.f32.mrf.mxu0
  %v1364 = vadd.f32 %v1292, %v1363
  %v1365 = vpop.f32.mrf.mxu0
  %v1366 = vpop.f32.mrf.mxu0
  %v1367 = vpop.f32.mrf.mxu0
  %1368 = vdwg.mxu0
  %1369 = vmatprep.subr.bf16.mxu0 0
  %1370 = vmatpush1.bf16.msra.mxu0 %v443
  %1371 = vmatprep.subr.bf16.mxu0 0
  %1372 = vmatpush1.bf16.msra.mxu0 %v442
  %1373 = vmatprep.subr.bf16.mxu0 0
  %1374 = vmatpush1.bf16.msra.mxu0 %v441
  %1375 = vmatprep.subr.bf16.mxu0 0
  %1376 = vmatpush1.bf16.msra.mxu0 %v440
  %1377 = vmatprep.subr.bf16.mxu0 0
  %1378 = vmatpush1.bf16.msra.mxu0 %v439
  %1379 = vmatprep.subr.bf16.mxu0 0
  %1380 = vmatpush1.bf16.msra.mxu0 %v438
  %1381 = vmatprep.subr.bf16.mxu0 0
  %1382 = vmatpush1.bf16.msra.mxu0 %v437
  %1383 = vmatprep.subr.bf16.mxu0 0
  %1384 = vmatpush1.bf16.msra.mxu0 %v436
  %1385 = vmatprep.subr.bf16.mxu0 0
  %1386 = vmatpush2.bf16.msra.mxu0 0
  %1387 = vmatprep.subr.bf16.mxu0 0
  %1388 = vmatpush2.bf16.msra.mxu0 0
  %1389 = vmatprep.subr.bf16.mxu0 0
  %1390 = vmatpush2.bf16.msra.mxu0 0
  %1391 = vmatprep.subr.bf16.mxu0 0
  %1392 = vmatpush2.bf16.msra.mxu0 0
  %1393 = vmatprep.subr.bf16.mxu0 0
  %1394 = vmatpush2.bf16.msra.mxu0 0
  %1395 = vmatprep.subr.bf16.mxu0 0
  %1396 = vmatpush2.bf16.msra.mxu0 0
  %1397 = vmatprep.subr.bf16.mxu0 0
  %1398 = vmatpush2.bf16.msra.mxu0 0
  %1399 = vmatprep.subr.bf16.mxu0 0
  %1400 = vmatpush2.bf16.msra.mxu0 0
  %1401 = vmatprep.mubr.bf16.mxu0 0
  %1402 = vmatmul.mubr.bf16.gmra.mxu0 %v1179
  %v1403 = vpop.f32.mrf.mxu0
  %v1404 = vadd.f32 %v1332, %v1403
  %v1405 = vpop.f32.mrf.mxu0
  %v1406 = vpop.f32.mrf.mxu0
  %v1407 = vadd.f32 %v1335, %v1406
  %v1408 = vpop.f32.mrf.mxu0
  %1409 = vmatprep.mubr.bf16.mxu0 0
  %1410 = vmatmul.mubr.bf16.gmra.mxu0 %v1184
  %v1411 = vpop.f32.mrf.mxu0
  %v1412 = vadd.f32 %v1340, %v1411
  %v1413 = vpop.f32.mrf.mxu0
  %v1414 = vpop.f32.mrf.mxu0
  %v1415 = vadd.f32 %v1343, %v1414
  %v1416 = vpop.f32.mrf.mxu0
  %1417 = vmatprep.mubr.bf16.mxu0 0
  %1418 = vmatmul.mubr.bf16.gmra.mxu0 %v1189
  %v1419 = vpop.f32.mrf.mxu0
  %v1420 = vadd.f32 %v1348, %v1419
  %v1421 = vpop.f32.mrf.mxu0
  %v1422 = vpop.f32.mrf.mxu0
  %v1423 = vadd.f32 %v1351, %v1422
  %v1424 = vpop.f32.mrf.mxu0
  %1425 = vmatprep.mubr.bf16.mxu0 0
  %1426 = vmatmul.mubr.bf16.gmra.mxu0 %v1194
  %v1427 = vpop.f32.mrf.mxu0
  %v1428 = vadd.f32 %v1356, %v1427
  %v1429 = vpop.f32.mrf.mxu0
  %v1430 = vpop.f32.mrf.mxu0
  %v1431 = vadd.f32 %v1359, %v1430
  %v1432 = vpop.f32.mrf.mxu0
  %1433 = vmatprep.mubr.bf16.mxu0 0
  %1434 = vmatmul.mubr.bf16.gmra.mxu0 %v1199
  %v1435 = vpop.f32.mrf.mxu0
  %v1436 = vadd.f32 %v1364, %v1435
  %v1437 = vpop.f32.mrf.mxu0
  %v1438 = vpop.f32.mrf.mxu0
  %v1439 = vpop.f32.mrf.mxu0
  %1440 = vdwg.mxu0
  %v1441 = vmax.f32 %v1066, %v1404
  %v1442 = vmax.f32 %v1067, %v1407
  %v1443 = vmax.f32 %v1068, %v1412
  %v1444 = vmax.f32 %v1069, %v1415
  %v1445 = vmax.f32 %v1070, %v1420
  %v1446 = vmax.f32 %v1071, %v1423
  %v1447 = vmax.f32 %v1072, %v1428
  %v1448 = vmax.f32 %v1073, %v1431
  %v1449 = vmax.f32 %v1074, %v1436
  %s1450 = scalar_lea.vmem %s0, 540
  %v1451 = vld [vmem:[%s1450] sm:$0xff]
  %v1452 = vld [vmem:[%s1450 + $0x8] sm:$0xff]
  %v1453 = vld [vmem:[%s1450 + $0x10] sm:$0xf]
  %v1454 = vld [vmem:[%s1450 + $0x14] sm:$0xff]
  %v1455 = vld [vmem:[%s1450 + $0x1c] sm:$0xff]
  %v1456 = vld [vmem:[%s1450 + $0x24] sm:$0xf]
  %v1457 = vld [vmem:[%s1450 + $0x28] sm:$0xff]
  %v1458 = vld [vmem:[%s1450 + $0x30] sm:$0xff]
  %v1459 = vld [vmem:[%s1450 + $0x38] sm:$0xf]
  %v1460 = vld [vmem:[%s1450 + $0x3c] sm:$0xff]
  %v1461 = vld [vmem:[%s1450 + $0x44] sm:$0xff]
  %v1462 = vld [vmem:[%s1450 + $0x4c] sm:$0xf]
  %v1463 = vld [vmem:[%s1450 + $0x50] sm:$0xff]
  %v1464 = vld [vmem:[%s1450 + $0x58] sm:$0xff]
  %v1465 = vld [vmem:[%s1450 + $0x60] sm:$0xf]
  %v1466 = vld [vmem:[%s1450 + $0x64] sm:$0xff]
  %v1467 = vld [vmem:[%s1450 + $0x6c] sm:$0xff]
  %v1468 = vld [vmem:[%s1450 + $0x74] sm:$0xf]
  %v1469 = vld [vmem:[%s1450 + $0x78] sm:$0xff]
  %v1470 = vld [vmem:[%s1450 + $0x80] sm:$0xff]
  %v1471 = vld [vmem:[%s1450 + $0x88] sm:$0xf]
  %v1472 = vld [vmem:[%s1450 + $0x8c] sm:$0xff]
  %v1473 = vld [vmem:[%s1450 + $0x94] sm:$0xff]
  %v1474 = vld [vmem:[%s1450 + $0x9c] sm:$0xf]
  %v1475 = vld [vmem:[%s1450 + $0xa0] sm:$0xff]
  %v1476 = vld [vmem:[%s1450 + $0xa8] sm:$0xff]
  %v1477 = vld [vmem:[%s1450 + $0xb0] sm:$0xf]
  %v1505 = vunpack.c.l.b16 %v1451
  %v1506 = vunpack.c.h.b16 %v1451
  %v1507 = vunpack.c.l.b16 %v1452
  %v1508 = vunpack.c.h.b16 %v1452
  %v1509 = vunpack.c.l.b16 %v1453
  %v1510 = vunpack.c.l.b16 %v1454
  %v1511 = vunpack.c.h.b16 %v1454
  %v1512 = vunpack.c.l.b16 %v1455
  %v1513 = vunpack.c.h.b16 %v1455
  %v1514 = vunpack.c.l.b16 %v1456
  %v1515 = vunpack.c.l.b16 %v1457
  %v1516 = vunpack.c.h.b16 %v1457
  %v1517 = vunpack.c.l.b16 %v1458
  %v1518 = vunpack.c.h.b16 %v1458
  %v1519 = vunpack.c.l.b16 %v1459
  %v1520 = vunpack.c.l.b16 %v1460
  %v1521 = vunpack.c.h.b16 %v1460
  %v1522 = vunpack.c.l.b16 %v1461
  %v1523 = vunpack.c.h.b16 %v1461
  %v1524 = vunpack.c.l.b16 %v1462
  %v1525 = vunpack.c.l.b16 %v1463
  %v1526 = vunpack.c.h.b16 %v1463
  %v1527 = vunpack.c.l.b16 %v1464
  %v1528 = vunpack.c.h.b16 %v1464
  %v1529 = vunpack.c.l.b16 %v1465
  %v1530 = vunpack.c.l.b16 %v1466
  %v1531 = vunpack.c.h.b16 %v1466
  %v1532 = vunpack.c.l.b16 %v1467
  %v1533 = vunpack.c.h.b16 %v1467
  %v1534 = vunpack.c.l.b16 %v1468
  %v1535 = vunpack.c.l.b16 %v1469
  %v1536 = vunpack.c.h.b16 %v1469
  %v1537 = vunpack.c.l.b16 %v1470
  %v1538 = vunpack.c.h.b16 %v1470
  %v1539 = vunpack.c.l.b16 %v1471
  %v1540 = vunpack.c.l.b16 %v1472
  %v1541 = vunpack.c.h.b16 %v1472
  %v1542 = vunpack.c.l.b16 %v1473
  %v1543 = vunpack.c.h.b16 %v1473
  %v1544 = vunpack.c.l.b16 %v1474
  %v1545 = vunpack.c.l.b16 %v1475
  %v1546 = vunpack.c.h.b16 %v1475
  %v1547 = vunpack.c.l.b16 %v1476
  %v1548 = vunpack.c.h.b16 %v1476
  %v1549 = vunpack.c.l.b16 %v1477
  %v1550 = vpack.c.b16 %v1510, %v1505
  %v1551 = vpack.c.b16 %v1511, %v1506
  %v1552 = vpack.c.b16 %v1512, %v1507
  %v1553 = vpack.c.b16 %v1513, %v1508
  %v1554 = vpack.c.b16 %v1514, %v1509
  %v1555 = vpack.c.b16 %v1520, %v1515
  %v1556 = vpack.c.b16 %v1521, %v1516
  %v1557 = vpack.c.b16 %v1522, %v1517
  %v1558 = vpack.c.b16 %v1523, %v1518
  %v1559 = vpack.c.b16 %v1524, %v1519
  %v1560 = vpack.c.b16 %v1530, %v1525
  %v1561 = vpack.c.b16 %v1531, %v1526
  %v1562 = vpack.c.b16 %v1532, %v1527
  %v1563 = vpack.c.b16 %v1533, %v1528
  %v1564 = vpack.c.b16 %v1534, %v1529
  %v1565 = vpack.c.b16 %v1540, %v1535
  %v1566 = vpack.c.b16 %v1541, %v1536
  %v1567 = vpack.c.b16 %v1542, %v1537
  %v1568 = vpack.c.b16 %v1543, %v1538
  %v1569 = vpack.c.b16 %v1544, %v1539
  %v1570 = vpack.c.b16 %v1545, %v1545
  %v1571 = vpack.c.b16 %v1546, %v1546
  %v1572 = vpack.c.b16 %v1547, %v1547
  %v1573 = vpack.c.b16 %v1548, %v1548
  %v1574 = vpack.c.b16 %v1549, %v1549
  %1600 = vmatprep.subr.bf16.mxu0 0
  %1601 = vmatpush1.bf16.msra.mxu0 %v411
  %1602 = vmatprep.subr.bf16.mxu0 0
  %1603 = vmatpush1.bf16.msra.mxu0 %v410
  %1604 = vmatprep.subr.bf16.mxu0 0
  %1605 = vmatpush1.bf16.msra.mxu0 %v409
  %1606 = vmatprep.subr.bf16.mxu0 0
  %1607 = vmatpush1.bf16.msra.mxu0 %v408
  %1608 = vmatprep.subr.bf16.mxu0 0
  %1609 = vmatpush1.bf16.msra.mxu0 %v407
  %1610 = vmatprep.subr.bf16.mxu0 0
  %1611 = vmatpush1.bf16.msra.mxu0 %v406
  %1612 = vmatprep.subr.bf16.mxu0 0
  %1613 = vmatpush1.bf16.msra.mxu0 %v405
  %1614 = vmatprep.subr.bf16.mxu0 0
  %1615 = vmatpush1.bf16.msra.mxu0 %v404
  %1616 = vmatprep.subr.bf16.mxu0 0
  %1617 = vmatpush2.bf16.msra.mxu0 %v419
  %1618 = vmatprep.subr.bf16.mxu0 0
  %1619 = vmatpush2.bf16.msra.mxu0 %v418
  %1620 = vmatprep.subr.bf16.mxu0 0
  %1621 = vmatpush2.bf16.msra.mxu0 %v417
  %1622 = vmatprep.subr.bf16.mxu0 0
  %1623 = vmatpush2.bf16.msra.mxu0 %v416
  %1624 = vmatprep.subr.bf16.mxu0 0
  %1625 = vmatpush2.bf16.msra.mxu0 %v415
  %1626 = vmatprep.subr.bf16.mxu0 0
  %1627 = vmatpush2.bf16.msra.mxu0 %v414
  %1628 = vmatprep.subr.bf16.mxu0 0
  %1629 = vmatpush2.bf16.msra.mxu0 %v413
  %1630 = vmatprep.subr.bf16.mxu0 0
  %1631 = vmatpush2.bf16.msra.mxu0 %v412
  %1632 = vmatprep.mubr.bf16.mxu0 %v1551
  %1633 = vmatmul.mubr.bf16.gmra.mxu0 %v1550
  %v1634 = vpop.f32.mrf.mxu0
  %v1635 = vadd.f32 0.0, %v1634
  %v1636 = vpop.f32.mrf.mxu0
  %v1637 = vpop.f32.mrf.mxu0
  %v1638 = vadd.f32 0.0, %v1637
  %v1639 = vpop.f32.mrf.mxu0
  %1640 = vmatprep.mubr.bf16.mxu0 %v1556
  %1641 = vmatmul.mubr.bf16.gmra.mxu0 %v1555
  %v1642 = vpop.f32.mrf.mxu0
  %v1643 = vadd.f32 0.0, %v1642
  %v1644 = vpop.f32.mrf.mxu0
  %v1645 = vpop.f32.mrf.mxu0
  %v1646 = vadd.f32 0.0, %v1645
  %v1647 = vpop.f32.mrf.mxu0
  %1648 = vmatprep.mubr.bf16.mxu0 %v1561
  %1649 = vmatmul.mubr.bf16.gmra.mxu0 %v1560
  %v1650 = vpop.f32.mrf.mxu0
  %v1651 = vadd.f32 0.0, %v1650
  %v1652 = vpop.f32.mrf.mxu0
  %v1653 = vpop.f32.mrf.mxu0
  %v1654 = vadd.f32 0.0, %v1653
  %v1655 = vpop.f32.mrf.mxu0
  %1656 = vmatprep.mubr.bf16.mxu0 %v1566
  %1657 = vmatmul.mubr.bf16.gmra.mxu0 %v1565
  %v1658 = vpop.f32.mrf.mxu0
  %v1659 = vadd.f32 0.0, %v1658
  %v1660 = vpop.f32.mrf.mxu0
  %v1661 = vpop.f32.mrf.mxu0
  %v1662 = vadd.f32 0.0, %v1661
  %v1663 = vpop.f32.mrf.mxu0
  %1664 = vmatprep.mubr.bf16.mxu0 %v1571
  %1665 = vmatmul.mubr.bf16.gmra.mxu0 %v1570
  %v1666 = vpop.f32.mrf.mxu0
  %v1667 = vadd.f32 0.0, %v1666
  %v1668 = vpop.f32.mrf.mxu0
  %v1669 = vpop.f32.mrf.mxu0
  %v1670 = vpop.f32.mrf.mxu0
  %1671 = vdwg.mxu0
  %1672 = vmatprep.subr.bf16.mxu0 0
  %1673 = vmatpush1.bf16.msra.mxu0 %v427
  %1674 = vmatprep.subr.bf16.mxu0 0
  %1675 = vmatpush1.bf16.msra.mxu0 %v426
  %1676 = vmatprep.subr.bf16.mxu0 0
  %1677 = vmatpush1.bf16.msra.mxu0 %v425
  %1678 = vmatprep.subr.bf16.mxu0 0
  %1679 = vmatpush1.bf16.msra.mxu0 %v424
  %1680 = vmatprep.subr.bf16.mxu0 0
  %1681 = vmatpush1.bf16.msra.mxu0 %v423
  %1682 = vmatprep.subr.bf16.mxu0 0
  %1683 = vmatpush1.bf16.msra.mxu0 %v422
  %1684 = vmatprep.subr.bf16.mxu0 0
  %1685 = vmatpush1.bf16.msra.mxu0 %v421
  %1686 = vmatprep.subr.bf16.mxu0 0
  %1687 = vmatpush1.bf16.msra.mxu0 %v420
  %1688 = vmatprep.subr.bf16.mxu0 0
  %1689 = vmatpush2.bf16.msra.mxu0 %v435
  %1690 = vmatprep.subr.bf16.mxu0 0
  %1691 = vmatpush2.bf16.msra.mxu0 %v434
  %1692 = vmatprep.subr.bf16.mxu0 0
  %1693 = vmatpush2.bf16.msra.mxu0 %v433
  %1694 = vmatprep.subr.bf16.mxu0 0
  %1695 = vmatpush2.bf16.msra.mxu0 %v432
  %1696 = vmatprep.subr.bf16.mxu0 0
  %1697 = vmatpush2.bf16.msra.mxu0 %v431
  %1698 = vmatprep.subr.bf16.mxu0 0
  %1699 = vmatpush2.bf16.msra.mxu0 %v430
  %1700 = vmatprep.subr.bf16.mxu0 0
  %1701 = vmatpush2.bf16.msra.mxu0 %v429
  %1702 = vmatprep.subr.bf16.mxu0 0
  %1703 = vmatpush2.bf16.msra.mxu0 %v428
  %1704 = vmatprep.mubr.bf16.mxu0 %v1553
  %1705 = vmatmul.mubr.bf16.gmra.mxu0 %v1552
  %v1706 = vpop.f32.mrf.mxu0
  %v1707 = vadd.f32 %v1635, %v1706
  %v1708 = vpop.f32.mrf.mxu0
  %v1709 = vpop.f32.mrf.mxu0
  %v1710 = vadd.f32 %v1638, %v1709
  %v1711 = vpop.f32.mrf.mxu0
  %1712 = vmatprep.mubr.bf16.mxu0 %v1558
  %1713 = vmatmul.mubr.bf16.gmra.mxu0 %v1557
  %v1714 = vpop.f32.mrf.mxu0
  %v1715 = vadd.f32 %v1643, %v1714
  %v1716 = vpop.f32.mrf.mxu0
  %v1717 = vpop.f32.mrf.mxu0
  %v1718 = vadd.f32 %v1646, %v1717
  %v1719 = vpop.f32.mrf.mxu0
  %1720 = vmatprep.mubr.bf16.mxu0 %v1563
  %1721 = vmatmul.mubr.bf16.gmra.mxu0 %v1562
  %v1722 = vpop.f32.mrf.mxu0
  %v1723 = vadd.f32 %v1651, %v1722
  %v1724 = vpop.f32.mrf.mxu0
  %v1725 = vpop.f32.mrf.mxu0
  %v1726 = vadd.f32 %v1654, %v1725
  %v1727 = vpop.f32.mrf.mxu0
  %1728 = vmatprep.mubr.bf16.mxu0 %v1568
  %1729 = vmatmul.mubr.bf16.gmra.mxu0 %v1567
  %v1730 = vpop.f32.mrf.mxu0
  %v1731 = vadd.f32 %v1659, %v1730
  %v1732 = vpop.f32.mrf.mxu0
  %v1733 = vpop.f32.mrf.mxu0
  %v1734 = vadd.f32 %v1662, %v1733
  %v1735 = vpop.f32.mrf.mxu0
  %1736 = vmatprep.mubr.bf16.mxu0 %v1573
  %1737 = vmatmul.mubr.bf16.gmra.mxu0 %v1572
  %v1738 = vpop.f32.mrf.mxu0
  %v1739 = vadd.f32 %v1667, %v1738
  %v1740 = vpop.f32.mrf.mxu0
  %v1741 = vpop.f32.mrf.mxu0
  %v1742 = vpop.f32.mrf.mxu0
  %1743 = vdwg.mxu0
  %1744 = vmatprep.subr.bf16.mxu0 0
  %1745 = vmatpush1.bf16.msra.mxu0 %v443
  %1746 = vmatprep.subr.bf16.mxu0 0
  %1747 = vmatpush1.bf16.msra.mxu0 %v442
  %1748 = vmatprep.subr.bf16.mxu0 0
  %1749 = vmatpush1.bf16.msra.mxu0 %v441
  %1750 = vmatprep.subr.bf16.mxu0 0
  %1751 = vmatpush1.bf16.msra.mxu0 %v440
  %1752 = vmatprep.subr.bf16.mxu0 0
  %1753 = vmatpush1.bf16.msra.mxu0 %v439
  %1754 = vmatprep.subr.bf16.mxu0 0
  %1755 = vmatpush1.bf16.msra.mxu0 %v438
  %1756 = vmatprep.subr.bf16.mxu0 0
  %1757 = vmatpush1.bf16.msra.mxu0 %v437
  %1758 = vmatprep.subr.bf16.mxu0 0
  %1759 = vmatpush1.bf16.msra.mxu0 %v436
  %1760 = vmatprep.subr.bf16.mxu0 0
  %1761 = vmatpush2.bf16.msra.mxu0 0
  %1762 = vmatprep.subr.bf16.mxu0 0
  %1763 = vmatpush2.bf16.msra.mxu0 0
  %1764 = vmatprep.subr.bf16.mxu0 0
  %1765 = vmatpush2.bf16.msra.mxu0 0
  %1766 = vmatprep.subr.bf16.mxu0 0
  %1767 = vmatpush2.bf16.msra.mxu0 0
  %1768 = vmatprep.subr.bf16.mxu0 0
  %1769 = vmatpush2.bf16.msra.mxu0 0
  %1770 = vmatprep.subr.bf16.mxu0 0
  %1771 = vmatpush2.bf16.msra.mxu0 0
  %1772 = vmatprep.subr.bf16.mxu0 0
  %1773 = vmatpush2.bf16.msra.mxu0 0
  %1774 = vmatprep.subr.bf16.mxu0 0
  %1775 = vmatpush2.bf16.msra.mxu0 0
  %1776 = vmatprep.mubr.bf16.mxu0 0
  %1777 = vmatmul.mubr.bf16.gmra.mxu0 %v1554
  %v1778 = vpop.f32.mrf.mxu0
  %v1779 = vadd.f32 %v1707, %v1778
  %v1780 = vpop.f32.mrf.mxu0
  %v1781 = vpop.f32.mrf.mxu0
  %v1782 = vadd.f32 %v1710, %v1781
  %v1783 = vpop.f32.mrf.mxu0
  %1784 = vmatprep.mubr.bf16.mxu0 0
  %1785 = vmatmul.mubr.bf16.gmra.mxu0 %v1559
  %v1786 = vpop.f32.mrf.mxu0
  %v1787 = vadd.f32 %v1715, %v1786
  %v1788 = vpop.f32.mrf.mxu0
  %v1789 = vpop.f32.mrf.mxu0
  %v1790 = vadd.f32 %v1718, %v1789
  %v1791 = vpop.f32.mrf.mxu0
  %1792 = vmatprep.mubr.bf16.mxu0 0
  %1793 = vmatmul.mubr.bf16.gmra.mxu0 %v1564
  %v1794 = vpop.f32.mrf.mxu0
  %v1795 = vadd.f32 %v1723, %v1794
  %v1796 = vpop.f32.mrf.mxu0
  %v1797 = vpop.f32.mrf.mxu0
  %v1798 = vadd.f32 %v1726, %v1797
  %v1799 = vpop.f32.mrf.mxu0
  %1800 = vmatprep.mubr.bf16.mxu0 0
  %1801 = vmatmul.mubr.bf16.gmra.mxu0 %v1569
  %v1802 = vpop.f32.mrf.mxu0
  %v1803 = vadd.f32 %v1731, %v1802
  %v1804 = vpop.f32.mrf.mxu0
  %v1805 = vpop.f32.mrf.mxu0
  %v1806 = vadd.f32 %v1734, %v1805
  %v1807 = vpop.f32.mrf.mxu0
  %1808 = vmatprep.mubr.bf16.mxu0 0
  %1809 = vmatmul.mubr.bf16.gmra.mxu0 %v1574
  %v1810 = vpop.f32.mrf.mxu0
  %v1811 = vadd.f32 %v1739, %v1810
  %v1812 = vpop.f32.mrf.mxu0
  %v1813 = vpop.f32.mrf.mxu0
  %v1814 = vpop.f32.mrf.mxu0
  %1815 = vdwg.mxu0
  %v1816 = vmax.f32 %v1441, %v1779
  %v1817 = vmax.f32 %v1442, %v1782
  %v1818 = vmax.f32 %v1443, %v1787
  %v1819 = vmax.f32 %v1444, %v1790
  %v1820 = vmax.f32 %v1445, %v1795
  %v1821 = vmax.f32 %v1446, %v1798
  %v1822 = vmax.f32 %v1447, %v1803
  %v1823 = vmax.f32 %v1448, %v1806
  %v1824 = vmax.f32 %v1449, %v1811
  %v1825 = vld [vmem:[%s2] sm:$0x1]
  %v1827 = vlaneseq
  %v1828 = vshrl.u32 %v1827, 7
  %v1829 = vsub.s32 0, %v1828
  %v1830 = vrot.slane %v1825, %v1829
  %v1832 = vadd.f32 %v1816, %v1830
  %v1833 = vadd.f32 %v1817, %v1830
  %v1834 = vadd.f32 %v1818, %v1830
  %v1835 = vadd.f32 %v1819, %v1830
  %v1836 = vadd.f32 %v1820, %v1830
  %v1837 = vadd.f32 %v1821, %v1830
  %v1838 = vadd.f32 %v1822, %v1830
  %v1839 = vadd.f32 %v1823, %v1830
  %v1840 = vadd.f32 %v1824, %v1830
  %v1841 = vmax.f32 %v1832, 0.0
  %v1842 = vmax.f32 %v1833, 0.0
  %v1843 = vmax.f32 %v1834, 0.0
  %v1844 = vmax.f32 %v1835, 0.0
  %v1845 = vmax.f32 %v1836, 0.0
  %v1846 = vmax.f32 %v1837, 0.0
  %v1847 = vmax.f32 %v1838, 0.0
  %v1848 = vmax.f32 %v1839, 0.0
  %v1849 = vmax.f32 %v1840, 0.0
  %v1850 = vpack.c.bf16 %v1842, %v1841
  %v1851 = vpack.c.bf16 %v1844, %v1843
  %v1852 = vpack.c.bf16 %v1846, %v1845
  %v1853 = vpack.c.bf16 %v1848, %v1847
  %v1854 = vpack.c.bf16 %v1849, %v1849
  %v1860 = vunpack.c.l.b16 %v1850
  %v1861 = vunpack.c.h.b16 %v1850
  %v1862 = vunpack.c.l.b16 %v1851
  %v1863 = vunpack.c.h.b16 %v1851
  %v1864 = vunpack.c.l.b16 %v1852
  %v1865 = vunpack.c.h.b16 %v1852
  %v1866 = vunpack.c.l.b16 %v1853
  %v1867 = vunpack.c.h.b16 %v1853
  %v1868 = vunpack.c.l.b16 %v1854
  %v1869 = vpack.c.b16 %v1860, %v1860
  %v1870 = vpack.c.b16 %v1861, %v1861
  %v1871 = vpack.c.b16 %v1862, %v1862
  %v1872 = vpack.c.b16 %v1863, %v1863
  %v1873 = vpack.c.b16 %v1864, %v1864
  %v1874 = vpack.c.b16 %v1865, %v1865
  %v1875 = vpack.c.b16 %v1866, %v1866
  %v1876 = vpack.c.b16 %v1867, %v1867
  %v1877 = vpack.c.b16 %v1868, %v1868
  %1887 = vst [vmem:[%s3] sm:$0xf] %v1869
  %1888 = vst [vmem:[%s3 + $0x4] sm:$0xf] %v1870
  %1889 = vst [vmem:[%s3 + $0x8] sm:$0xf] %v1871
  %1890 = vst [vmem:[%s3 + $0xc] sm:$0xf] %v1872
  %1891 = vst [vmem:[%s3 + $0x10] sm:$0xf] %v1873
  %1892 = vst [vmem:[%s3 + $0x14] sm:$0xf] %v1874
  %1893 = vst [vmem:[%s3 + $0x18] sm:$0xf] %v1875
  %1894 = vst [vmem:[%s3 + $0x1c] sm:$0xf] %v1876
  %1895 = vst [vmem:[%s3 + $0x20] sm:$0xf] %v1877
  // Predicated region
  $region14: #{net_forward.4} parent=0 // pred_check
    _
  $region15: #{net_forward.4} parent=0 // pred_check_branch
    %1897 = sbr.rel (0) target = $region17
  $region16: #{net_forward.4} parent=0 // pred_region
    _
  $region17: #{net_forward.4} parent=0 // pred_fallthru
    _
  // Predicated region
  $region18: #{net_forward.4} parent=0 // pred_check
    _
  $region19: #{net_forward.4} parent=0 // pred_check_branch
    %1899 = sbr.rel (0) target = $region21
  $region20: #{net_forward.4} parent=0 // pred_region
    _
  $region21: #{net_forward.4} parent=0 // pred_fallthru
    _

// kernel: net_forward.5
$region0: #{net_forward.5}
  #allocation0 [shape = 'u32[]', space=smem, size = 0x4, offset = 0x4, fixed_abs, tag = 'smem constant byte address 0x4 - core index']
  #allocation1 [shape = 'u32[144,128]{1,0:T(1,128)}', space=vmem, size = 0x12000, scoped, tag = 'internal scratch']
  %s0 = inlined_call_operand.vmem [shape: bf16[4,8,512], index: 0, kind: input, shape index: {}]
  %s1 = inlined_call_operand.vmem [shape: bf16[512,256], index: 1, kind: input, shape index: {}]
  %s2 = inlined_call_operand.vmem [shape: f32[1,256], index: 2, kind: input, shape index: {}]
  %s3 = inlined_call_operand.vmem [shape: f32[256,128], index: 3, kind: input, shape index: {}]
  %s4 = inlined_call_operand.vmem [shape: f32[1,128], index: 4, kind: input, shape index: {}]
  %s5 = inlined_call_operand.hbm [shape: f32[2,128], index: 5, kind: output, shape index: {}]
  %s6 = sld [smem:[#allocation0]]
  $region30: #{net_forward.5} parent=0
    _
  %s8 = ssub.s32 1, %s6
  %s9 = scalar_select 0, %s8, %s6
  $region1: #{net_forward.5} parent=0
    #allocation2 [shape = 'u8[1024]{0}', space=vmem, size = 0x400, scoped, tag = 'output window, operand 0, single buffered']
    #allocation3 [shape = 's32[1]{0}', space=sflag, size = 0x4, scoped, tag = 'scoped memory for net_forward.5']
    %10 = vsyncpa [#allocation3], 0
    // Predicated region
    $region2: #{net_forward.5} parent=1 // pred_check
      _
    $region3: #{net_forward.5} parent=1 // pred_check_branch
      %12 = sbr.rel (0) target = $region5
    $region4: #{net_forward.5} parent=1 // pred_region
      _
    $region5: #{net_forward.5} parent=1 // pred_fallthru
      _
    // Predicated region
    $region6: #{net_forward.5} parent=1 // pred_check
      _
    $region7: #{net_forward.5} parent=1 // pred_check_branch
      %14 = sbr.rel (0) target = $region9
    $region8: #{net_forward.5} parent=1 // pred_region
      _
    $region9: #{net_forward.5} parent=1 // pred_fallthru
      _
    // Predicated region
    $region10: #{net_forward.5} parent=1 // pred_check
      _
    $region11: #{net_forward.5} parent=1 // pred_check_branch
      %16 = sbr.rel (0) target = $region13
    $region12: #{net_forward.5} parent=1 // pred_region
      _
    $region13: #{net_forward.5} parent=1 // pred_fallthru
      _
    // Predicated region
    $region14: #{net_forward.5} parent=1 // pred_check
      _
    $region15: #{net_forward.5} parent=1 // pred_check_branch
      %18 = sbr.rel (0) target = $region17
    $region16: #{net_forward.5} parent=1 // pred_region
      _
    $region17: #{net_forward.5} parent=1 // pred_fallthru
      _
    // Predicated region
    $region18: #{net_forward.5} parent=1 // pred_check
      _
    $region19: #{net_forward.5} parent=1 // pred_check_branch
      %20 = sbr.rel (0) target = $region21
    $region20: #{net_forward.5} parent=1 // pred_region
      _
    $region21: #{net_forward.5} parent=1 // pred_fallthru
      _
    %v21 = vld [vmem:[%s1] sm:$0xff]
    %v22 = vld [vmem:[%s1 + $0x8] sm:$0xff]
    %v23 = vld [vmem:[%s1 + $0x10] sm:$0xff]
    %v24 = vld [vmem:[%s1 + $0x18] sm:$0xff]
    %v25 = vld [vmem:[%s1 + $0x20] sm:$0xff]
    %v26 = vld [vmem:[%s1 + $0x28] sm:$0xff]
    %v27 = vld [vmem:[%s1 + $0x30] sm:$0xff]
    %v28 = vld [vmem:[%s1 + $0x38] sm:$0xff]
    %v29 = vld [vmem:[%s1 + $0x40] sm:$0xff]
    %v30 = vld [vmem:[%s1 + $0x48] sm:$0xff]
    %v31 = vld [vmem:[%s1 + $0x50] sm:$0xff]
    %v32 = vld [vmem:[%s1 + $0x58] sm:$0xff]
    %v33 = vld [vmem:[%s1 + $0x60] sm:$0xff]
    %v34 = vld [vmem:[%s1 + $0x68] sm:$0xff]
    %v35 = vld [vmem:[%s1 + $0x70] sm:$0xff]
    %v36 = vld [vmem:[%s1 + $0x78] sm:$0xff]
    %v37 = vld [vmem:[%s1 + $0x80] sm:$0xff]
    %v38 = vld [vmem:[%s1 + $0x88] sm:$0xff]
    %v39 = vld [vmem:[%s1 + $0x90] sm:$0xff]
    %v40 = vld [vmem:[%s1 + $0x98] sm:$0xff]
    %v41 = vld [vmem:[%s1 + $0xa0] sm:$0xff]
    %v42 = vld [vmem:[%s1 + $0xa8] sm:$0xff]
    %v43 = vld [vmem:[%s1 + $0xb0] sm:$0xff]
    %v44 = vld [vmem:[%s1 + $0xb8] sm:$0xff]
    %v45 = vld [vmem:[%s1 + $0xc0] sm:$0xff]
    %v46 = vld [vmem:[%s1 + $0xc8] sm:$0xff]
    %v47 = vld [vmem:[%s1 + $0xd0] sm:$0xff]
    %v48 = vld [vmem:[%s1 + $0xd8] sm:$0xff]
    %v49 = vld [vmem:[%s1 + $0xe0] sm:$0xff]
    %v50 = vld [vmem:[%s1 + $0xe8] sm:$0xff]
    %v51 = vld [vmem:[%s1 + $0xf0] sm:$0xff]
    %v52 = vld [vmem:[%s1 + $0xf8] sm:$0xff]
    %v53 = vld [vmem:[%s1 + $0x100] sm:$0xff]
    %v54 = vld [vmem:[%s1 + $0x108] sm:$0xff]
    %v55 = vld [vmem:[%s1 + $0x110] sm:$0xff]
    %v56 = vld [vmem:[%s1 + $0x118] sm:$0xff]
    %v57 = vld [vmem:[%s1 + $0x120] sm:$0xff]
    %v58 = vld [vmem:[%s1 + $0x128] sm:$0xff]
    %v59 = vld [vmem:[%s1 + $0x130] sm:$0xff]
    %v60 = vld [vmem:[%s1 + $0x138] sm:$0xff]
    %v61 = vld [vmem:[%s1 + $0x140] sm:$0xff]
    %v62 = vld [vmem:[%s1 + $0x148] sm:$0xff]
    %v63 = vld [vmem:[%s1 + $0x150] sm:$0xff]
    %v64 = vld [vmem:[%s1 + $0x158] sm:$0xff]
    %v65 = vld [vmem:[%s1 + $0x160] sm:$0xff]
    %v66 = vld [vmem:[%s1 + $0x168] sm:$0xff]
    %v67 = vld [vmem:[%s1 + $0x170] sm:$0xff]
    %v68 = vld [vmem:[%s1 + $0x178] sm:$0xff]
    %v69 = vld [vmem:[%s1 + $0x180] sm:$0xff]
    %v70 = vld [vmem:[%s1 + $0x188] sm:$0xff]
    %v71 = vld [vmem:[%s1 + $0x190] sm:$0xff]
    %v72 = vld [vmem:[%s1 + $0x198] sm:$0xff]
    %v73 = vld [vmem:[%s1 + $0x1a0] sm:$0xff]
    %v74 = vld [vmem:[%s1 + $0x1a8] sm:$0xff]
    %v75 = vld [vmem:[%s1 + $0x1b0] sm:$0xff]
    %v76 = vld [vmem:[%s1 + $0x1b8] sm:$0xff]
    %v77 = vld [vmem:[%s1 + $0x1c0] sm:$0xff]
    %v78 = vld [vmem:[%s1 + $0x1c8] sm:$0xff]
    %v79 = vld [vmem:[%s1 + $0x1d0] sm:$0xff]
    %v80 = vld [vmem:[%s1 + $0x1d8] sm:$0xff]
    %v81 = vld [vmem:[%s1 + $0x1e0] sm:$0xff]
    %v82 = vld [vmem:[%s1 + $0x1e8] sm:$0xff]
    %v83 = vld [vmem:[%s1 + $0x1f0] sm:$0xff]
    %v84 = vld [vmem:[%s1 + $0x1f8] sm:$0xff]
    %v85 = vld [vmem:[%s0] sm:$0xff]
    %v86 = vld [vmem:[%s0 + $0x8] sm:$0xff]
    %v89 = vunpack.c.l.b16 %v85
    %v90 = vunpack.c.h.b16 %v85
    %v91 = vunpack.c.l.b16 %v86
    %v92 = vunpack.c.h.b16 %v86
    %v93 = vpack.c.b16 %v89, %v89
    %v94 = vpack.c.b16 %v90, %v90
    %v95 = vpack.c.b16 %v91, %v91
    %v96 = vpack.c.b16 %v92, %v92
    %v165 = vunpack.c.l.b16 %v21
    %v166 = vunpack.c.h.b16 %v21
    %v167 = vunpack.c.l.b16 %v22
    %v168 = vunpack.c.h.b16 %v22
    %v169 = vunpack.c.l.b16 %v23
    %v170 = vunpack.c.h.b16 %v23
    %v171 = vunpack.c.l.b16 %v24
    %v172 = vunpack.c.h.b16 %v24
    %v173 = vunpack.c.l.b16 %v25
    %v174 = vunpack.c.h.b16 %v25
    %v175 = vunpack.c.l.b16 %v26
    %v176 = vunpack.c.h.b16 %v26
    %v177 = vunpack.c.l.b16 %v27
    %v178 = vunpack.c.h.b16 %v27
    %v179 = vunpack.c.l.b16 %v28
    %v180 = vunpack.c.h.b16 %v28
    %v181 = vunpack.c.l.b16 %v29
    %v182 = vunpack.c.h.b16 %v29
    %v183 = vunpack.c.l.b16 %v30
    %v184 = vunpack.c.h.b16 %v30
    %v185 = vunpack.c.l.b16 %v31
    %v186 = vunpack.c.h.b16 %v31
    %v187 = vunpack.c.l.b16 %v32
    %v188 = vunpack.c.h.b16 %v32
    %v189 = vunpack.c.l.b16 %v33
    %v190 = vunpack.c.h.b16 %v33
    %v191 = vunpack.c.l.b16 %v34
    %v192 = vunpack.c.h.b16 %v34
    %v193 = vunpack.c.l.b16 %v35
    %v194 = vunpack.c.h.b16 %v35
    %v195 = vunpack.c.l.b16 %v36
    %v196 = vunpack.c.h.b16 %v36
    %v197 = vunpack.c.l.b16 %v37
    %v198 = vunpack.c.h.b16 %v37
    %v199 = vunpack.c.l.b16 %v38
    %v200 = vunpack.c.h.b16 %v38
    %v201 = vunpack.c.l.b16 %v39
    %v202 = vunpack.c.h.b16 %v39
    %v203 = vunpack.c.l.b16 %v40
    %v204 = vunpack.c.h.b16 %v40
    %v205 = vunpack.c.l.b16 %v41
    %v206 = vunpack.c.h.b16 %v41
    %v207 = vunpack.c.l.b16 %v42
    %v208 = vunpack.c.h.b16 %v42
    %v209 = vunpack.c.l.b16 %v43
    %v210 = vunpack.c.h.b16 %v43
    %v211 = vunpack.c.l.b16 %v44
    %v212 = vunpack.c.h.b16 %v44
    %v213 = vunpack.c.l.b16 %v45
    %v214 = vunpack.c.h.b16 %v45
    %v215 = vunpack.c.l.b16 %v46
    %v216 = vunpack.c.h.b16 %v46
    %v217 = vunpack.c.l.b16 %v47
    %v218 = vunpack.c.h.b16 %v47
    %v219 = vunpack.c.l.b16 %v48
    %v220 = vunpack.c.h.b16 %v48
    %v221 = vunpack.c.l.b16 %v49
    %v222 = vunpack.c.h.b16 %v49
    %v223 = vunpack.c.l.b16 %v50
    %v224 = vunpack.c.h.b16 %v50
    %v225 = vunpack.c.l.b16 %v51
    %v226 = vunpack.c.h.b16 %v51
    %v227 = vunpack.c.l.b16 %v52
    %v228 = vunpack.c.h.b16 %v52
    %v229 = vunpack.c.l.b16 %v53
    %v230 = vunpack.c.h.b16 %v53
    %v231 = vunpack.c.l.b16 %v54
    %v232 = vunpack.c.h.b16 %v54
    %v233 = vunpack.c.l.b16 %v55
    %v234 = vunpack.c.h.b16 %v55
    %v235 = vunpack.c.l.b16 %v56
    %v236 = vunpack.c.h.b16 %v56
    %v237 = vunpack.c.l.b16 %v57
    %v238 = vunpack.c.h.b16 %v57
    %v239 = vunpack.c.l.b16 %v58
    %v240 = vunpack.c.h.b16 %v58
    %v241 = vunpack.c.l.b16 %v59
    %v242 = vunpack.c.h.b16 %v59
    %v243 = vunpack.c.l.b16 %v60
    %v244 = vunpack.c.h.b16 %v60
    %v245 = vunpack.c.l.b16 %v61
    %v246 = vunpack.c.h.b16 %v61
    %v247 = vunpack.c.l.b16 %v62
    %v248 = vunpack.c.h.b16 %v62
    %v249 = vunpack.c.l.b16 %v63
    %v250 = vunpack.c.h.b16 %v63
    %v251 = vunpack.c.l.b16 %v64
    %v252 = vunpack.c.h.b16 %v64
    %v253 = vunpack.c.l.b16 %v65
    %v254 = vunpack.c.h.b16 %v65
    %v255 = vunpack.c.l.b16 %v66
    %v256 = vunpack.c.h.b16 %v66
    %v257 = vunpack.c.l.b16 %v67
    %v258 = vunpack.c.h.b16 %v67
    %v259 = vunpack.c.l.b16 %v68
    %v260 = vunpack.c.h.b16 %v68
    %v261 = vunpack.c.l.b16 %v69
    %v262 = vunpack.c.h.b16 %v69
    %v263 = vunpack.c.l.b16 %v70
    %v264 = vunpack.c.h.b16 %v70
    %v265 = vunpack.c.l.b16 %v71
    %v266 = vunpack.c.h.b16 %v71
    %v267 = vunpack.c.l.b16 %v72
    %v268 = vunpack.c.h.b16 %v72
    %v269 = vunpack.c.l.b16 %v73
    %v270 = vunpack.c.h.b16 %v73
    %v271 = vunpack.c.l.b16 %v74
    %v272 = vunpack.c.h.b16 %v74
    %v273 = vunpack.c.l.b16 %v75
    %v274 = vunpack.c.h.b16 %v75
    %v275 = vunpack.c.l.b16 %v76
    %v276 = vunpack.c.h.b16 %v76
    %v277 = vunpack.c.l.b16 %v77
    %v278 = vunpack.c.h.b16 %v77
    %v279 = vunpack.c.l.b16 %v78
    %v280 = vunpack.c.h.b16 %v78
    %v281 = vunpack.c.l.b16 %v79
    %v282 = vunpack.c.h.b16 %v79
    %v283 = vunpack.c.l.b16 %v80
    %v284 = vunpack.c.h.b16 %v80
    %v285 = vunpack.c.l.b16 %v81
    %v286 = vunpack.c.h.b16 %v81
    %v287 = vunpack.c.l.b16 %v82
    %v288 = vunpack.c.h.b16 %v82
    %v289 = vunpack.c.l.b16 %v83
    %v290 = vunpack.c.h.b16 %v83
    %v291 = vunpack.c.l.b16 %v84
    %v292 = vunpack.c.h.b16 %v84
    %v293 = vpack.c.b16 %v167, %v165
    %v294 = vpack.c.b16 %v168, %v166
    %v295 = vpack.c.b16 %v171, %v169
    %v296 = vpack.c.b16 %v172, %v170
    %v297 = vpack.c.b16 %v175, %v173
    %v298 = vpack.c.b16 %v176, %v174
    %v299 = vpack.c.b16 %v179, %v177
    %v300 = vpack.c.b16 %v180, %v178
    %v301 = vpack.c.b16 %v183, %v181
    %v302 = vpack.c.b16 %v184, %v182
    %v303 = vpack.c.b16 %v187, %v185
    %v304 = vpack.c.b16 %v188, %v186
    %v305 = vpack.c.b16 %v191, %v189
    %v306 = vpack.c.b16 %v192, %v190
    %v307 = vpack.c.b16 %v195, %v193
    %v308 = vpack.c.b16 %v196, %v194
    %v309 = vpack.c.b16 %v199, %v197
    %v310 = vpack.c.b16 %v200, %v198
    %v311 = vpack.c.b16 %v203, %v201
    %v312 = vpack.c.b16 %v204, %v202
    %v313 = vpack.c.b16 %v207, %v205
    %v314 = vpack.c.b16 %v208, %v206
    %v315 = vpack.c.b16 %v211, %v209
    %v316 = vpack.c.b16 %v212, %v210
    %v317 = vpack.c.b16 %v215, %v213
    %v318 = vpack.c.b16 %v216, %v214
    %v319 = vpack.c.b16 %v219, %v217
    %v320 = vpack.c.b16 %v220, %v218
    %v321 = vpack.c.b16 %v223, %v221
    %v322 = vpack.c.b16 %v224, %v222
    %v323 = vpack.c.b16 %v227, %v225
    %v324 = vpack.c.b16 %v228, %v226
    %v325 = vpack.c.b16 %v231, %v229
    %v326 = vpack.c.b16 %v232, %v230
    %v327 = vpack.c.b16 %v235, %v233
    %v328 = vpack.c.b16 %v236, %v234
    %v329 = vpack.c.b16 %v239, %v237
    %v330 = vpack.c.b16 %v240, %v238
    %v331 = vpack.c.b16 %v243, %v241
    %v332 = vpack.c.b16 %v244, %v242
    %v333 = vpack.c.b16 %v247, %v245
    %v334 = vpack.c.b16 %v248, %v246
    %v335 = vpack.c.b16 %v251, %v249
    %v336 = vpack.c.b16 %v252, %v250
    %v337 = vpack.c.b16 %v255, %v253
    %v338 = vpack.c.b16 %v256, %v254
    %v339 = vpack.c.b16 %v259, %v257
    %v340 = vpack.c.b16 %v260, %v258
    %v341 = vpack.c.b16 %v263, %v261
    %v342 = vpack.c.b16 %v264, %v262
    %v343 = vpack.c.b16 %v267, %v265
    %v344 = vpack.c.b16 %v268, %v266
    %v345 = vpack.c.b16 %v271, %v269
    %v346 = vpack.c.b16 %v272, %v270
    %v347 = vpack.c.b16 %v275, %v273
    %v348 = vpack.c.b16 %v276, %v274
    %v349 = vpack.c.b16 %v279, %v277
    %v350 = vpack.c.b16 %v280, %v278
    %v351 = vpack.c.b16 %v283, %v281
    %v352 = vpack.c.b16 %v284, %v282
    %v353 = vpack.c.b16 %v287, %v285
    %v354 = vpack.c.b16 %v288, %v286
    %v355 = vpack.c.b16 %v291, %v289
    %v356 = vpack.c.b16 %v292, %v290
    %421 = vmatprep.subr.bf16.mxu0 %v308
    %422 = vmatpush1.bf16.msra.mxu0 %v307
    %423 = vmatprep.subr.bf16.mxu0 %v306
    %424 = vmatpush1.bf16.msra.mxu0 %v305
    %425 = vmatprep.subr.bf16.mxu0 %v304
    %426 = vmatpush1.bf16.msra.mxu0 %v303
    %427 = vmatprep.subr.bf16.mxu0 %v302
    %428 = vmatpush1.bf16.msra.mxu0 %v301
    %429 = vmatprep.subr.bf16.mxu0 %v300
    %430 = vmatpush1.bf16.msra.mxu0 %v299
    %431 = vmatprep.subr.bf16.mxu0 %v298
    %432 = vmatpush1.bf16.msra.mxu0 %v297
    %433 = vmatprep.subr.bf16.mxu0 %v296
    %434 = vmatpush1.bf16.msra.mxu0 %v295
    %435 = vmatprep.subr.bf16.mxu0 %v294
    %436 = vmatpush1.bf16.msra.mxu0 %v293
    %437 = vmatprep.subr.bf16.mxu0 %v324
    %438 = vmatpush2.bf16.msra.mxu0 %v323
    %439 = vmatprep.subr.bf16.mxu0 %v322
    %440 = vmatpush2.bf16.msra.mxu0 %v321
    %441 = vmatprep.subr.bf16.mxu0 %v320
    %442 = vmatpush2.bf16.msra.mxu0 %v319
    %443 = vmatprep.subr.bf16.mxu0 %v318
    %444 = vmatpush2.bf16.msra.mxu0 %v317
    %445 = vmatprep.subr.bf16.mxu0 %v316
    %446 = vmatpush2.bf16.msra.mxu0 %v315
    %447 = vmatprep.subr.bf16.mxu0 %v314
    %448 = vmatpush2.bf16.msra.mxu0 %v313
    %449 = vmatprep.subr.bf16.mxu0 %v312
    %450 = vmatpush2.bf16.msra.mxu0 %v311
    %451 = vmatprep.subr.bf16.mxu0 %v310
    %452 = vmatpush2.bf16.msra.mxu0 %v309
    %453 = vmatprep.mubr.bf16.mxu0 %v94
    %454 = vmatmul.mubr.bf16.gmra.mxu0 %v93
    %v455 = vpop.f32.mrf.mxu0
    %v456 = vadd.f32 0.0, %v455
    %v457 = vpop.f32.mrf.mxu0
    %v458 = vadd.f32 0.0, %v457
    %v459 = vpop.f32.mrf.mxu0
    %v460 = vpop.f32.mrf.mxu0
    %461 = vdwg.mxu0
    %462 = vmatprep.subr.bf16.mxu0 %v340
    %463 = vmatpush1.bf16.msra.mxu0 %v339
    %464 = vmatprep.subr.bf16.mxu0 %v338
    %465 = vmatpush1.bf16.msra.mxu0 %v337
    %466 = vmatprep.subr.bf16.mxu0 %v336
    %467 = vmatpush1.bf16.msra.mxu0 %v335
    %468 = vmatprep.subr.bf16.mxu0 %v334
    %469 = vmatpush1.bf16.msra.mxu0 %v333
    %470 = vmatprep.subr.bf16.mxu0 %v332
    %471 = vmatpush1.bf16.msra.mxu0 %v331
    %472 = vmatprep.subr.bf16.mxu0 %v330
    %473 = vmatpush1.bf16.msra.mxu0 %v329
    %474 = vmatprep.subr.bf16.mxu0 %v328
    %475 = vmatpush1.bf16.msra.mxu0 %v327
    %476 = vmatprep.subr.bf16.mxu0 %v326
    %477 = vmatpush1.bf16.msra.mxu0 %v325
    %478 = vmatprep.subr.bf16.mxu0 %v356
    %479 = vmatpush2.bf16.msra.mxu0 %v355
    %480 = vmatprep.subr.bf16.mxu0 %v354
    %481 = vmatpush2.bf16.msra.mxu0 %v353
    %482 = vmatprep.subr.bf16.mxu0 %v352
    %483 = vmatpush2.bf16.msra.mxu0 %v351
    %484 = vmatprep.subr.bf16.mxu0 %v350
    %485 = vmatpush2.bf16.msra.mxu0 %v349
    %486 = vmatprep.subr.bf16.mxu0 %v348
    %487 = vmatpush2.bf16.msra.mxu0 %v347
    %488 = vmatprep.subr.bf16.mxu0 %v346
    %489 = vmatpush2.bf16.msra.mxu0 %v345
    %490 = vmatprep.subr.bf16.mxu0 %v344
    %491 = vmatpush2.bf16.msra.mxu0 %v343
    %492 = vmatprep.subr.bf16.mxu0 %v342
    %493 = vmatpush2.bf16.msra.mxu0 %v341
    %494 = vmatprep.mubr.bf16.mxu0 %v96
    %495 = vmatmul.mubr.bf16.gmra.mxu0 %v95
    %v496 = vpop.f32.mrf.mxu0
    %v497 = vadd.f32 %v456, %v496
    %v498 = vpop.f32.mrf.mxu0
    %v499 = vadd.f32 %v458, %v498
    %v500 = vpop.f32.mrf.mxu0
    %v501 = vpop.f32.mrf.mxu0
    %502 = vdwg.mxu0
    %s503 = scalar_lea.vmem %s0, 16
    %v504 = vld [vmem:[%s503] sm:$0xff]
    %v505 = vld [vmem:[%s503 + $0x8] sm:$0xff]
    %v508 = vunpack.c.l.b16 %v504
    %v509 = vunpack.c.h.b16 %v504
    %v510 = vunpack.c.l.b16 %v505
    %v511 = vunpack.c.h.b16 %v505
    %v512 = vpack.c.b16 %v508, %v508
    %v513 = vpack.c.b16 %v509, %v509
    %v514 = vpack.c.b16 %v510, %v510
    %v515 = vpack.c.b16 %v511, %v511
    %520 = vmatprep.subr.bf16.mxu0 %v308
    %521 = vmatpush1.bf16.msra.mxu0 %v307
    %522 = vmatprep.subr.bf16.mxu0 %v306
    %523 = vmatpush1.bf16.msra.mxu0 %v305
    %524 = vmatprep.subr.bf16.mxu0 %v304
    %525 = vmatpush1.bf16.msra.mxu0 %v303
    %526 = vmatprep.subr.bf16.mxu0 %v302
    %527 = vmatpush1.bf16.msra.mxu0 %v301
    %528 = vmatprep.subr.bf16.mxu0 %v300
    %529 = vmatpush1.bf16.msra.mxu0 %v299
    %530 = vmatprep.subr.bf16.mxu0 %v298
    %531 = vmatpush1.bf16.msra.mxu0 %v297
    %532 = vmatprep.subr.bf16.mxu0 %v296
    %533 = vmatpush1.bf16.msra.mxu0 %v295
    %534 = vmatprep.subr.bf16.mxu0 %v294
    %535 = vmatpush1.bf16.msra.mxu0 %v293
    %536 = vmatprep.subr.bf16.mxu0 %v324
    %537 = vmatpush2.bf16.msra.mxu0 %v323
    %538 = vmatprep.subr.bf16.mxu0 %v322
    %539 = vmatpush2.bf16.msra.mxu0 %v321
    %540 = vmatprep.subr.bf16.mxu0 %v320
    %541 = vmatpush2.bf16.msra.mxu0 %v319
    %542 = vmatprep.subr.bf16.mxu0 %v318
    %543 = vmatpush2.bf16.msra.mxu0 %v317
    %544 = vmatprep.subr.bf16.mxu0 %v316
    %545 = vmatpush2.bf16.msra.mxu0 %v315
    %546 = vmatprep.subr.bf16.mxu0 %v314
    %547 = vmatpush2.bf16.msra.mxu0 %v313
    %548 = vmatprep.subr.bf16.mxu0 %v312
    %549 = vmatpush2.bf16.msra.mxu0 %v311
    %550 = vmatprep.subr.bf16.mxu0 %v310
    %551 = vmatpush2.bf16.msra.mxu0 %v309
    %552 = vmatprep.mubr.bf16.mxu0 %v513
    %553 = vmatmul.mubr.bf16.gmra.mxu0 %v512
    %v554 = vpop.f32.mrf.mxu0
    %v555 = vadd.f32 0.0, %v554
    %v556 = vpop.f32.mrf.mxu0
    %v557 = vadd.f32 0.0, %v556
    %v558 = vpop.f32.mrf.mxu0
    %v559 = vpop.f32.mrf.mxu0
    %560 = vdwg.mxu0
    %561 = vmatprep.subr.bf16.mxu0 %v340
    %562 = vmatpush1.bf16.msra.mxu0 %v339
    %563 = vmatprep.subr.bf16.mxu0 %v338
    %564 = vmatpush1.bf16.msra.mxu0 %v337
    %565 = vmatprep.subr.bf16.mxu0 %v336
    %566 = vmatpush1.bf16.msra.mxu0 %v335
    %567 = vmatprep.subr.bf16.mxu0 %v334
    %568 = vmatpush1.bf16.msra.mxu0 %v333
    %569 = vmatprep.subr.bf16.mxu0 %v332
    %570 = vmatpush1.bf16.msra.mxu0 %v331
    %571 = vmatprep.subr.bf16.mxu0 %v330
    %572 = vmatpush1.bf16.msra.mxu0 %v329
    %573 = vmatprep.subr.bf16.mxu0 %v328
    %574 = vmatpush1.bf16.msra.mxu0 %v327
    %575 = vmatprep.subr.bf16.mxu0 %v326
    %576 = vmatpush1.bf16.msra.mxu0 %v325
    %577 = vmatprep.subr.bf16.mxu0 %v356
    %578 = vmatpush2.bf16.msra.mxu0 %v355
    %579 = vmatprep.subr.bf16.mxu0 %v354
    %580 = vmatpush2.bf16.msra.mxu0 %v353
    %581 = vmatprep.subr.bf16.mxu0 %v352
    %582 = vmatpush2.bf16.msra.mxu0 %v351
    %583 = vmatprep.subr.bf16.mxu0 %v350
    %584 = vmatpush2.bf16.msra.mxu0 %v349
    %585 = vmatprep.subr.bf16.mxu0 %v348
    %586 = vmatpush2.bf16.msra.mxu0 %v347
    %587 = vmatprep.subr.bf16.mxu0 %v346
    %588 = vmatpush2.bf16.msra.mxu0 %v345
    %589 = vmatprep.subr.bf16.mxu0 %v344
    %590 = vmatpush2.bf16.msra.mxu0 %v343
    %591 = vmatprep.subr.bf16.mxu0 %v342
    %592 = vmatpush2.bf16.msra.mxu0 %v341
    %593 = vmatprep.mubr.bf16.mxu0 %v515
    %594 = vmatmul.mubr.bf16.gmra.mxu0 %v514
    %v595 = vpop.f32.mrf.mxu0
    %v596 = vadd.f32 %v555, %v595
    %v597 = vpop.f32.mrf.mxu0
    %v598 = vadd.f32 %v557, %v597
    %v599 = vpop.f32.mrf.mxu0
    %v600 = vpop.f32.mrf.mxu0
    %601 = vdwg.mxu0
    %v602 = vmax.f32 %v497, %v596
    %v603 = vmax.f32 %v499, %v598
    %s604 = scalar_lea.vmem %s0, 32
    %v605 = vld [vmem:[%s604] sm:$0xff]
    %v606 = vld [vmem:[%s604 + $0x8] sm:$0xff]
    %v609 = vunpack.c.l.b16 %v605
    %v610 = vunpack.c.h.b16 %v605
    %v611 = vunpack.c.l.b16 %v606
    %v612 = vunpack.c.h.b16 %v606
    %v613 = vpack.c.b16 %v609, %v609
    %v614 = vpack.c.b16 %v610, %v610
    %v615 = vpack.c.b16 %v611, %v611
    %v616 = vpack.c.b16 %v612, %v612
    %621 = vmatprep.subr.bf16.mxu0 %v308
    %622 = vmatpush1.bf16.msra.mxu0 %v307
    %623 = vmatprep.subr.bf16.mxu0 %v306
    %624 = vmatpush1.bf16.msra.mxu0 %v305
    %625 = vmatprep.subr.bf16.mxu0 %v304
    %626 = vmatpush1.bf16.msra.mxu0 %v303
    %627 = vmatprep.subr.bf16.mxu0 %v302
    %628 = vmatpush1.bf16.msra.mxu0 %v301
    %629 = vmatprep.subr.bf16.mxu0 %v300
    %630 = vmatpush1.bf16.msra.mxu0 %v299
    %631 = vmatprep.subr.bf16.mxu0 %v298
    %632 = vmatpush1.bf16.msra.mxu0 %v297
    %633 = vmatprep.subr.bf16.mxu0 %v296
    %634 = vmatpush1.bf16.msra.mxu0 %v295
    %635 = vmatprep.subr.bf16.mxu0 %v294
    %636 = vmatpush1.bf16.msra.mxu0 %v293
    %637 = vmatprep.subr.bf16.mxu0 %v324
    %638 = vmatpush2.bf16.msra.mxu0 %v323
    %639 = vmatprep.subr.bf16.mxu0 %v322
    %640 = vmatpush2.bf16.msra.mxu0 %v321
    %641 = vmatprep.subr.bf16.mxu0 %v320
    %642 = vmatpush2.bf16.msra.mxu0 %v319
    %643 = vmatprep.subr.bf16.mxu0 %v318
    %644 = vmatpush2.bf16.msra.mxu0 %v317
    %645 = vmatprep.subr.bf16.mxu0 %v316
    %646 = vmatpush2.bf16.msra.mxu0 %v315
    %647 = vmatprep.subr.bf16.mxu0 %v314
    %648 = vmatpush2.bf16.msra.mxu0 %v313
    %649 = vmatprep.subr.bf16.mxu0 %v312
    %650 = vmatpush2.bf16.msra.mxu0 %v311
    %651 = vmatprep.subr.bf16.mxu0 %v310
    %652 = vmatpush2.bf16.msra.mxu0 %v309
    %653 = vmatprep.mubr.bf16.mxu0 %v614
    %654 = vmatmul.mubr.bf16.gmra.mxu0 %v613
    %v655 = vpop.f32.mrf.mxu0
    %v656 = vadd.f32 0.0, %v655
    %v657 = vpop.f32.mrf.mxu0
    %v658 = vadd.f32 0.0, %v657
    %v659 = vpop.f32.mrf.mxu0
    %v660 = vpop.f32.mrf.mxu0
    %661 = vdwg.mxu0
    %662 = vmatprep.subr.bf16.mxu0 %v340
    %663 = vmatpush1.bf16.msra.mxu0 %v339
    %664 = vmatprep.subr.bf16.mxu0 %v338
    %665 = vmatpush1.bf16.msra.mxu0 %v337
    %666 = vmatprep.subr.bf16.mxu0 %v336
    %667 = vmatpush1.bf16.msra.mxu0 %v335
    %668 = vmatprep.subr.bf16.mxu0 %v334
    %669 = vmatpush1.bf16.msra.mxu0 %v333
    %670 = vmatprep.subr.bf16.mxu0 %v332
    %671 = vmatpush1.bf16.msra.mxu0 %v331
    %672 = vmatprep.subr.bf16.mxu0 %v330
    %673 = vmatpush1.bf16.msra.mxu0 %v329
    %674 = vmatprep.subr.bf16.mxu0 %v328
    %675 = vmatpush1.bf16.msra.mxu0 %v327
    %676 = vmatprep.subr.bf16.mxu0 %v326
    %677 = vmatpush1.bf16.msra.mxu0 %v325
    %678 = vmatprep.subr.bf16.mxu0 %v356
    %679 = vmatpush2.bf16.msra.mxu0 %v355
    %680 = vmatprep.subr.bf16.mxu0 %v354
    %681 = vmatpush2.bf16.msra.mxu0 %v353
    %682 = vmatprep.subr.bf16.mxu0 %v352
    %683 = vmatpush2.bf16.msra.mxu0 %v351
    %684 = vmatprep.subr.bf16.mxu0 %v350
    %685 = vmatpush2.bf16.msra.mxu0 %v349
    %686 = vmatprep.subr.bf16.mxu0 %v348
    %687 = vmatpush2.bf16.msra.mxu0 %v347
    %688 = vmatprep.subr.bf16.mxu0 %v346
    %689 = vmatpush2.bf16.msra.mxu0 %v345
    %690 = vmatprep.subr.bf16.mxu0 %v344
    %691 = vmatpush2.bf16.msra.mxu0 %v343
    %692 = vmatprep.subr.bf16.mxu0 %v342
    %693 = vmatpush2.bf16.msra.mxu0 %v341
    %694 = vmatprep.mubr.bf16.mxu0 %v616
    %695 = vmatmul.mubr.bf16.gmra.mxu0 %v615
    %v696 = vpop.f32.mrf.mxu0
    %v697 = vadd.f32 %v656, %v696
    %v698 = vpop.f32.mrf.mxu0
    %v699 = vadd.f32 %v658, %v698
    %v700 = vpop.f32.mrf.mxu0
    %v701 = vpop.f32.mrf.mxu0
    %702 = vdwg.mxu0
    %v703 = vmax.f32 %v602, %v697
    %v704 = vmax.f32 %v603, %v699
    %s705 = scalar_lea.vmem %s0, 48
    %v706 = vld [vmem:[%s705] sm:$0xff]
    %v707 = vld [vmem:[%s705 + $0x8] sm:$0xff]
    %v710 = vunpack.c.l.b16 %v706
    %v711 = vunpack.c.h.b16 %v706
    %v712 = vunpack.c.l.b16 %v707
    %v713 = vunpack.c.h.b16 %v707
    %v714 = vpack.c.b16 %v710, %v710
    %v715 = vpack.c.b16 %v711, %v711
    %v716 = vpack.c.b16 %v712, %v712
    %v717 = vpack.c.b16 %v713, %v713
    %722 = vmatprep.subr.bf16.mxu0 %v308
    %723 = vmatpush1.bf16.msra.mxu0 %v307
    %724 = vmatprep.subr.bf16.mxu0 %v306
    %725 = vmatpush1.bf16.msra.mxu0 %v305
    %726 = vmatprep.subr.bf16.mxu0 %v304
    %727 = vmatpush1.bf16.msra.mxu0 %v303
    %728 = vmatprep.subr.bf16.mxu0 %v302
    %729 = vmatpush1.bf16.msra.mxu0 %v301
    %730 = vmatprep.subr.bf16.mxu0 %v300
    %731 = vmatpush1.bf16.msra.mxu0 %v299
    %732 = vmatprep.subr.bf16.mxu0 %v298
    %733 = vmatpush1.bf16.msra.mxu0 %v297
    %734 = vmatprep.subr.bf16.mxu0 %v296
    %735 = vmatpush1.bf16.msra.mxu0 %v295
    %736 = vmatprep.subr.bf16.mxu0 %v294
    %737 = vmatpush1.bf16.msra.mxu0 %v293
    %738 = vmatprep.subr.bf16.mxu0 %v324
    %739 = vmatpush2.bf16.msra.mxu0 %v323
    %740 = vmatprep.subr.bf16.mxu0 %v322
    %741 = vmatpush2.bf16.msra.mxu0 %v321
    %742 = vmatprep.subr.bf16.mxu0 %v320
    %743 = vmatpush2.bf16.msra.mxu0 %v319
    %744 = vmatprep.subr.bf16.mxu0 %v318
    %745 = vmatpush2.bf16.msra.mxu0 %v317
    %746 = vmatprep.subr.bf16.mxu0 %v316
    %747 = vmatpush2.bf16.msra.mxu0 %v315
    %748 = vmatprep.subr.bf16.mxu0 %v314
    %749 = vmatpush2.bf16.msra.mxu0 %v313
    %750 = vmatprep.subr.bf16.mxu0 %v312
    %751 = vmatpush2.bf16.msra.mxu0 %v311
    %752 = vmatprep.subr.bf16.mxu0 %v310
    %753 = vmatpush2.bf16.msra.mxu0 %v309
    %754 = vmatprep.mubr.bf16.mxu0 %v715
    %755 = vmatmul.mubr.bf16.gmra.mxu0 %v714
    %v756 = vpop.f32.mrf.mxu0
    %v757 = vadd.f32 0.0, %v756
    %v758 = vpop.f32.mrf.mxu0
    %v759 = vadd.f32 0.0, %v758
    %v760 = vpop.f32.mrf.mxu0
    %v761 = vpop.f32.mrf.mxu0
    %762 = vdwg.mxu0
    %763 = vmatprep.subr.bf16.mxu0 %v340
    %764 = vmatpush1.bf16.msra.mxu0 %v339
    %765 = vmatprep.subr.bf16.mxu0 %v338
    %766 = vmatpush1.bf16.msra.mxu0 %v337
    %767 = vmatprep.subr.bf16.mxu0 %v336
    %768 = vmatpush1.bf16.msra.mxu0 %v335
    %769 = vmatprep.subr.bf16.mxu0 %v334
    %770 = vmatpush1.bf16.msra.mxu0 %v333
    %771 = vmatprep.subr.bf16.mxu0 %v332
    %772 = vmatpush1.bf16.msra.mxu0 %v331
    %773 = vmatprep.subr.bf16.mxu0 %v330
    %774 = vmatpush1.bf16.msra.mxu0 %v329
    %775 = vmatprep.subr.bf16.mxu0 %v328
    %776 = vmatpush1.bf16.msra.mxu0 %v327
    %777 = vmatprep.subr.bf16.mxu0 %v326
    %778 = vmatpush1.bf16.msra.mxu0 %v325
    %779 = vmatprep.subr.bf16.mxu0 %v356
    %780 = vmatpush2.bf16.msra.mxu0 %v355
    %781 = vmatprep.subr.bf16.mxu0 %v354
    %782 = vmatpush2.bf16.msra.mxu0 %v353
    %783 = vmatprep.subr.bf16.mxu0 %v352
    %784 = vmatpush2.bf16.msra.mxu0 %v351
    %785 = vmatprep.subr.bf16.mxu0 %v350
    %786 = vmatpush2.bf16.msra.mxu0 %v349
    %787 = vmatprep.subr.bf16.mxu0 %v348
    %788 = vmatpush2.bf16.msra.mxu0 %v347
    %789 = vmatprep.subr.bf16.mxu0 %v346
    %790 = vmatpush2.bf16.msra.mxu0 %v345
    %791 = vmatprep.subr.bf16.mxu0 %v344
    %792 = vmatpush2.bf16.msra.mxu0 %v343
    %793 = vmatprep.subr.bf16.mxu0 %v342
    %794 = vmatpush2.bf16.msra.mxu0 %v341
    %795 = vmatprep.mubr.bf16.mxu0 %v717
    %796 = vmatmul.mubr.bf16.gmra.mxu0 %v716
    %v797 = vpop.f32.mrf.mxu0
    %v798 = vadd.f32 %v757, %v797
    %v799 = vpop.f32.mrf.mxu0
    %v800 = vadd.f32 %v759, %v799
    %v801 = vpop.f32.mrf.mxu0
    %v802 = vpop.f32.mrf.mxu0
    %803 = vdwg.mxu0
    %v804 = vmax.f32 %v703, %v798
    %v805 = vmax.f32 %v704, %v800
    %v806 = vld [vmem:[%s2] sm:$0x3]
    %v808 = vlaneseq
    %v809 = vshrl.u32 %v808, 7
    %v810 = vsub.s32 0, %v809
    %v811 = vrot.slane %v806, %v810
    %v812 = vlaneseq
    %v813 = vshrl.u32 %v812, 7
    %v814 = vsub.s32 1, %v813
    %v815 = vrot.slane %v806, %v814
    %v818 = vadd.f32 %v804, %v811
    %v819 = vadd.f32 %v805, %v815
    %v820 = vmax.f32 %v818, 0.0
    %v821 = vmax.f32 %v819, 0.0
    %vm822 = vcmask 1043456
    %v823 = vsel %vm822, %v820, 0.0
    %v824 = vrot.slane %v823, 4
    %v825 = vadd.f32 %v823, %v824
    %v826 = vrot.slane %v825, 2
    %v827 = vadd.f32 %v825, %v826
    %v828 = vrot.slane %v827, 1
    %v829 = vadd.f32 %v827, %v828
    %v830 = vsel %vm822, %v821, 0.0
    %v831 = vrot.slane %v830, 4
    %v832 = vadd.f32 %v830, %v831
    %v833 = vrot.slane %v832, 2
    %v834 = vadd.f32 %v832, %v833
    %v835 = vrot.slane %v834, 1
    %v836 = vadd.f32 %v834, %v835
    %v837 = vrcp.pop 4.0
    %v838 = vmul.f32 %v829, %v837
    %v839 = vmul.f32 %v836, %v837
    %v842 = vrot.slane %v820, 4
    %v843 = vrot.slane %v821, 4
    %v846 = vsel %vm822, %v842, 0.0
    %v847 = vrot.slane %v846, 4
    %v848 = vadd.f32 %v846, %v847
    %v849 = vrot.slane %v848, 2
    %v850 = vadd.f32 %v848, %v849
    %v851 = vrot.slane %v850, 1
    %v852 = vadd.f32 %v850, %v851
    %v853 = vsel %vm822, %v843, 0.0
    %v854 = vrot.slane %v853, 4
    %v855 = vadd.f32 %v853, %v854
    %v856 = vrot.slane %v855, 2
    %v857 = vadd.f32 %v855, %v856
    %v858 = vrot.slane %v857, 1
    %v859 = vadd.f32 %v857, %v858
    %v860 = vmul.f32 %v852, %v837
    %v861 = vmul.f32 %v859, %v837
    %vm862 = vcmask 1040384
    %v863 = vsel %vm862, %v838, %v860
    %v864 = vsel %vm862, %v839, %v861
    %v865 = vld [vmem:[%s3] sm:$0xff]
    %v866 = vld [vmem:[%s3 + $0x8] sm:$0xff]
    %v867 = vld [vmem:[%s3 + $0x10] sm:$0xff]
    %v868 = vld [vmem:[%s3 + $0x18] sm:$0xff]
    %v869 = vld [vmem:[%s3 + $0x20] sm:$0xff]
    %v870 = vld [vmem:[%s3 + $0x28] sm:$0xff]
    %v871 = vld [vmem:[%s3 + $0x30] sm:$0xff]
    %v872 = vld [vmem:[%s3 + $0x38] sm:$0xff]
    %v873 = vld [vmem:[%s3 + $0x40] sm:$0xff]
    %v874 = vld [vmem:[%s3 + $0x48] sm:$0xff]
    %v875 = vld [vmem:[%s3 + $0x50] sm:$0xff]
    %v876 = vld [vmem:[%s3 + $0x58] sm:$0xff]
    %v877 = vld [vmem:[%s3 + $0x60] sm:$0xff]
    %v878 = vld [vmem:[%s3 + $0x68] sm:$0xff]
    %v879 = vld [vmem:[%s3 + $0x70] sm:$0xff]
    %v880 = vld [vmem:[%s3 + $0x78] sm:$0xff]
    %v881 = vld [vmem:[%s3 + $0x80] sm:$0xff]
    %v882 = vld [vmem:[%s3 + $0x88] sm:$0xff]
    %v883 = vld [vmem:[%s3 + $0x90] sm:$0xff]
    %v884 = vld [vmem:[%s3 + $0x98] sm:$0xff]
    %v885 = vld [vmem:[%s3 + $0xa0] sm:$0xff]
    %v886 = vld [vmem:[%s3 + $0xa8] sm:$0xff]
    %v887 = vld [vmem:[%s3 + $0xb0] sm:$0xff]
    %v888 = vld [vmem:[%s3 + $0xb8] sm:$0xff]
    %v889 = vld [vmem:[%s3 + $0xc0] sm:$0xff]
    %v890 = vld [vmem:[%s3 + $0xc8] sm:$0xff]
    %v891 = vld [vmem:[%s3 + $0xd0] sm:$0xff]
    %v892 = vld [vmem:[%s3 + $0xd8] sm:$0xff]
    %v893 = vld [vmem:[%s3 + $0xe0] sm:$0xff]
    %v894 = vld [vmem:[%s3 + $0xe8] sm:$0xff]
    %v895 = vld [vmem:[%s3 + $0xf0] sm:$0xff]
    %v896 = vld [vmem:[%s3 + $0xf8] sm:$0xff]
    %v897 = vld [vmem:[%s4] sm:$0x1]
    %v899 = vlaneseq
    %v900 = vshrl.u32 %v899, 7
    %v901 = vsub.s32 0, %v900
    %v902 = vrot.slane %v897, %v901
    %904 = vmatprep.subr.mxu0 0.0
    %905 = vmatpush1.msra.mxu0 %v880
    %906 = vmatprep.subr.mxu0 0.0
    %907 = vmatpush1.msra.mxu0 %v879
    %908 = vmatprep.subr.mxu0 0.0
    %909 = vmatpush1.msra.mxu0 %v878
    %910 = vmatprep.subr.mxu0 0.0
    %911 = vmatpush1.msra.mxu0 %v877
    %912 = vmatprep.subr.mxu0 0.0
    %913 = vmatpush1.msra.mxu0 %v876
    %914 = vmatprep.subr.mxu0 0.0
    %915 = vmatpush1.msra.mxu0 %v875
    %916 = vmatprep.subr.mxu0 0.0
    %917 = vmatpush1.msra.mxu0 %v874
    %918 = vmatprep.subr.mxu0 0.0
    %919 = vmatpush1.msra.mxu0 %v873
    %920 = vmatprep.subr.mxu0 0.0
    %921 = vmatpush1.msra.mxu0 %v872
    %922 = vmatprep.subr.mxu0 0.0
    %923 = vmatpush1.msra.mxu0 %v871
    %924 = vmatprep.subr.mxu0 0.0
    %925 = vmatpush1.msra.mxu0 %v870
    %926 = vmatprep.subr.mxu0 0.0
    %927 = vmatpush1.msra.mxu0 %v869
    %928 = vmatprep.subr.mxu0 0.0
    %929 = vmatpush1.msra.mxu0 %v868
    %930 = vmatprep.subr.mxu0 0.0
    %931 = vmatpush1.msra.mxu0 %v867
    %932 = vmatprep.subr.mxu0 0.0
    %933 = vmatpush1.msra.mxu0 %v866
    %934 = vmatprep.subr.mxu0 0.0
    %935 = vmatpush1.msra.mxu0 %v865
    %936 = vmatprep.subr.mxu0 0.0
    %937 = vmatpush2.msra.mxu0 %v896
    %938 = vmatprep.subr.mxu0 0.0
    %939 = vmatpush2.msra.mxu0 %v895
    %940 = vmatprep.subr.mxu0 0.0
    %941 = vmatpush2.msra.mxu0 %v894
    %942 = vmatprep.subr.mxu0 0.0
    %943 = vmatpush2.msra.mxu0 %v893
    %944 = vmatprep.subr.mxu0 0.0
    %945 = vmatpush2.msra.mxu0 %v892
    %946 = vmatprep.subr.mxu0 0.0
    %947 = vmatpush2.msra.mxu0 %v891
    %948 = vmatprep.subr.mxu0 0.0
    %949 = vmatpush2.msra.mxu0 %v890
    %950 = vmatprep.subr.mxu0 0.0
    %951 = vmatpush2.msra.mxu0 %v889
    %952 = vmatprep.subr.mxu0 0.0
    %953 = vmatpush2.msra.mxu0 %v888
    %954 = vmatprep.subr.mxu0 0.0
    %955 = vmatpush2.msra.mxu0 %v887
    %956 = vmatprep.subr.mxu0 0.0
    %957 = vmatpush2.msra.mxu0 %v886
    %958 = vmatprep.subr.mxu0 0.0
    %959 = vmatpush2.msra.mxu0 %v885
    %960 = vmatprep.subr.mxu0 0.0
    %961 = vmatpush2.msra.mxu0 %v884
    %962 = vmatprep.subr.mxu0 0.0
    %963 = vmatpush2.msra.mxu0 %v883
    %964 = vmatprep.subr.mxu0 0.0
    %965 = vmatpush2.msra.mxu0 %v882
    %966 = vmatprep.subr.mxu0 0.0
    %967 = vmatpush2.msra.mxu0 %v881
    %968 = vmatprep.mubr.f32.mxu0 %v864
    %969 = vmatmul.mubr.f32.gmra.mxu0 %v863
    %v970 = vpop.f32.mrf.mxu0
    %v971 = vadd.f32 %v902, %v970
    %v972 = vpop.f32.mrf.mxu0
    %973 = vdwg.mxu0
    %974 = vst [vmem:[#allocation2] sm:$0x3] %v971
    // Predicated region
    $region22: #{net_forward.5} parent=1 // pred_check
      _
    $region23: #{net_forward.5} parent=1 // pred_check_branch
      %976 = sbr.rel (0) target = $region25
    $region24: #{net_forward.5} parent=1 // pred_region
      %s978 = ssub.s32 32, 32
      %979 = vsyncadd [#allocation3], %s978
      %s981 = sshll.u32 [#allocation2], 4
      %s982 = int_to_ptr.vmem [resolvable:$true] %s981
      %984 = dma.vmem_to_hbm [thread:$0]  %s982, 32, %s5, [#allocation3]
    $region25: #{net_forward.5} parent=1 // pred_fallthru
      _
    // Predicated region
    $region26: #{net_forward.5} parent=1 // pred_check
      _
    $region27: #{net_forward.5} parent=1 // pred_check_branch
      %986 = sbr.rel (0) target = $region29
    $region28: #{net_forward.5} parent=1 // pred_region
      %987 = dma.done [#allocation3], 32
    $region29: #{net_forward.5} parent=1 // pred_fallthru
      _
    %988 = vsyncpa [#allocation3], 1

</llo_original>
